<compile_context>
chip_gen: v6e
topology: v6e:2x2x1
jax: 0.10.0
libtpu: 0.0.40
codegen_flags: <defaults>
</compile_context>

<pallas_src>
import functools
import math

import jax
import jax.numpy as jnp
from jax.experimental import pallas as pl
from jax.experimental.pallas import tpu as pltpu


# ----------------------------------------------------------------------------
# helpers
# ----------------------------------------------------------------------------
def _round_up(x, m):
    return ((x + m - 1) // m) * m


def _pick_tile(dim, pref, align):
    """Largest-of(pref, padded-dim) tile: full (aligned) dim when small,
    otherwise the preferred tile size (pref is a multiple of align)."""
    if dim <= pref:
        return _round_up(dim, align)
    return pref


# ----------------------------------------------------------------------------
# Tiled linear:  o = act(x @ w + b)
# ----------------------------------------------------------------------------
def _linear_kernel(x_ref, w_ref, b_ref, o_ref, acc_ref, *, activation):
    @pl.when(pl.program_id(2) == 0)
    def _():
        acc_ref[...] = jnp.zeros_like(acc_ref)

    acc_ref[...] += jnp.dot(
        x_ref[...].astype(jnp.bfloat16),
        w_ref[...].astype(jnp.bfloat16),
        preferred_element_type=jnp.float32)

    @pl.when(pl.program_id(2) == pl.num_programs(2) - 1)
    def _():
        y = acc_ref[...] + b_ref[...]
        if activation == "relu":
            y = jnp.maximum(y, 0.0)
        elif activation == "gelu":
            # TODO(synk): exact erf-GELU (HF BERT) vs tanh approximation.
            y = jax.nn.gelu(y, approximate=True)
        elif activation == "tanh":
            y = jnp.tanh(y)
        o_ref[...] = y.astype(o_ref.dtype)


def pallas_linear(x, w, b, activation=None, out_dtype=jnp.bfloat16,
                  tm_pref=256, tn_pref=256, tk_pref=512):
    """x:(M,K) @ w:(K,N) + b:(N,) -> (M,N). Tiled, bf16 MXU, f32 accumulate."""
    M, K = x.shape
    K2, N = w.shape
    assert K == K2
    tm = _pick_tile(M, tm_pref, 8)
    tk = _pick_tile(K, tk_pref, 128)
    tn = _pick_tile(N, tn_pref, 128)
    Mp, Kp, Np = _round_up(M, tm), _round_up(K, tk), _round_up(N, tn)

    xp = x if (Mp == M and Kp == K) else jnp.pad(x, ((0, Mp - M), (0, Kp - K)))
    wp = w if (Kp == K and Np == N) else jnp.pad(w, ((0, Kp - K), (0, Np - N)))
    bp = (b if Np == N else jnp.pad(b, (0, Np - N)))
    bp = bp.reshape(1, Np).astype(jnp.float32)

    kernel = functools.partial(_linear_kernel, activation=activation)
    out = pl.pallas_call(
        kernel,
        out_shape=jax.ShapeDtypeStruct((Mp, Np), out_dtype),
        grid=(Mp // tm, Np // tn, Kp // tk),
        in_specs=[
            pl.BlockSpec((tm, tk), lambda i, j, k: (i, k)),
            pl.BlockSpec((tk, tn), lambda i, j, k: (k, j)),
            pl.BlockSpec((1, tn), lambda i, j, k: (0, j)),
        ],
        out_specs=pl.BlockSpec((tm, tn), lambda i, j, k: (i, j)),
        scratch_shapes=[pltpu.VMEM((tm, tn), jnp.float32)],
        compiler_params=pltpu.CompilerParams(
            dimension_semantics=("parallel", "parallel", "arbitrary")),
    )(xp, wp, bp)
    if Mp != M or Np != N:
        out = out[:M, :N]
    return out


# ----------------------------------------------------------------------------
# Row-tiled layernorm (optionally with fused residual add)
# ----------------------------------------------------------------------------
def _layernorm_kernel(x_ref, g_ref, b_ref, o_ref, *, eps):
    x = x_ref[...].astype(jnp.float32)
    mu = jnp.mean(x, axis=-1, keepdims=True)
    var = jnp.mean(jnp.square(x - mu), axis=-1, keepdims=True)
    y = (x - mu) * jax.lax.rsqrt(var + eps)
    o_ref[...] = (y * g_ref[...] + b_ref[...]).astype(o_ref.dtype)


def _add_layernorm_kernel(x_ref, r_ref, g_ref, b_ref, o_ref, *, eps):
    x = x_ref[...].astype(jnp.float32) + r_ref[...].astype(jnp.float32)
    mu = jnp.mean(x, axis=-1, keepdims=True)
    var = jnp.mean(jnp.square(x - mu), axis=-1, keepdims=True)
    y = (x - mu) * jax.lax.rsqrt(var + eps)
    o_ref[...] = (y * g_ref[...] + b_ref[...]).astype(o_ref.dtype)


def pallas_layernorm(x, gamma, beta, residual=None, eps=1e-12,
                     out_dtype=jnp.bfloat16):
    M, H = x.shape
    tm = _pick_tile(M, 512, 8)
    Mp = _round_up(M, tm)
    pad = Mp - M
    xp = x if pad == 0 else jnp.pad(x, ((0, pad), (0, 0)))
    g = gamma.reshape(1, H).astype(jnp.float32)
    b = beta.reshape(1, H).astype(jnp.float32)

    row_spec = pl.BlockSpec((tm, H), lambda i: (i, 0))
    par_spec = pl.BlockSpec((1, H), lambda i: (0, 0))

    if residual is None:
        kernel = functools.partial(_layernorm_kernel, eps=eps)
        in_specs = [row_spec, par_spec, par_spec]
        args = (xp, g, b)
    else:
        rp = residual if pad == 0 else jnp.pad(residual, ((0, pad), (0, 0)))
        kernel = functools.partial(_add_layernorm_kernel, eps=eps)
        in_specs = [row_spec, row_spec, par_spec, par_spec]
        args = (xp, rp, g, b)

    out = pl.pallas_call(
        kernel,
        out_shape=jax.ShapeDtypeStruct((Mp, H), out_dtype),
        grid=(Mp // tm,),
        in_specs=in_specs,
        out_specs=row_spec,
        compiler_params=pltpu.CompilerParams(dimension_semantics=("parallel",)),
    )(*args)
    return out[:M] if pad else out


# ----------------------------------------------------------------------------
# Attention: all heads of one batch element per grid step
# ----------------------------------------------------------------------------
def _attn_kernel(q_ref, k_ref, v_ref, mb_ref, o_ref, *, scale):
    """q,k,v,o: (H, S, Dh) bf16; mb: (1, S) additive key bias."""
    q = q_ref[...]
    k = k_ref[...]
    v = v_ref[...]
    # batched dot_general contracting on the last dims (no explicit k.T)
    s = jnp.einsum("hqd,hkd->hqk", q, k,
                   preferred_element_type=jnp.float32) * scale
    s = s + mb_ref[...]                      # broadcast over heads & queries
    m = jnp.max(s, axis=-1, keepdims=True)
    p = jnp.exp(s - m)
    denom = jnp.sum(p, axis=-1, keepdims=True)
    # NOTE: pl.reciprocal(denom, approx=True) would put this on the EUP on TPU;
    # a plain divide is kept for interpreter portability (negligible cost here).
    p = p / denom
    o = jnp.einsum("hqk,hkd->hqd", p.astype(v.dtype), v,
                   preferred_element_type=jnp.float32)
    o_ref[...] = o.astype(o_ref.dtype)


def pallas_attention(q, k, v, mask_bias, scale, out_dtype=jnp.bfloat16):
    """q,k,v: (B, H, S, Dh); mask_bias: (B, 1, S) additive (0 / -10000)."""
    B, H, S, D = q.shape
    kernel = functools.partial(_attn_kernel, scale=scale)
    qkv_spec = pl.BlockSpec((None, H, S, D), lambda b: (b, 0, 0, 0))
    return pl.pallas_call(
        kernel,
        out_shape=jax.ShapeDtypeStruct((B, H, S, D), out_dtype),
        grid=(B,),
        in_specs=[
            qkv_spec, qkv_spec, qkv_spec,
            pl.BlockSpec((None, 1, S), lambda b: (b, 0, 0)),
        ],
        out_specs=qkv_spec,
        compiler_params=pltpu.CompilerParams(dimension_semantics=("parallel",)),
    )(q, k, v, mask_bias)


# ----------------------------------------------------------------------------
# Parameter initialization (deterministic, synthetic "pretrained" BERT)
# ----------------------------------------------------------------------------
def _dense_w(key, fan_in, fan_out, scale=0.02):
    return scale * jax.random.normal(key, (fan_in, fan_out), jnp.float32)


def init_params(key, *, vocab, max_pos, hidden, n_layers, intermediate,
                num_classes):
    ks = iter(jax.random.split(key, 64))
    wdt = jnp.bfloat16                       # weights stored bf16 for the MXU
    p = {
        "word_emb": 0.02 * jax.random.normal(next(ks), (vocab, hidden), jnp.float32),
        "pos_emb": 0.02 * jax.random.normal(next(ks), (max_pos, hidden), jnp.float32),
        "type_emb": 0.02 * jax.random.normal(next(ks), (2, hidden), jnp.float32),
        "emb_ln_g": jnp.ones((hidden,), jnp.float32),
        "emb_ln_b": jnp.zeros((hidden,), jnp.float32),
        "layers": [],
    }
    for _ in range(n_layers):
        wq = _dense_w(next(ks), hidden, hidden)
        wk = _dense_w(next(ks), hidden, hidden)
        wv = _dense_w(next(ks), hidden, hidden)
        layer = {
            # fused QKV projection weight
            "w_qkv": jnp.concatenate([wq, wk, wv], axis=1).astype(wdt),
            "b_qkv": jnp.zeros((3 * hidden,), jnp.float32),
            "w_o": _dense_w(next(ks), hidden, hidden).astype(wdt),
            "b_o": jnp.zeros((hidden,), jnp.float32),
            "ln1_g": jnp.ones((hidden,), jnp.float32),
            "ln1_b": jnp.zeros((hidden,), jnp.float32),
            "w_ffn1": _dense_w(next(ks), hidden, intermediate).astype(wdt),
            "b_ffn1": jnp.zeros((intermediate,), jnp.float32),
            "w_ffn2": _dense_w(next(ks), intermediate, hidden).astype(wdt),
            "b_ffn2": jnp.zeros((hidden,), jnp.float32),
            "ln2_g": jnp.ones((hidden,), jnp.float32),
            "ln2_b": jnp.zeros((hidden,), jnp.float32),
        }
        p["layers"].append(layer)

    p["pooler_w"] = _dense_w(next(ks), hidden, hidden).astype(wdt)
    p["pooler_b"] = jnp.zeros((hidden,), jnp.float32)

    # nn.MultiheadAttention head (in_proj fused q|k|v + out_proj)
    wq = _dense_w(next(ks), hidden, hidden)
    wk = _dense_w(next(ks), hidden, hidden)
    wv = _dense_w(next(ks), hidden, hidden)
    p["mha_w_qkv"] = jnp.concatenate([wq, wk, wv], axis=1).astype(wdt)
    p["mha_b_qkv"] = jnp.zeros((3 * hidden,), jnp.float32)
    p["mha_w_o"] = _dense_w(next(ks), hidden, hidden).astype(wdt)
    p["mha_b_o"] = jnp.zeros((hidden,), jnp.float32)

    # dense head: Linear(E, 2E) -> ReLU -> Dropout(id) -> Linear(2E, classes)
    p["head1_w"] = _dense_w(next(ks), hidden, 2 * hidden).astype(wdt)
    p["head1_b"] = jnp.zeros((2 * hidden,), jnp.float32)
    p["head2_w"] = _dense_w(next(ks), 2 * hidden, num_classes).astype(wdt)
    p["head2_b"] = jnp.zeros((num_classes,), jnp.float32)
    return p


# ----------------------------------------------------------------------------
# Forward pass
# ----------------------------------------------------------------------------
def _split_heads(x2d, B, S, H, Dh):
    # (B*S, hidden) -> (B, H, S, Dh)
    return x2d.reshape(B, S, H, Dh).transpose(0, 2, 1, 3)


def _merge_heads(x4d, B, S, H, Dh):
    # (B, H, S, Dh) -> (B*S, hidden)
    return x4d.transpose(0, 2, 1, 3).reshape(B * S, H * Dh)


def bert_naive_forward(params, input_ids, attention_mask, *,
                       hidden, n_heads, head_heads):
    Dh = hidden // n_heads

    ids = jnp.squeeze(input_ids, axis=1)                               # (B, S)
    mask = jnp.squeeze(attention_mask, axis=1).astype(jnp.float32)     # (B, S)
    B, S = ids.shape

    # ---- BERT embeddings (gather is glue; layernorm in Pallas) ----
    emb = (jnp.take(params["word_emb"], ids, axis=0)
           + params["pos_emb"][:S][None, :, :]
           + params["type_emb"][0][None, None, :])                     # (B,S,H)
    x = pallas_layernorm(emb.reshape(B * S, hidden),
                         params["emb_ln_g"], params["emb_ln_b"])       # bf16

    mask_bias = ((1.0 - mask) * -10000.0).reshape(B, 1, S)
    scale = 1.0 / math.sqrt(Dh)

    # ---- BERT encoder layers ----
    for layer in params["layers"]:
        qkv = pallas_linear(x, layer["w_qkv"], layer["b_qkv"])         # fused QKV
        q = qkv[:, :hidden]
        k = qkv[:, hidden:2 * hidden]
        v = qkv[:, 2 * hidden:]
        ctx = pallas_attention(_split_heads(q, B, S, n_heads, Dh),
                               _split_heads(k, B, S, n_heads, Dh),
                               _split_heads(v, B, S, n_heads, Dh),
                               mask_bias, scale)
        ctx = _merge_heads(ctx, B, S, n_heads, Dh)
        attn_out = pallas_linear(ctx, layer["w_o"], layer["b_o"])
        x = pallas_layernorm(attn_out, layer["ln1_g"], layer["ln1_b"],
                             residual=x)                               # fused add+LN

        h = pallas_linear(x, layer["w_ffn1"], layer["b_ffn1"], activation="gelu")
        ffn_out = pallas_linear(h, layer["w_ffn2"], layer["b_ffn2"])
        x = pallas_layernorm(ffn_out, layer["ln2_g"], layer["ln2_b"],
                             residual=x)

    # ---- BERT pooler: tanh(W @ first-token) ----
    first_tok = x.reshape(B, S, hidden)[:, 0, :]                       # (B, H)
    pooled = pallas_linear(first_tok, params["pooler_w"], params["pooler_b"],
                           activation="tanh")

    # ---- nn.MultiheadAttention on pooled_output (unbatched: L=B, E=hidden) ----
    Hh = head_heads
    Dh2 = hidden // Hh
    qkv = pallas_linear(pooled, params["mha_w_qkv"], params["mha_b_qkv"])
    q = qkv[:, :hidden]
    k = qkv[:, hidden:2 * hidden]
    v = qkv[:, 2 * hidden:]
    q4 = q.reshape(B, Hh, Dh2).transpose(1, 0, 2)[None]                # (1,Hh,B,Dh2)
    k4 = k.reshape(B, Hh, Dh2).transpose(1, 0, 2)[None]
    v4 = v.reshape(B, Hh, Dh2).transpose(1, 0, 2)[None]
    no_mask = jnp.zeros((1, 1, B), jnp.float32)
    attn = pallas_attention(q4, k4, v4, no_mask, 1.0 / math.sqrt(Dh2))
    attn = attn[0].transpose(1, 0, 2).reshape(B, hidden)
    attn_output = pallas_linear(attn, params["mha_w_o"], params["mha_b_o"])

    # ---- dense head: Linear -> ReLU -> (Dropout=id) -> Linear ----
    h = pallas_linear(attn_output, params["head1_w"], params["head1_b"],
                      activation="relu")
    out = pallas_linear(h, params["head2_w"], params["head2_b"],
                        out_dtype=jnp.float32)
    return out                                                         # (B, classes)


# ----------------------------------------------------------------------------
if __name__ == "__main__":
    B, S = 2, 8
    VOCAB, MAX_POS = 100, 16
    HIDDEN, N_LAYERS, N_HEADS, INTER = 32, 2, 4, 64
    NUM_CLASSES, HEAD_HEADS = 3, 4

    key = jax.random.PRNGKey(0)
    k_param, k_ids = jax.random.split(key)
    params = init_params(k_param, vocab=VOCAB, max_pos=MAX_POS, hidden=HIDDEN,
                         n_layers=N_LAYERS, intermediate=INTER,
                         num_classes=NUM_CLASSES)

    input_ids = jax.random.randint(k_ids, (B, 1, S), 0, VOCAB, dtype=jnp.int32)
    # mask: first 6 tokens valid, last 2 padded
    attention_mask = jnp.concatenate(
        [jnp.ones((B, 1, 6), jnp.int32), jnp.zeros((B, 1, 2), jnp.int32)],
        axis=-1)

    # static config bound as Python constants (NOT traced pytree leaves)
    fwd = jax.jit(functools.partial(bert_naive_forward, hidden=HIDDEN,
                                    n_heads=N_HEADS, head_heads=HEAD_HEADS))
    out = fwd(params, input_ids, attention_mask)
    out = jax.block_until_ready(out)
    assert out.shape == (B, NUM_CLASSES)
    print("KERNEL_OK")
</pallas_src>

<mosaic_0001>
module attributes {stable_mosaic.version = 11 : i64} {
  func.func @_layernorm_kernel(%arg0: i32, %arg1: memref<16x32xf32, #tpu.memory_space<vmem>>, %arg2: memref<1x32xf32, #tpu.memory_space<vmem>>, %arg3: memref<1x32xf32, #tpu.memory_space<vmem>>, %arg4: memref<16x32xbf16, #tpu.memory_space<vmem>>) attributes {dimension_semantics = [#tpu.dimension_semantics<parallel>], iteration_bounds = array<i64: 1>, scalar_prefetch = 0 : i64, scratch_operands = 0 : i64, tpu.core_type = #tpu.core_type<tc>, window_params = [{transform_indices = @transform_0, window_bounds = array<i64: 16, 32>}, {pipeline_mode = #tpu.pipeline_mode<synchronous>, transform_indices = @transform_1, window_bounds = array<i64: 1, 32>}, {pipeline_mode = #tpu.pipeline_mode<synchronous>, transform_indices = @transform_2, window_bounds = array<i64: 1, 32>}, {transform_indices = @transform_3, window_bounds = array<i64: 16, 32>}]} {
    %c0 = arith.constant 0 : index
    %c0_0 = arith.constant 0 : index
    %0 = vector.load %arg1[%c0, %c0_0] : memref<16x32xf32, #tpu.memory_space<vmem>>, vector<16x32xf32>
    %cst = arith.constant dense<0.000000e+00> : vector<16xf32>
    %1 = vector.multi_reduction <add>, %0, %cst [1] : vector<16x32xf32> to vector<16xf32>
    %2 = vector.shape_cast %1 : vector<16xf32> to vector<16x1xf32>
    %cst_1 = arith.constant 3.200000e+01 : f32
    %3 = vector.broadcast %cst_1 : f32 to vector<16x1xf32>
    %4 = arith.divf %2, %3 : vector<16x1xf32>
    %5 = vector.broadcast %4 : vector<16x1xf32> to vector<16x32xf32>
    %6 = arith.subf %0, %5 : vector<16x32xf32>
    %7 = arith.mulf %6, %6 : vector<16x32xf32>
    %cst_2 = arith.constant dense<0.000000e+00> : vector<16xf32>
    %8 = vector.multi_reduction <add>, %7, %cst_2 [1] : vector<16x32xf32> to vector<16xf32>
    %9 = vector.shape_cast %8 : vector<16xf32> to vector<16x1xf32>
    %cst_3 = arith.constant 3.200000e+01 : f32
    %10 = vector.broadcast %cst_3 : f32 to vector<16x1xf32>
    %11 = arith.divf %9, %10 : vector<16x1xf32>
    %12 = vector.broadcast %4 : vector<16x1xf32> to vector<16x32xf32>
    %13 = arith.subf %0, %12 : vector<16x32xf32>
    %cst_4 = arith.constant 9.99999996E-13 : f32
    %14 = vector.broadcast %cst_4 : f32 to vector<16x1xf32>
    %15 = arith.addf %11, %14 : vector<16x1xf32>
    %16 = math.rsqrt %15 : vector<16x1xf32>
    %17 = vector.broadcast %16 : vector<16x1xf32> to vector<16x32xf32>
    %18 = arith.mulf %13, %17 : vector<16x32xf32>
    %c0_5 = arith.constant 0 : index
    %c0_6 = arith.constant 0 : index
    %19 = vector.load %arg2[%c0_5, %c0_6] : memref<1x32xf32, #tpu.memory_space<vmem>>, vector<1x32xf32>
    %20 = vector.broadcast %19 : vector<1x32xf32> to vector<16x32xf32>
    %21 = arith.mulf %18, %20 : vector<16x32xf32>
    %c0_7 = arith.constant 0 : index
    %c0_8 = arith.constant 0 : index
    %22 = vector.load %arg3[%c0_7, %c0_8] : memref<1x32xf32, #tpu.memory_space<vmem>>, vector<1x32xf32>
    %23 = vector.broadcast %22 : vector<1x32xf32> to vector<16x32xf32>
    %24 = arith.addf %21, %23 : vector<16x32xf32>
    %25 = arith.truncf %24 : vector<16x32xf32> to vector<16x32xbf16>
    %c0_9 = arith.constant 0 : index
    %c0_10 = arith.constant 0 : index
    %26 = vector.load %arg4[%c0_9, %c0_10] : memref<16x32xbf16, #tpu.memory_space<vmem>>, vector<16x32xbf16>
    tpu.vector_store %arg4[%c0_9, %c0_10], %25 {strides = array<i32>} : memref<16x32xbf16, #tpu.memory_space<vmem>>, vector<16x32xbf16>,
    return
  }
  func.func @transform_0(%arg0: i32) -> (i32, i32) {
    %c0_i32 = arith.constant 0 : i32
    %c0_i32_0 = arith.constant 0 : i32
    return %arg0, %c0_i32 : i32, i32
  }
  func.func @transform_1(%arg0: i32) -> (i32, i32) {
    %c0_i32 = arith.constant 0 : i32
    %c0_i32_0 = arith.constant 0 : i32
    %c0_i32_1 = arith.constant 0 : i32
    return %c0_i32, %c0_i32_0 : i32, i32
  }
  func.func @transform_2(%arg0: i32) -> (i32, i32) {
    %c0_i32 = arith.constant 0 : i32
    %c0_i32_0 = arith.constant 0 : i32
    %c0_i32_1 = arith.constant 0 : i32
    return %c0_i32, %c0_i32_0 : i32, i32
  }
  func.func @transform_3(%arg0: i32) -> (i32, i32) {
    %c0_i32 = arith.constant 0 : i32
    %c0_i32_0 = arith.constant 0 : i32
    return %arg0, %c0_i32 : i32, i32
  }
}

module attributes {stable_mosaic.version = 11 : i64} {
  func.func @_linear_kernel(%arg0: i32, %arg1: i32, %arg2: i32, %arg3: memref<16x128xbf16, #tpu.memory_space<vmem>>, %arg4: memref<128x128xbf16, #tpu.memory_space<vmem>>, %arg5: memref<1x128xf32, #tpu.memory_space<vmem>>, %arg6: memref<16x128xbf16, #tpu.memory_space<vmem>>, %arg7: memref<16x128xf32, #tpu.memory_space<vmem>>) attributes {dimension_semantics = [#tpu.dimension_semantics<parallel>, #tpu.dimension_semantics<parallel>, #tpu.dimension_semantics<arbitrary>], iteration_bounds = array<i64: 1, 1, 1>, scalar_prefetch = 0 : i64, scratch_operands = 1 : i64, tpu.core_type = #tpu.core_type<tc>, window_params = [{transform_indices = @transform_0, window_bounds = array<i64: 16, 128>}, {transform_indices = @transform_1, window_bounds = array<i64: 128, 128>}, {transform_indices = @transform_2, window_bounds = array<i64: 1, 128>}, {transform_indices = @transform_3, window_bounds = array<i64: 16, 128>}]} {
    %c0_i32 = arith.constant 0 : i32
    %0 = arith.cmpi eq, %arg2, %c0_i32 : i32
    %1 = arith.extui %0 : i1 to i32
    %c0_i32_0 = arith.constant 0 : i32
    %2 = arith.cmpi ne, %1, %c0_i32_0 : i32
    scf.if %2 {
      %cst_10 = arith.constant 0.000000e+00 : f32
      %12 = vector.broadcast %cst_10 : f32 to vector<16x128xf32>
      %c0_11 = arith.constant 0 : index
      %c0_12 = arith.constant 0 : index
      %13 = vector.load %arg7[%c0_11, %c0_12] : memref<16x128xf32, #tpu.memory_space<vmem>>, vector<16x128xf32>
      tpu.vector_store %arg7[%c0_11, %c0_12], %12 {strides = array<i32>} : memref<16x128xf32, #tpu.memory_space<vmem>>, vector<16x128xf32>,
    } else {
    }
    %c0 = arith.constant 0 : index
    %c0_1 = arith.constant 0 : index
    %3 = vector.load %arg7[%c0, %c0_1] : memref<16x128xf32, #tpu.memory_space<vmem>>, vector<16x128xf32>
    %c0_2 = arith.constant 0 : index
    %c0_3 = arith.constant 0 : index
    %4 = vector.load %arg3[%c0_2, %c0_3] : memref<16x128xbf16, #tpu.memory_space<vmem>>, vector<16x128xbf16>
    %c0_4 = arith.constant 0 : index
    %c0_5 = arith.constant 0 : index
    %5 = vector.load %arg4[%c0_4, %c0_5] : memref<128x128xbf16, #tpu.memory_space<vmem>>, vector<128x128xbf16>
    %cst = arith.constant dense<0.000000e+00> : vector<16x128xf32>
    %6 = tpu.matmul %4, %5, %cst {dimension_numbers = #tpu.dot_dimension_numbers<[1], [0], [0], [1], [0, 0, 1, 1], [], []>} : vector<16x128xbf16>, vector<128x128xbf16>, vector<16x128xf32> -> vector<16x128xf32>
    %7 = arith.addf %3, %6 : vector<16x128xf32>
    %c0_6 = arith.constant 0 : index
    %c0_7 = arith.constant 0 : index
    %8 = vector.load %arg7[%c0_6, %c0_7] : memref<16x128xf32, #tpu.memory_space<vmem>>, vector<16x128xf32>
    tpu.vector_store %arg7[%c0_6, %c0_7], %7 {strides = array<i32>} : memref<16x128xf32, #tpu.memory_space<vmem>>, vector<16x128xf32>,
    %c0_i32_8 = arith.constant 0 : i32
    %9 = arith.cmpi eq, %arg2, %c0_i32_8 : i32
    %10 = arith.extui %9 : i1 to i32
    %c0_i32_9 = arith.constant 0 : i32
    %11 = arith.cmpi ne, %10, %c0_i32_9 : i32
    scf.if %11 {
      %c0_10 = arith.constant 0 : index
      %c0_11 = arith.constant 0 : index
      %12 = vector.load %arg7[%c0_10, %c0_11] : memref<16x128xf32, #tpu.memory_space<vmem>>, vector<16x128xf32>
      %c0_12 = arith.constant 0 : index
      %c0_13 = arith.constant 0 : index
      %13 = vector.load %arg5[%c0_12, %c0_13] : memref<1x128xf32, #tpu.memory_space<vmem>>, vector<1x128xf32>
      %14 = vector.broadcast %13 : vector<1x128xf32> to vector<16x128xf32>
      %15 = arith.addf %12, %14 : vector<16x128xf32>
      %16 = arith.truncf %15 : vector<16x128xf32> to vector<16x128xbf16>
      %c0_14 = arith.constant 0 : index
      %c0_15 = arith.constant 0 : index
      %17 = vector.load %arg6[%c0_14, %c0_15] : memref<16x128xbf16, #tpu.memory_space<vmem>>, vector<16x128xbf16>
      tpu.vector_store %arg6[%c0_14, %c0_15], %16 {strides = array<i32>} : memref<16x128xbf16, #tpu.memory_space<vmem>>, vector<16x128xbf16>,
    } else {
    }
    return
  }
  func.func @transform_0(%arg0: i32, %arg1: i32, %arg2: i32) -> (i32, i32) {
    %c0_i32 = arith.constant 0 : i32
    return %arg0, %arg2 : i32, i32
  }
  func.func @transform_1(%arg0: i32, %arg1: i32, %arg2: i32) -> (i32, i32) {
    %c0_i32 = arith.constant 0 : i32
    return %arg2, %arg1 : i32, i32
  }
  func.func @transform_2(%arg0: i32, %arg1: i32, %arg2: i32) -> (i32, i32) {
    %c0_i32 = arith.constant 0 : i32
    %c0_i32_0 = arith.constant 0 : i32
    return %c0_i32, %arg1 : i32, i32
  }
  func.func @transform_3(%arg0: i32, %arg1: i32, %arg2: i32) -> (i32, i32) {
    %c0_i32 = arith.constant 0 : i32
    return %arg0, %arg1 : i32, i32
  }
}

module attributes {stable_mosaic.version = 11 : i64} {
  func.func @_attn_kernel(%arg0: i32, %arg1: memref<1x4x8x8xbf16, #tpu.memory_space<vmem>>, %arg2: memref<1x4x8x8xbf16, #tpu.memory_space<vmem>>, %arg3: memref<1x4x8x8xbf16, #tpu.memory_space<vmem>>, %arg4: memref<1x1x8xf32, #tpu.memory_space<vmem>>, %arg5: memref<1x4x8x8xbf16, #tpu.memory_space<vmem>>) attributes {dimension_semantics = [#tpu.dimension_semantics<parallel>], iteration_bounds = array<i64: 2>, scalar_prefetch = 0 : i64, scratch_operands = 0 : i64, tpu.core_type = #tpu.core_type<tc>, window_params = [{transform_indices = @transform_0, window_bounds = array<i64: 1, 4, 8, 8>}, {transform_indices = @transform_1, window_bounds = array<i64: 1, 4, 8, 8>}, {transform_indices = @transform_2, window_bounds = array<i64: 1, 4, 8, 8>}, {transform_indices = @transform_3, window_bounds = array<i64: 1, 1, 8>}, {transform_indices = @transform_4, window_bounds = array<i64: 1, 4, 8, 8>}]} {
    %c0 = arith.constant 0 : index
    %c0_0 = arith.constant 0 : index
    %c0_1 = arith.constant 0 : index
    %c0_2 = arith.constant 0 : index
    %0 = vector.load %arg1[%c0, %c0_0, %c0_1, %c0_2] : memref<1x4x8x8xbf16, #tpu.memory_space<vmem>>, vector<1x4x8x8xbf16>
    %1 = vector.shape_cast %0 : vector<1x4x8x8xbf16> to vector<4x8x8xbf16>
    %c0_3 = arith.constant 0 : index
    %c0_4 = arith.constant 0 : index
    %c0_5 = arith.constant 0 : index
    %c0_6 = arith.constant 0 : index
    %2 = vector.load %arg2[%c0_3, %c0_4, %c0_5, %c0_6] : memref<1x4x8x8xbf16, #tpu.memory_space<vmem>>, vector<1x4x8x8xbf16>
    %3 = vector.shape_cast %2 : vector<1x4x8x8xbf16> to vector<4x8x8xbf16>
    %c0_7 = arith.constant 0 : index
    %c0_8 = arith.constant 0 : index
    %c0_9 = arith.constant 0 : index
    %c0_10 = arith.constant 0 : index
    %4 = vector.load %arg3[%c0_7, %c0_8, %c0_9, %c0_10] : memref<1x4x8x8xbf16, #tpu.memory_space<vmem>>, vector<1x4x8x8xbf16>
    %5 = vector.shape_cast %4 : vector<1x4x8x8xbf16> to vector<4x8x8xbf16>
    "tpu.trace_start"() <{level = 10 : i32, message = "hqd,hkd->hqk"}> : () -> ()
    %cst = arith.constant dense<0.000000e+00> : vector<4x8x8xf32>
    %6 = tpu.matmul %1, %3, %cst {dimension_numbers = #tpu.dot_dimension_numbers<[2], [2], [1], [1], [0, 0, 0, 1, 1, 1], [0], [0]>} : vector<4x8x8xbf16>, vector<4x8x8xbf16>, vector<4x8x8xf32> -> vector<4x8x8xf32>
    "tpu.trace_stop"() : () -> ()
    %cst_11 = arith.constant 0.353553385 : f32
    %7 = vector.broadcast %cst_11 : f32 to vector<4x8x8xf32>
    %8 = arith.mulf %6, %7 : vector<4x8x8xf32>
    %c0_12 = arith.constant 0 : index
    %c0_13 = arith.constant 0 : index
    %c0_14 = arith.constant 0 : index
    %9 = vector.load %arg4[%c0_12, %c0_13, %c0_14] : memref<1x1x8xf32, #tpu.memory_space<vmem>>, vector<1x1x8xf32>
    %10 = vector.shape_cast %9 : vector<1x1x8xf32> to vector<1x8xf32>
    %11 = vector.shape_cast %10 : vector<1x8xf32> to vector<1x1x8xf32>
    %12 = vector.broadcast %11 : vector<1x1x8xf32> to vector<4x8x8xf32>
    %13 = arith.addf %8, %12 : vector<4x8x8xf32>
    %cst_15 = arith.constant dense<0xFF800000> : vector<4x8xf32>
    %14 = vector.multi_reduction <maximumf>, %13, %cst_15 [2] : vector<4x8x8xf32> to vector<4x8xf32>
    %15 = vector.shape_cast %14 : vector<4x8xf32> to vector<4x8x1xf32>
    %16 = vector.broadcast %15 : vector<4x8x1xf32> to vector<4x8x8xf32>
    %17 = arith.subf %13, %16 : vector<4x8x8xf32>
    %18 = math.exp %17 : vector<4x8x8xf32>
    %cst_16 = arith.constant dense<0.000000e+00> : vector<4x8xf32>
    %19 = vector.multi_reduction <add>, %18, %cst_16 [2] : vector<4x8x8xf32> to vector<4x8xf32>
    %20 = vector.shape_cast %19 : vector<4x8xf32> to vector<4x8x1xf32>
    %21 = vector.broadcast %20 : vector<4x8x1xf32> to vector<4x8x8xf32>
    %22 = arith.divf %18, %21 : vector<4x8x8xf32>
    %23 = arith.truncf %22 : vector<4x8x8xf32> to vector<4x8x8xbf16>
    "tpu.trace_start"() <{level = 10 : i32, message = "hqk,hkd->hqd"}> : () -> ()
    %cst_17 = arith.constant dense<0.000000e+00> : vector<4x8x8xf32>
    %24 = tpu.matmul %23, %5, %cst_17 {dimension_numbers = #tpu.dot_dimension_numbers<[2], [1], [1], [2], [0, 0, 0, 1, 1, 2], [0], [0]>} : vector<4x8x8xbf16>, vector<4x8x8xbf16>, vector<4x8x8xf32> -> vector<4x8x8xf32>
    "tpu.trace_stop"() : () -> ()
    %25 = arith.truncf %24 : vector<4x8x8xf32> to vector<4x8x8xbf16>
    %c0_18 = arith.constant 0 : index
    %c0_19 = arith.constant 0 : index
    %c0_20 = arith.constant 0 : index
    %c0_21 = arith.constant 0 : index
    %26 = vector.load %arg5[%c0_18, %c0_19, %c0_20, %c0_21] : memref<1x4x8x8xbf16, #tpu.memory_space<vmem>>, vector<1x4x8x8xbf16>
    %27 = vector.shape_cast %26 : vector<1x4x8x8xbf16> to vector<4x8x8xbf16>
    %28 = vector.shape_cast %25 : vector<4x8x8xbf16> to vector<1x4x8x8xbf16>
    tpu.vector_store %arg5[%c0_18, %c0_19, %c0_20, %c0_21], %28 {strides = array<i32>} : memref<1x4x8x8xbf16, #tpu.memory_space<vmem>>, vector<1x4x8x8xbf16>,
    return
  }
  func.func @transform_0(%arg0: i32) -> (i32, i32, i32, i32) {
    %c0_i32 = arith.constant 0 : i32
    %c0_i32_0 = arith.constant 0 : i32
    %c0_i32_1 = arith.constant 0 : i32
    %c0_i32_2 = arith.constant 0 : i32
    return %arg0, %c0_i32, %c0_i32_0, %c0_i32_1 : i32, i32, i32, i32
  }
  func.func @transform_1(%arg0: i32) -> (i32, i32, i32, i32) {
    %c0_i32 = arith.constant 0 : i32
    %c0_i32_0 = arith.constant 0 : i32
    %c0_i32_1 = arith.constant 0 : i32
    %c0_i32_2 = arith.constant 0 : i32
    return %arg0, %c0_i32, %c0_i32_0, %c0_i32_1 : i32, i32, i32, i32
  }
  func.func @transform_2(%arg0: i32) -> (i32, i32, i32, i32) {
    %c0_i32 = arith.constant 0 : i32
    %c0_i32_0 = arith.constant 0 : i32
    %c0_i32_1 = arith.constant 0 : i32
    %c0_i32_2 = arith.constant 0 : i32
    return %arg0, %c0_i32, %c0_i32_0, %c0_i32_1 : i32, i32, i32, i32
  }
  func.func @transform_3(%arg0: i32) -> (i32, i32, i32) {
    %c0_i32 = arith.constant 0 : i32
    %c0_i32_0 = arith.constant 0 : i32
    %c0_i32_1 = arith.constant 0 : i32
    return %arg0, %c0_i32, %c0_i32_0 : i32, i32, i32
  }
  func.func @transform_4(%arg0: i32) -> (i32, i32, i32, i32) {
    %c0_i32 = arith.constant 0 : i32
    %c0_i32_0 = arith.constant 0 : i32
    %c0_i32_1 = arith.constant 0 : i32
    %c0_i32_2 = arith.constant 0 : i32
    return %arg0, %c0_i32, %c0_i32_0, %c0_i32_1 : i32, i32, i32, i32
  }
}

module attributes {stable_mosaic.version = 11 : i64} {
  func.func @_add_layernorm_kernel(%arg0: i32, %arg1: memref<16x32xbf16, #tpu.memory_space<vmem>>, %arg2: memref<16x32xbf16, #tpu.memory_space<vmem>>, %arg3: memref<1x32xf32, #tpu.memory_space<vmem>>, %arg4: memref<1x32xf32, #tpu.memory_space<vmem>>, %arg5: memref<16x32xbf16, #tpu.memory_space<vmem>>) attributes {dimension_semantics = [#tpu.dimension_semantics<parallel>], iteration_bounds = array<i64: 1>, scalar_prefetch = 0 : i64, scratch_operands = 0 : i64, tpu.core_type = #tpu.core_type<tc>, window_params = [{transform_indices = @transform_0, window_bounds = array<i64: 16, 32>}, {transform_indices = @transform_1, window_bounds = array<i64: 16, 32>}, {pipeline_mode = #tpu.pipeline_mode<synchronous>, transform_indices = @transform_2, window_bounds = array<i64: 1, 32>}, {pipeline_mode = #tpu.pipeline_mode<synchronous>, transform_indices = @transform_3, window_bounds = array<i64: 1, 32>}, {transform_indices = @transform_4, window_bounds = array<i64: 16, 32>}]} {
    %c0 = arith.constant 0 : index
    %c0_0 = arith.constant 0 : index
    %0 = vector.load %arg1[%c0, %c0_0] : memref<16x32xbf16, #tpu.memory_space<vmem>>, vector<16x32xbf16>
    %1 = arith.extf %0 : vector<16x32xbf16> to vector<16x32xf32>
    %c0_1 = arith.constant 0 : index
    %c0_2 = arith.constant 0 : index
    %2 = vector.load %arg2[%c0_1, %c0_2] : memref<16x32xbf16, #tpu.memory_space<vmem>>, vector<16x32xbf16>
    %3 = arith.extf %2 : vector<16x32xbf16> to vector<16x32xf32>
    %4 = arith.addf %1, %3 : vector<16x32xf32>
    %cst = arith.constant dense<0.000000e+00> : vector<16xf32>
    %5 = vector.multi_reduction <add>, %4, %cst [1] : vector<16x32xf32> to vector<16xf32>
    %6 = vector.shape_cast %5 : vector<16xf32> to vector<16x1xf32>
    %cst_3 = arith.constant 3.200000e+01 : f32
    %7 = vector.broadcast %cst_3 : f32 to vector<16x1xf32>
    %8 = arith.divf %6, %7 : vector<16x1xf32>
    %9 = vector.broadcast %8 : vector<16x1xf32> to vector<16x32xf32>
    %10 = arith.subf %4, %9 : vector<16x32xf32>
    %11 = arith.mulf %10, %10 : vector<16x32xf32>
    %cst_4 = arith.constant dense<0.000000e+00> : vector<16xf32>
    %12 = vector.multi_reduction <add>, %11, %cst_4 [1] : vector<16x32xf32> to vector<16xf32>
    %13 = vector.shape_cast %12 : vector<16xf32> to vector<16x1xf32>
    %cst_5 = arith.constant 3.200000e+01 : f32
    %14 = vector.broadcast %cst_5 : f32 to vector<16x1xf32>
    %15 = arith.divf %13, %14 : vector<16x1xf32>
    %16 = vector.broadcast %8 : vector<16x1xf32> to vector<16x32xf32>
    %17 = arith.subf %4, %16 : vector<16x32xf32>
    %cst_6 = arith.constant 9.99999996E-13 : f32
    %18 = vector.broadcast %cst_6 : f32 to vector<16x1xf32>
    %19 = arith.addf %15, %18 : vector<16x1xf32>
    %20 = math.rsqrt %19 : vector<16x1xf32>
    %21 = vector.broadcast %20 : vector<16x1xf32> to vector<16x32xf32>
    %22 = arith.mulf %17, %21 : vector<16x32xf32>
    %c0_7 = arith.constant 0 : index
    %c0_8 = arith.constant 0 : index
    %23 = vector.load %arg3[%c0_7, %c0_8] : memref<1x32xf32, #tpu.memory_space<vmem>>, vector<1x32xf32>
    %24 = vector.broadcast %23 : vector<1x32xf32> to vector<16x32xf32>
    %25 = arith.mulf %22, %24 : vector<16x32xf32>
    %c0_9 = arith.constant 0 : index
    %c0_10 = arith.constant 0 : index
    %26 = vector.load %arg4[%c0_9, %c0_10] : memref<1x32xf32, #tpu.memory_space<vmem>>, vector<1x32xf32>
    %27 = vector.broadcast %26 : vector<1x32xf32> to vector<16x32xf32>
    %28 = arith.addf %25, %27 : vector<16x32xf32>
    %29 = arith.truncf %28 : vector<16x32xf32> to vector<16x32xbf16>
    %c0_11 = arith.constant 0 : index
    %c0_12 = arith.constant 0 : index
    %30 = vector.load %arg5[%c0_11, %c0_12] : memref<16x32xbf16, #tpu.memory_space<vmem>>, vector<16x32xbf16>
    tpu.vector_store %arg5[%c0_11, %c0_12], %29 {strides = array<i32>} : memref<16x32xbf16, #tpu.memory_space<vmem>>, vector<16x32xbf16>,
    return
  }
  func.func @transform_0(%arg0: i32) -> (i32, i32) {
    %c0_i32 = arith.constant 0 : i32
    %c0_i32_0 = arith.constant 0 : i32
    return %arg0, %c0_i32 : i32, i32
  }
  func.func @transform_1(%arg0: i32) -> (i32, i32) {
    %c0_i32 = arith.constant 0 : i32
    %c0_i32_0 = arith.constant 0 : i32
    return %arg0, %c0_i32 : i32, i32
  }
  func.func @transform_2(%arg0: i32) -> (i32, i32) {
    %c0_i32 = arith.constant 0 : i32
    %c0_i32_0 = arith.constant 0 : i32
    %c0_i32_1 = arith.constant 0 : i32
    return %c0_i32, %c0_i32_0 : i32, i32
  }
  func.func @transform_3(%arg0: i32) -> (i32, i32) {
    %c0_i32 = arith.constant 0 : i32
    %c0_i32_0 = arith.constant 0 : i32
    %c0_i32_1 = arith.constant 0 : i32
    return %c0_i32, %c0_i32_0 : i32, i32
  }
  func.func @transform_4(%arg0: i32) -> (i32, i32) {
    %c0_i32 = arith.constant 0 : i32
    %c0_i32_0 = arith.constant 0 : i32
    return %arg0, %c0_i32 : i32, i32
  }
}

module attributes {stable_mosaic.version = 11 : i64} {
  func.func @_linear_kernel(%arg0: i32, %arg1: i32, %arg2: i32, %arg3: memref<16x128xbf16, #tpu.memory_space<vmem>>, %arg4: memref<128x128xbf16, #tpu.memory_space<vmem>>, %arg5: memref<1x128xf32, #tpu.memory_space<vmem>>, %arg6: memref<16x128xbf16, #tpu.memory_space<vmem>>, %arg7: memref<16x128xf32, #tpu.memory_space<vmem>>) attributes {dimension_semantics = [#tpu.dimension_semantics<parallel>, #tpu.dimension_semantics<parallel>, #tpu.dimension_semantics<arbitrary>], iteration_bounds = array<i64: 1, 1, 1>, scalar_prefetch = 0 : i64, scratch_operands = 1 : i64, tpu.core_type = #tpu.core_type<tc>, window_params = [{transform_indices = @transform_0, window_bounds = array<i64: 16, 128>}, {transform_indices = @transform_1, window_bounds = array<i64: 128, 128>}, {transform_indices = @transform_2, window_bounds = array<i64: 1, 128>}, {transform_indices = @transform_3, window_bounds = array<i64: 16, 128>}]} {
    %c0_i32 = arith.constant 0 : i32
    %0 = arith.cmpi eq, %arg2, %c0_i32 : i32
    %1 = arith.extui %0 : i1 to i32
    %c0_i32_0 = arith.constant 0 : i32
    %2 = arith.cmpi ne, %1, %c0_i32_0 : i32
    scf.if %2 {
      %cst_10 = arith.constant 0.000000e+00 : f32
      %12 = vector.broadcast %cst_10 : f32 to vector<16x128xf32>
      %c0_11 = arith.constant 0 : index
      %c0_12 = arith.constant 0 : index
      %13 = vector.load %arg7[%c0_11, %c0_12] : memref<16x128xf32, #tpu.memory_space<vmem>>, vector<16x128xf32>
      tpu.vector_store %arg7[%c0_11, %c0_12], %12 {strides = array<i32>} : memref<16x128xf32, #tpu.memory_space<vmem>>, vector<16x128xf32>,
    } else {
    }
    %c0 = arith.constant 0 : index
    %c0_1 = arith.constant 0 : index
    %3 = vector.load %arg7[%c0, %c0_1] : memref<16x128xf32, #tpu.memory_space<vmem>>, vector<16x128xf32>
    %c0_2 = arith.constant 0 : index
    %c0_3 = arith.constant 0 : index
    %4 = vector.load %arg3[%c0_2, %c0_3] : memref<16x128xbf16, #tpu.memory_space<vmem>>, vector<16x128xbf16>
    %c0_4 = arith.constant 0 : index
    %c0_5 = arith.constant 0 : index
    %5 = vector.load %arg4[%c0_4, %c0_5] : memref<128x128xbf16, #tpu.memory_space<vmem>>, vector<128x128xbf16>
    %cst = arith.constant dense<0.000000e+00> : vector<16x128xf32>
    %6 = tpu.matmul %4, %5, %cst {dimension_numbers = #tpu.dot_dimension_numbers<[1], [0], [0], [1], [0, 0, 1, 1], [], []>} : vector<16x128xbf16>, vector<128x128xbf16>, vector<16x128xf32> -> vector<16x128xf32>
    %7 = arith.addf %3, %6 : vector<16x128xf32>
    %c0_6 = arith.constant 0 : index
    %c0_7 = arith.constant 0 : index
    %8 = vector.load %arg7[%c0_6, %c0_7] : memref<16x128xf32, #tpu.memory_space<vmem>>, vector<16x128xf32>
    tpu.vector_store %arg7[%c0_6, %c0_7], %7 {strides = array<i32>} : memref<16x128xf32, #tpu.memory_space<vmem>>, vector<16x128xf32>,
    %c0_i32_8 = arith.constant 0 : i32
    %9 = arith.cmpi eq, %arg2, %c0_i32_8 : i32
    %10 = arith.extui %9 : i1 to i32
    %c0_i32_9 = arith.constant 0 : i32
    %11 = arith.cmpi ne, %10, %c0_i32_9 : i32
    scf.if %11 {
      %c0_10 = arith.constant 0 : index
      %c0_11 = arith.constant 0 : index
      %12 = vector.load %arg7[%c0_10, %c0_11] : memref<16x128xf32, #tpu.memory_space<vmem>>, vector<16x128xf32>
      %c0_12 = arith.constant 0 : index
      %c0_13 = arith.constant 0 : index
      %13 = vector.load %arg5[%c0_12, %c0_13] : memref<1x128xf32, #tpu.memory_space<vmem>>, vector<1x128xf32>
      %14 = vector.broadcast %13 : vector<1x128xf32> to vector<16x128xf32>
      %15 = arith.addf %12, %14 : vector<16x128xf32>
      %16 = arith.mulf %15, %15 : vector<16x128xf32>
      %17 = arith.mulf %15, %16 : vector<16x128xf32>
      %cst_14 = arith.constant 4.471500e-02 : f32
      %18 = vector.broadcast %cst_14 : f32 to vector<16x128xf32>
      %19 = arith.mulf %18, %17 : vector<16x128xf32>
      %20 = arith.addf %15, %19 : vector<16x128xf32>
      %cst_15 = arith.constant 0.797884583 : f32
      %21 = vector.broadcast %cst_15 : f32 to vector<16x128xf32>
      %22 = arith.mulf %21, %20 : vector<16x128xf32>
      %23 = math.tanh %22 : vector<16x128xf32>
      %cst_16 = arith.constant 1.000000e+00 : f32
      %24 = vector.broadcast %cst_16 : f32 to vector<16x128xf32>
      %25 = arith.addf %24, %23 : vector<16x128xf32>
      %cst_17 = arith.constant 5.000000e-01 : f32
      %26 = vector.broadcast %cst_17 : f32 to vector<16x128xf32>
      %27 = arith.mulf %26, %25 : vector<16x128xf32>
      %28 = arith.mulf %15, %27 : vector<16x128xf32>
      %29 = arith.truncf %28 : vector<16x128xf32> to vector<16x128xbf16>
      %c0_18 = arith.constant 0 : index
      %c0_19 = arith.constant 0 : index
      %30 = vector.load %arg6[%c0_18, %c0_19] : memref<16x128xbf16, #tpu.memory_space<vmem>>, vector<16x128xbf16>
      tpu.vector_store %arg6[%c0_18, %c0_19], %29 {strides = array<i32>} : memref<16x128xbf16, #tpu.memory_space<vmem>>, vector<16x128xbf16>,
    } else {
    }
    return
  }
  func.func @transform_0(%arg0: i32, %arg1: i32, %arg2: i32) -> (i32, i32) {
    %c0_i32 = arith.constant 0 : i32
    return %arg0, %arg2 : i32, i32
  }
  func.func @transform_1(%arg0: i32, %arg1: i32, %arg2: i32) -> (i32, i32) {
    %c0_i32 = arith.constant 0 : i32
    return %arg2, %arg1 : i32, i32
  }
  func.func @transform_2(%arg0: i32, %arg1: i32, %arg2: i32) -> (i32, i32) {
    %c0_i32 = arith.constant 0 : i32
    %c0_i32_0 = arith.constant 0 : i32
    return %c0_i32, %arg1 : i32, i32
  }
  func.func @transform_3(%arg0: i32, %arg1: i32, %arg2: i32) -> (i32, i32) {
    %c0_i32 = arith.constant 0 : i32
    return %arg0, %arg1 : i32, i32
  }
}

module attributes {stable_mosaic.version = 11 : i64} {
  func.func @_linear_kernel(%arg0: i32, %arg1: i32, %arg2: i32, %arg3: memref<8x128xbf16, #tpu.memory_space<vmem>>, %arg4: memref<128x128xbf16, #tpu.memory_space<vmem>>, %arg5: memref<1x128xf32, #tpu.memory_space<vmem>>, %arg6: memref<8x128xbf16, #tpu.memory_space<vmem>>, %arg7: memref<8x128xf32, #tpu.memory_space<vmem>>) attributes {dimension_semantics = [#tpu.dimension_semantics<parallel>, #tpu.dimension_semantics<parallel>, #tpu.dimension_semantics<arbitrary>], iteration_bounds = array<i64: 1, 1, 1>, scalar_prefetch = 0 : i64, scratch_operands = 1 : i64, tpu.core_type = #tpu.core_type<tc>, window_params = [{transform_indices = @transform_0, window_bounds = array<i64: 8, 128>}, {transform_indices = @transform_1, window_bounds = array<i64: 128, 128>}, {transform_indices = @transform_2, window_bounds = array<i64: 1, 128>}, {transform_indices = @transform_3, window_bounds = array<i64: 8, 128>}]} {
    %c0_i32 = arith.constant 0 : i32
    %0 = arith.cmpi eq, %arg2, %c0_i32 : i32
    %1 = arith.extui %0 : i1 to i32
    %c0_i32_0 = arith.constant 0 : i32
    %2 = arith.cmpi ne, %1, %c0_i32_0 : i32
    scf.if %2 {
      %cst_10 = arith.constant 0.000000e+00 : f32
      %12 = vector.broadcast %cst_10 : f32 to vector<8x128xf32>
      %c0_11 = arith.constant 0 : index
      %c0_12 = arith.constant 0 : index
      %13 = vector.load %arg7[%c0_11, %c0_12] : memref<8x128xf32, #tpu.memory_space<vmem>>, vector<8x128xf32>
      tpu.vector_store %arg7[%c0_11, %c0_12], %12 {strides = array<i32>} : memref<8x128xf32, #tpu.memory_space<vmem>>, vector<8x128xf32>,
    } else {
    }
    %c0 = arith.constant 0 : index
    %c0_1 = arith.constant 0 : index
    %3 = vector.load %arg7[%c0, %c0_1] : memref<8x128xf32, #tpu.memory_space<vmem>>, vector<8x128xf32>
    %c0_2 = arith.constant 0 : index
    %c0_3 = arith.constant 0 : index
    %4 = vector.load %arg3[%c0_2, %c0_3] : memref<8x128xbf16, #tpu.memory_space<vmem>>, vector<8x128xbf16>
    %c0_4 = arith.constant 0 : index
    %c0_5 = arith.constant 0 : index
    %5 = vector.load %arg4[%c0_4, %c0_5] : memref<128x128xbf16, #tpu.memory_space<vmem>>, vector<128x128xbf16>
    %cst = arith.constant dense<0.000000e+00> : vector<8x128xf32>
    %6 = tpu.matmul %4, %5, %cst {dimension_numbers = #tpu.dot_dimension_numbers<[1], [0], [0], [1], [0, 0, 1, 1], [], []>} : vector<8x128xbf16>, vector<128x128xbf16>, vector<8x128xf32> -> vector<8x128xf32>
    %7 = arith.addf %3, %6 : vector<8x128xf32>
    %c0_6 = arith.constant 0 : index
    %c0_7 = arith.constant 0 : index
    %8 = vector.load %arg7[%c0_6, %c0_7] : memref<8x128xf32, #tpu.memory_space<vmem>>, vector<8x128xf32>
    tpu.vector_store %arg7[%c0_6, %c0_7], %7 {strides = array<i32>} : memref<8x128xf32, #tpu.memory_space<vmem>>, vector<8x128xf32>,
    %c0_i32_8 = arith.constant 0 : i32
    %9 = arith.cmpi eq, %arg2, %c0_i32_8 : i32
    %10 = arith.extui %9 : i1 to i32
    %c0_i32_9 = arith.constant 0 : i32
    %11 = arith.cmpi ne, %10, %c0_i32_9 : i32
    scf.if %11 {
      %c0_10 = arith.constant 0 : index
      %c0_11 = arith.constant 0 : index
      %12 = vector.load %arg7[%c0_10, %c0_11] : memref<8x128xf32, #tpu.memory_space<vmem>>, vector<8x128xf32>
      %c0_12 = arith.constant 0 : index
      %c0_13 = arith.constant 0 : index
      %13 = vector.load %arg5[%c0_12, %c0_13] : memref<1x128xf32, #tpu.memory_space<vmem>>, vector<1x128xf32>
      %14 = vector.broadcast %13 : vector<1x128xf32> to vector<8x128xf32>
      %15 = arith.addf %12, %14 : vector<8x128xf32>
      %16 = arith.truncf %15 : vector<8x128xf32> to vector<8x128xbf16>
      %c0_14 = arith.constant 0 : index
      %c0_15 = arith.constant 0 : index
      %17 = vector.load %arg6[%c0_14, %c0_15] : memref<8x128xbf16, #tpu.memory_space<vmem>>, vector<8x128xbf16>
      tpu.vector_store %arg6[%c0_14, %c0_15], %16 {strides = array<i32>} : memref<8x128xbf16, #tpu.memory_space<vmem>>, vector<8x128xbf16>,
    } else {
    }
    return
  }
  func.func @transform_0(%arg0: i32, %arg1: i32, %arg2: i32) -> (i32, i32) {
    %c0_i32 = arith.constant 0 : i32
    return %arg0, %arg2 : i32, i32
  }
  func.func @transform_1(%arg0: i32, %arg1: i32, %arg2: i32) -> (i32, i32) {
    %c0_i32 = arith.constant 0 : i32
    return %arg2, %arg1 : i32, i32
  }
  func.func @transform_2(%arg0: i32, %arg1: i32, %arg2: i32) -> (i32, i32) {
    %c0_i32 = arith.constant 0 : i32
    %c0_i32_0 = arith.constant 0 : i32
    return %c0_i32, %arg1 : i32, i32
  }
  func.func @transform_3(%arg0: i32, %arg1: i32, %arg2: i32) -> (i32, i32) {
    %c0_i32 = arith.constant 0 : i32
    return %arg0, %arg1 : i32, i32
  }
}

module attributes {stable_mosaic.version = 11 : i64} {
  func.func @_linear_kernel(%arg0: i32, %arg1: i32, %arg2: i32, %arg3: memref<8x128xbf16, #tpu.memory_space<vmem>>, %arg4: memref<128x128xbf16, #tpu.memory_space<vmem>>, %arg5: memref<1x128xf32, #tpu.memory_space<vmem>>, %arg6: memref<8x128xbf16, #tpu.memory_space<vmem>>, %arg7: memref<8x128xf32, #tpu.memory_space<vmem>>) attributes {dimension_semantics = [#tpu.dimension_semantics<parallel>, #tpu.dimension_semantics<parallel>, #tpu.dimension_semantics<arbitrary>], iteration_bounds = array<i64: 1, 1, 1>, scalar_prefetch = 0 : i64, scratch_operands = 1 : i64, tpu.core_type = #tpu.core_type<tc>, window_params = [{transform_indices = @transform_0, window_bounds = array<i64: 8, 128>}, {transform_indices = @transform_1, window_bounds = array<i64: 128, 128>}, {transform_indices = @transform_2, window_bounds = array<i64: 1, 128>}, {transform_indices = @transform_3, window_bounds = array<i64: 8, 128>}]} {
    %c0_i32 = arith.constant 0 : i32
    %0 = arith.cmpi eq, %arg2, %c0_i32 : i32
    %1 = arith.extui %0 : i1 to i32
    %c0_i32_0 = arith.constant 0 : i32
    %2 = arith.cmpi ne, %1, %c0_i32_0 : i32
    scf.if %2 {
      %cst_10 = arith.constant 0.000000e+00 : f32
      %12 = vector.broadcast %cst_10 : f32 to vector<8x128xf32>
      %c0_11 = arith.constant 0 : index
      %c0_12 = arith.constant 0 : index
      %13 = vector.load %arg7[%c0_11, %c0_12] : memref<8x128xf32, #tpu.memory_space<vmem>>, vector<8x128xf32>
      tpu.vector_store %arg7[%c0_11, %c0_12], %12 {strides = array<i32>} : memref<8x128xf32, #tpu.memory_space<vmem>>, vector<8x128xf32>,
    } else {
    }
    %c0 = arith.constant 0 : index
    %c0_1 = arith.constant 0 : index
    %3 = vector.load %arg7[%c0, %c0_1] : memref<8x128xf32, #tpu.memory_space<vmem>>, vector<8x128xf32>
    %c0_2 = arith.constant 0 : index
    %c0_3 = arith.constant 0 : index
    %4 = vector.load %arg3[%c0_2, %c0_3] : memref<8x128xbf16, #tpu.memory_space<vmem>>, vector<8x128xbf16>
    %c0_4 = arith.constant 0 : index
    %c0_5 = arith.constant 0 : index
    %5 = vector.load %arg4[%c0_4, %c0_5] : memref<128x128xbf16, #tpu.memory_space<vmem>>, vector<128x128xbf16>
    %cst = arith.constant dense<0.000000e+00> : vector<8x128xf32>
    %6 = tpu.matmul %4, %5, %cst {dimension_numbers = #tpu.dot_dimension_numbers<[1], [0], [0], [1], [0, 0, 1, 1], [], []>} : vector<8x128xbf16>, vector<128x128xbf16>, vector<8x128xf32> -> vector<8x128xf32>
    %7 = arith.addf %3, %6 : vector<8x128xf32>
    %c0_6 = arith.constant 0 : index
    %c0_7 = arith.constant 0 : index
    %8 = vector.load %arg7[%c0_6, %c0_7] : memref<8x128xf32, #tpu.memory_space<vmem>>, vector<8x128xf32>
    tpu.vector_store %arg7[%c0_6, %c0_7], %7 {strides = array<i32>} : memref<8x128xf32, #tpu.memory_space<vmem>>, vector<8x128xf32>,
    %c0_i32_8 = arith.constant 0 : i32
    %9 = arith.cmpi eq, %arg2, %c0_i32_8 : i32
    %10 = arith.extui %9 : i1 to i32
    %c0_i32_9 = arith.constant 0 : i32
    %11 = arith.cmpi ne, %10, %c0_i32_9 : i32
    scf.if %11 {
      %c0_10 = arith.constant 0 : index
      %c0_11 = arith.constant 0 : index
      %12 = vector.load %arg7[%c0_10, %c0_11] : memref<8x128xf32, #tpu.memory_space<vmem>>, vector<8x128xf32>
      %c0_12 = arith.constant 0 : index
      %c0_13 = arith.constant 0 : index
      %13 = vector.load %arg5[%c0_12, %c0_13] : memref<1x128xf32, #tpu.memory_space<vmem>>, vector<1x128xf32>
      %14 = vector.broadcast %13 : vector<1x128xf32> to vector<8x128xf32>
      %15 = arith.addf %12, %14 : vector<8x128xf32>
      %16 = math.tanh %15 : vector<8x128xf32>
      %17 = arith.truncf %16 : vector<8x128xf32> to vector<8x128xbf16>
      %c0_14 = arith.constant 0 : index
      %c0_15 = arith.constant 0 : index
      %18 = vector.load %arg6[%c0_14, %c0_15] : memref<8x128xbf16, #tpu.memory_space<vmem>>, vector<8x128xbf16>
      tpu.vector_store %arg6[%c0_14, %c0_15], %17 {strides = array<i32>} : memref<8x128xbf16, #tpu.memory_space<vmem>>, vector<8x128xbf16>,
    } else {
    }
    return
  }
  func.func @transform_0(%arg0: i32, %arg1: i32, %arg2: i32) -> (i32, i32) {
    %c0_i32 = arith.constant 0 : i32
    return %arg0, %arg2 : i32, i32
  }
  func.func @transform_1(%arg0: i32, %arg1: i32, %arg2: i32) -> (i32, i32) {
    %c0_i32 = arith.constant 0 : i32
    return %arg2, %arg1 : i32, i32
  }
  func.func @transform_2(%arg0: i32, %arg1: i32, %arg2: i32) -> (i32, i32) {
    %c0_i32 = arith.constant 0 : i32
    %c0_i32_0 = arith.constant 0 : i32
    return %c0_i32, %arg1 : i32, i32
  }
  func.func @transform_3(%arg0: i32, %arg1: i32, %arg2: i32) -> (i32, i32) {
    %c0_i32 = arith.constant 0 : i32
    return %arg0, %arg1 : i32, i32
  }
}

module attributes {stable_mosaic.version = 11 : i64} {
  func.func @_attn_kernel(%arg0: i32, %arg1: memref<1x4x2x8xbf16, #tpu.memory_space<vmem>>, %arg2: memref<1x4x2x8xbf16, #tpu.memory_space<vmem>>, %arg3: memref<1x4x2x8xbf16, #tpu.memory_space<vmem>>, %arg4: memref<1x1x2xf32, #tpu.memory_space<vmem>>, %arg5: memref<1x4x2x8xbf16, #tpu.memory_space<vmem>>) attributes {dimension_semantics = [#tpu.dimension_semantics<parallel>], iteration_bounds = array<i64: 1>, scalar_prefetch = 0 : i64, scratch_operands = 0 : i64, tpu.core_type = #tpu.core_type<tc>, window_params = [{transform_indices = @transform_0, window_bounds = array<i64: 1, 4, 2, 8>}, {transform_indices = @transform_1, window_bounds = array<i64: 1, 4, 2, 8>}, {transform_indices = @transform_2, window_bounds = array<i64: 1, 4, 2, 8>}, {transform_indices = @transform_3, window_bounds = array<i64: 1, 1, 2>}, {transform_indices = @transform_4, window_bounds = array<i64: 1, 4, 2, 8>}]} {
    %c0 = arith.constant 0 : index
    %c0_0 = arith.constant 0 : index
    %c0_1 = arith.constant 0 : index
    %c0_2 = arith.constant 0 : index
    %0 = vector.load %arg1[%c0, %c0_0, %c0_1, %c0_2] : memref<1x4x2x8xbf16, #tpu.memory_space<vmem>>, vector<1x4x2x8xbf16>
    %1 = vector.shape_cast %0 : vector<1x4x2x8xbf16> to vector<4x2x8xbf16>
    %c0_3 = arith.constant 0 : index
    %c0_4 = arith.constant 0 : index
    %c0_5 = arith.constant 0 : index
    %c0_6 = arith.constant 0 : index
    %2 = vector.load %arg2[%c0_3, %c0_4, %c0_5, %c0_6] : memref<1x4x2x8xbf16, #tpu.memory_space<vmem>>, vector<1x4x2x8xbf16>
    %3 = vector.shape_cast %2 : vector<1x4x2x8xbf16> to vector<4x2x8xbf16>
    %c0_7 = arith.constant 0 : index
    %c0_8 = arith.constant 0 : index
    %c0_9 = arith.constant 0 : index
    %c0_10 = arith.constant 0 : index
    %4 = vector.load %arg3[%c0_7, %c0_8, %c0_9, %c0_10] : memref<1x4x2x8xbf16, #tpu.memory_space<vmem>>, vector<1x4x2x8xbf16>
    %5 = vector.shape_cast %4 : vector<1x4x2x8xbf16> to vector<4x2x8xbf16>
    "tpu.trace_start"() <{level = 10 : i32, message = "hqd,hkd->hqk"}> : () -> ()
    %cst = arith.constant dense<0.000000e+00> : vector<4x2x2xf32>
    %6 = tpu.matmul %1, %3, %cst {dimension_numbers = #tpu.dot_dimension_numbers<[2], [2], [1], [1], [0, 0, 0, 1, 1, 1], [0], [0]>} : vector<4x2x8xbf16>, vector<4x2x8xbf16>, vector<4x2x2xf32> -> vector<4x2x2xf32>
    "tpu.trace_stop"() : () -> ()
    %cst_11 = arith.constant 0.353553385 : f32
    %7 = vector.broadcast %cst_11 : f32 to vector<4x2x2xf32>
    %8 = arith.mulf %6, %7 : vector<4x2x2xf32>
    %c0_12 = arith.constant 0 : index
    %c0_13 = arith.constant 0 : index
    %c0_14 = arith.constant 0 : index
    %9 = vector.load %arg4[%c0_12, %c0_13, %c0_14] : memref<1x1x2xf32, #tpu.memory_space<vmem>>, vector<1x1x2xf32>
    %10 = vector.shape_cast %9 : vector<1x1x2xf32> to vector<1x2xf32>
    %11 = vector.shape_cast %10 : vector<1x2xf32> to vector<1x1x2xf32>
    %12 = vector.broadcast %11 : vector<1x1x2xf32> to vector<4x2x2xf32>
    %13 = arith.addf %8, %12 : vector<4x2x2xf32>
    %cst_15 = arith.constant dense<0xFF800000> : vector<4x2xf32>
    %14 = vector.multi_reduction <maximumf>, %13, %cst_15 [2] : vector<4x2x2xf32> to vector<4x2xf32>
    %15 = vector.shape_cast %14 : vector<4x2xf32> to vector<4x2x1xf32>
    %16 = vector.broadcast %15 : vector<4x2x1xf32> to vector<4x2x2xf32>
    %17 = arith.subf %13, %16 : vector<4x2x2xf32>
    %18 = math.exp %17 : vector<4x2x2xf32>
    %cst_16 = arith.constant dense<0.000000e+00> : vector<4x2xf32>
    %19 = vector.multi_reduction <add>, %18, %cst_16 [2] : vector<4x2x2xf32> to vector<4x2xf32>
    %20 = vector.shape_cast %19 : vector<4x2xf32> to vector<4x2x1xf32>
    %21 = vector.broadcast %20 : vector<4x2x1xf32> to vector<4x2x2xf32>
    %22 = arith.divf %18, %21 : vector<4x2x2xf32>
    %23 = arith.truncf %22 : vector<4x2x2xf32> to vector<4x2x2xbf16>
    "tpu.trace_start"() <{level = 10 : i32, message = "hqk,hkd->hqd"}> : () -> ()
    %cst_17 = arith.constant dense<0.000000e+00> : vector<4x2x8xf32>
    %24 = tpu.matmul %23, %5, %cst_17 {dimension_numbers = #tpu.dot_dimension_numbers<[2], [1], [1], [2], [0, 0, 0, 1, 1, 2], [0], [0]>} : vector<4x2x2xbf16>, vector<4x2x8xbf16>, vector<4x2x8xf32> -> vector<4x2x8xf32>
    "tpu.trace_stop"() : () -> ()
    %25 = arith.truncf %24 : vector<4x2x8xf32> to vector<4x2x8xbf16>
    %c0_18 = arith.constant 0 : index
    %c0_19 = arith.constant 0 : index
    %c0_20 = arith.constant 0 : index
    %c0_21 = arith.constant 0 : index
    %26 = vector.load %arg5[%c0_18, %c0_19, %c0_20, %c0_21] : memref<1x4x2x8xbf16, #tpu.memory_space<vmem>>, vector<1x4x2x8xbf16>
    %27 = vector.shape_cast %26 : vector<1x4x2x8xbf16> to vector<4x2x8xbf16>
    %28 = vector.shape_cast %25 : vector<4x2x8xbf16> to vector<1x4x2x8xbf16>
    tpu.vector_store %arg5[%c0_18, %c0_19, %c0_20, %c0_21], %28 {strides = array<i32>} : memref<1x4x2x8xbf16, #tpu.memory_space<vmem>>, vector<1x4x2x8xbf16>,
    return
  }
  func.func @transform_0(%arg0: i32) -> (i32, i32, i32, i32) {
    %c0_i32 = arith.constant 0 : i32
    %c0_i32_0 = arith.constant 0 : i32
    %c0_i32_1 = arith.constant 0 : i32
    %c0_i32_2 = arith.constant 0 : i32
    return %arg0, %c0_i32, %c0_i32_0, %c0_i32_1 : i32, i32, i32, i32
  }
  func.func @transform_1(%arg0: i32) -> (i32, i32, i32, i32) {
    %c0_i32 = arith.constant 0 : i32
    %c0_i32_0 = arith.constant 0 : i32
    %c0_i32_1 = arith.constant 0 : i32
    %c0_i32_2 = arith.constant 0 : i32
    return %arg0, %c0_i32, %c0_i32_0, %c0_i32_1 : i32, i32, i32, i32
  }
  func.func @transform_2(%arg0: i32) -> (i32, i32, i32, i32) {
    %c0_i32 = arith.constant 0 : i32
    %c0_i32_0 = arith.constant 0 : i32
    %c0_i32_1 = arith.constant 0 : i32
    %c0_i32_2 = arith.constant 0 : i32
    return %arg0, %c0_i32, %c0_i32_0, %c0_i32_1 : i32, i32, i32, i32
  }
  func.func @transform_3(%arg0: i32) -> (i32, i32, i32) {
    %c0_i32 = arith.constant 0 : i32
    %c0_i32_0 = arith.constant 0 : i32
    %c0_i32_1 = arith.constant 0 : i32
    return %arg0, %c0_i32, %c0_i32_0 : i32, i32, i32
  }
  func.func @transform_4(%arg0: i32) -> (i32, i32, i32, i32) {
    %c0_i32 = arith.constant 0 : i32
    %c0_i32_0 = arith.constant 0 : i32
    %c0_i32_1 = arith.constant 0 : i32
    %c0_i32_2 = arith.constant 0 : i32
    return %arg0, %c0_i32, %c0_i32_0, %c0_i32_1 : i32, i32, i32, i32
  }
}

module attributes {stable_mosaic.version = 11 : i64} {
  func.func @_linear_kernel(%arg0: i32, %arg1: i32, %arg2: i32, %arg3: memref<8x128xbf16, #tpu.memory_space<vmem>>, %arg4: memref<128x128xbf16, #tpu.memory_space<vmem>>, %arg5: memref<1x128xf32, #tpu.memory_space<vmem>>, %arg6: memref<8x128xbf16, #tpu.memory_space<vmem>>, %arg7: memref<8x128xf32, #tpu.memory_space<vmem>>) attributes {dimension_semantics = [#tpu.dimension_semantics<parallel>, #tpu.dimension_semantics<parallel>, #tpu.dimension_semantics<arbitrary>], iteration_bounds = array<i64: 1, 1, 1>, scalar_prefetch = 0 : i64, scratch_operands = 1 : i64, tpu.core_type = #tpu.core_type<tc>, window_params = [{transform_indices = @transform_0, window_bounds = array<i64: 8, 128>}, {transform_indices = @transform_1, window_bounds = array<i64: 128, 128>}, {transform_indices = @transform_2, window_bounds = array<i64: 1, 128>}, {transform_indices = @transform_3, window_bounds = array<i64: 8, 128>}]} {
    %c0_i32 = arith.constant 0 : i32
    %0 = arith.cmpi eq, %arg2, %c0_i32 : i32
    %1 = arith.extui %0 : i1 to i32
    %c0_i32_0 = arith.constant 0 : i32
    %2 = arith.cmpi ne, %1, %c0_i32_0 : i32
    scf.if %2 {
      %cst_10 = arith.constant 0.000000e+00 : f32
      %12 = vector.broadcast %cst_10 : f32 to vector<8x128xf32>
      %c0_11 = arith.constant 0 : index
      %c0_12 = arith.constant 0 : index
      %13 = vector.load %arg7[%c0_11, %c0_12] : memref<8x128xf32, #tpu.memory_space<vmem>>, vector<8x128xf32>
      tpu.vector_store %arg7[%c0_11, %c0_12], %12 {strides = array<i32>} : memref<8x128xf32, #tpu.memory_space<vmem>>, vector<8x128xf32>,
    } else {
    }
    %c0 = arith.constant 0 : index
    %c0_1 = arith.constant 0 : index
    %3 = vector.load %arg7[%c0, %c0_1] : memref<8x128xf32, #tpu.memory_space<vmem>>, vector<8x128xf32>
    %c0_2 = arith.constant 0 : index
    %c0_3 = arith.constant 0 : index
    %4 = vector.load %arg3[%c0_2, %c0_3] : memref<8x128xbf16, #tpu.memory_space<vmem>>, vector<8x128xbf16>
    %c0_4 = arith.constant 0 : index
    %c0_5 = arith.constant 0 : index
    %5 = vector.load %arg4[%c0_4, %c0_5] : memref<128x128xbf16, #tpu.memory_space<vmem>>, vector<128x128xbf16>
    %cst = arith.constant dense<0.000000e+00> : vector<8x128xf32>
    %6 = tpu.matmul %4, %5, %cst {dimension_numbers = #tpu.dot_dimension_numbers<[1], [0], [0], [1], [0, 0, 1, 1], [], []>} : vector<8x128xbf16>, vector<128x128xbf16>, vector<8x128xf32> -> vector<8x128xf32>
    %7 = arith.addf %3, %6 : vector<8x128xf32>
    %c0_6 = arith.constant 0 : index
    %c0_7 = arith.constant 0 : index
    %8 = vector.load %arg7[%c0_6, %c0_7] : memref<8x128xf32, #tpu.memory_space<vmem>>, vector<8x128xf32>
    tpu.vector_store %arg7[%c0_6, %c0_7], %7 {strides = array<i32>} : memref<8x128xf32, #tpu.memory_space<vmem>>, vector<8x128xf32>,
    %c0_i32_8 = arith.constant 0 : i32
    %9 = arith.cmpi eq, %arg2, %c0_i32_8 : i32
    %10 = arith.extui %9 : i1 to i32
    %c0_i32_9 = arith.constant 0 : i32
    %11 = arith.cmpi ne, %10, %c0_i32_9 : i32
    scf.if %11 {
      %c0_10 = arith.constant 0 : index
      %c0_11 = arith.constant 0 : index
      %12 = vector.load %arg7[%c0_10, %c0_11] : memref<8x128xf32, #tpu.memory_space<vmem>>, vector<8x128xf32>
      %c0_12 = arith.constant 0 : index
      %c0_13 = arith.constant 0 : index
      %13 = vector.load %arg5[%c0_12, %c0_13] : memref<1x128xf32, #tpu.memory_space<vmem>>, vector<1x128xf32>
      %14 = vector.broadcast %13 : vector<1x128xf32> to vector<8x128xf32>
      %15 = arith.addf %12, %14 : vector<8x128xf32>
      %cst_14 = arith.constant 0.000000e+00 : f32
      %16 = vector.broadcast %cst_14 : f32 to vector<8x128xf32>
      %17 = arith.maximumf %15, %16 : vector<8x128xf32>
      %18 = arith.truncf %17 : vector<8x128xf32> to vector<8x128xbf16>
      %c0_15 = arith.constant 0 : index
      %c0_16 = arith.constant 0 : index
      %19 = vector.load %arg6[%c0_15, %c0_16] : memref<8x128xbf16, #tpu.memory_space<vmem>>, vector<8x128xbf16>
      tpu.vector_store %arg6[%c0_15, %c0_16], %18 {strides = array<i32>} : memref<8x128xbf16, #tpu.memory_space<vmem>>, vector<8x128xbf16>,
    } else {
    }
    return
  }
  func.func @transform_0(%arg0: i32, %arg1: i32, %arg2: i32) -> (i32, i32) {
    %c0_i32 = arith.constant 0 : i32
    return %arg0, %arg2 : i32, i32
  }
  func.func @transform_1(%arg0: i32, %arg1: i32, %arg2: i32) -> (i32, i32) {
    %c0_i32 = arith.constant 0 : i32
    return %arg2, %arg1 : i32, i32
  }
  func.func @transform_2(%arg0: i32, %arg1: i32, %arg2: i32) -> (i32, i32) {
    %c0_i32 = arith.constant 0 : i32
    %c0_i32_0 = arith.constant 0 : i32
    return %c0_i32, %arg1 : i32, i32
  }
  func.func @transform_3(%arg0: i32, %arg1: i32, %arg2: i32) -> (i32, i32) {
    %c0_i32 = arith.constant 0 : i32
    return %arg0, %arg1 : i32, i32
  }
}

module attributes {stable_mosaic.version = 11 : i64} {
  func.func @_linear_kernel(%arg0: i32, %arg1: i32, %arg2: i32, %arg3: memref<8x128xbf16, #tpu.memory_space<vmem>>, %arg4: memref<128x128xbf16, #tpu.memory_space<vmem>>, %arg5: memref<1x128xf32, #tpu.memory_space<vmem>>, %arg6: memref<8x128xf32, #tpu.memory_space<vmem>>, %arg7: memref<8x128xf32, #tpu.memory_space<vmem>>) attributes {dimension_semantics = [#tpu.dimension_semantics<parallel>, #tpu.dimension_semantics<parallel>, #tpu.dimension_semantics<arbitrary>], iteration_bounds = array<i64: 1, 1, 1>, scalar_prefetch = 0 : i64, scratch_operands = 1 : i64, tpu.core_type = #tpu.core_type<tc>, window_params = [{transform_indices = @transform_0, window_bounds = array<i64: 8, 128>}, {transform_indices = @transform_1, window_bounds = array<i64: 128, 128>}, {transform_indices = @transform_2, window_bounds = array<i64: 1, 128>}, {transform_indices = @transform_3, window_bounds = array<i64: 8, 128>}]} {
    %c0_i32 = arith.constant 0 : i32
    %0 = arith.cmpi eq, %arg2, %c0_i32 : i32
    %1 = arith.extui %0 : i1 to i32
    %c0_i32_0 = arith.constant 0 : i32
    %2 = arith.cmpi ne, %1, %c0_i32_0 : i32
    scf.if %2 {
      %cst_10 = arith.constant 0.000000e+00 : f32
      %12 = vector.broadcast %cst_10 : f32 to vector<8x128xf32>
      %c0_11 = arith.constant 0 : index
      %c0_12 = arith.constant 0 : index
      %13 = vector.load %arg7[%c0_11, %c0_12] : memref<8x128xf32, #tpu.memory_space<vmem>>, vector<8x128xf32>
      tpu.vector_store %arg7[%c0_11, %c0_12], %12 {strides = array<i32>} : memref<8x128xf32, #tpu.memory_space<vmem>>, vector<8x128xf32>,
    } else {
    }
    %c0 = arith.constant 0 : index
    %c0_1 = arith.constant 0 : index
    %3 = vector.load %arg7[%c0, %c0_1] : memref<8x128xf32, #tpu.memory_space<vmem>>, vector<8x128xf32>
    %c0_2 = arith.constant 0 : index
    %c0_3 = arith.constant 0 : index
    %4 = vector.load %arg3[%c0_2, %c0_3] : memref<8x128xbf16, #tpu.memory_space<vmem>>, vector<8x128xbf16>
    %c0_4 = arith.constant 0 : index
    %c0_5 = arith.constant 0 : index
    %5 = vector.load %arg4[%c0_4, %c0_5] : memref<128x128xbf16, #tpu.memory_space<vmem>>, vector<128x128xbf16>
    %cst = arith.constant dense<0.000000e+00> : vector<8x128xf32>
    %6 = tpu.matmul %4, %5, %cst {dimension_numbers = #tpu.dot_dimension_numbers<[1], [0], [0], [1], [0, 0, 1, 1], [], []>} : vector<8x128xbf16>, vector<128x128xbf16>, vector<8x128xf32> -> vector<8x128xf32>
    %7 = arith.addf %3, %6 : vector<8x128xf32>
    %c0_6 = arith.constant 0 : index
    %c0_7 = arith.constant 0 : index
    %8 = vector.load %arg7[%c0_6, %c0_7] : memref<8x128xf32, #tpu.memory_space<vmem>>, vector<8x128xf32>
    tpu.vector_store %arg7[%c0_6, %c0_7], %7 {strides = array<i32>} : memref<8x128xf32, #tpu.memory_space<vmem>>, vector<8x128xf32>,
    %c0_i32_8 = arith.constant 0 : i32
    %9 = arith.cmpi eq, %arg2, %c0_i32_8 : i32
    %10 = arith.extui %9 : i1 to i32
    %c0_i32_9 = arith.constant 0 : i32
    %11 = arith.cmpi ne, %10, %c0_i32_9 : i32
    scf.if %11 {
      %c0_10 = arith.constant 0 : index
      %c0_11 = arith.constant 0 : index
      %12 = vector.load %arg7[%c0_10, %c0_11] : memref<8x128xf32, #tpu.memory_space<vmem>>, vector<8x128xf32>
      %c0_12 = arith.constant 0 : index
      %c0_13 = arith.constant 0 : index
      %13 = vector.load %arg5[%c0_12, %c0_13] : memref<1x128xf32, #tpu.memory_space<vmem>>, vector<1x128xf32>
      %14 = vector.broadcast %13 : vector<1x128xf32> to vector<8x128xf32>
      %15 = arith.addf %12, %14 : vector<8x128xf32>
      %c0_14 = arith.constant 0 : index
      %c0_15 = arith.constant 0 : index
      %16 = vector.load %arg6[%c0_14, %c0_15] : memref<8x128xf32, #tpu.memory_space<vmem>>, vector<8x128xf32>
      tpu.vector_store %arg6[%c0_14, %c0_15], %15 {strides = array<i32>} : memref<8x128xf32, #tpu.memory_space<vmem>>, vector<8x128xf32>,
    } else {
    }
    return
  }
  func.func @transform_0(%arg0: i32, %arg1: i32, %arg2: i32) -> (i32, i32) {
    %c0_i32 = arith.constant 0 : i32
    return %arg0, %arg2 : i32, i32
  }
  func.func @transform_1(%arg0: i32, %arg1: i32, %arg2: i32) -> (i32, i32) {
    %c0_i32 = arith.constant 0 : i32
    return %arg2, %arg1 : i32, i32
  }
  func.func @transform_2(%arg0: i32, %arg1: i32, %arg2: i32) -> (i32, i32) {
    %c0_i32 = arith.constant 0 : i32
    %c0_i32_0 = arith.constant 0 : i32
    return %c0_i32, %arg1 : i32, i32
  }
  func.func @transform_3(%arg0: i32, %arg1: i32, %arg2: i32) -> (i32, i32) {
    %c0_i32 = arith.constant 0 : i32
    return %arg0, %arg1 : i32, i32
  }
}

</mosaic_0001>

<llo_original>
// kernel: bert_naive_forward.21
$region0: #{bert_naive_forward.21}
  #allocation0 [shape = 'u32[]', space=smem, size = 0x4, offset = 0x4, fixed_abs, tag = 'smem constant byte address 0x4 - core index']
  #allocation1 [shape = 'u32[144,128]{1,0:T(1,128)}', space=vmem, size = 0x12000, scoped, tag = 'internal scratch']
  %s0 = inlined_call_operand.vmem [shape: f32[16,32], index: 0, kind: input, shape index: {}]
  %s1 = inlined_call_operand.vmem [shape: f32[1,32], index: 1, kind: input, shape index: {}]
  %s2 = inlined_call_operand.vmem [shape: f32[1,32], index: 2, kind: input, shape index: {}]
  %s3 = inlined_call_operand.vmem [shape: bf16[16,32], index: 3, kind: output, shape index: {}]
  %s4 = sld [smem:[#allocation0]]
  $region22: #{bert_naive_forward.21} parent=0
    _
  %s6 = ssub.s32 1, %s4
  %s7 = scalar_select 0, %s6, %s4
  // Predicated region
  $region2: #{bert_naive_forward.21} parent=0 // pred_check
    _
  $region3: #{bert_naive_forward.21} parent=0 // pred_check_branch
    %9 = sbr.rel (0) target = $region5
  $region4: #{bert_naive_forward.21} parent=0 // pred_region
    _
  $region5: #{bert_naive_forward.21} parent=0 // pred_fallthru
    _
  // Predicated region
  $region6: #{bert_naive_forward.21} parent=0 // pred_check
    _
  $region7: #{bert_naive_forward.21} parent=0 // pred_check_branch
    %11 = sbr.rel (0) target = $region9
  $region8: #{bert_naive_forward.21} parent=0 // pred_region
    _
  $region9: #{bert_naive_forward.21} parent=0 // pred_fallthru
    _
  // Predicated region
  $region10: #{bert_naive_forward.21} parent=0 // pred_check
    _
  $region11: #{bert_naive_forward.21} parent=0 // pred_check_branch
    %13 = sbr.rel (0) target = $region13
  $region12: #{bert_naive_forward.21} parent=0 // pred_region
    _
  $region13: #{bert_naive_forward.21} parent=0 // pred_fallthru
    _
  %v14 = vld [vmem:[%s0] sm:$0xff]
  %v15 = vld [vmem:[%s0 + $0x8] sm:$0xff]
  %vm16 = vcmask 261120
  %v17 = vsel %vm16, %v14, 0.0
  %18 = vadd.xlane.f32.xlu0 %v17
  %v19 = vpop.xlane.xlu0 %18
  %v20 = vsel %vm16, %v15, 0.0
  %21 = vadd.xlane.f32.xlu0 %v20
  %v22 = vpop.xlane.xlu0 %21
  %v23 = vrcp.pop 32.0
  %v24 = vmul.f32 %v19, %v23
  %v25 = vmul.f32 %v22, %v23
  %v26 = vsub.f32 %v14, %v24
  %v27 = vsub.f32 %v15, %v25
  %v28 = vmul.f32 %v26, %v26
  %v29 = vmul.f32 %v27, %v27
  %v30 = vsel %vm16, %v28, 0.0
  %31 = vadd.xlane.f32.xlu0 %v30
  %v32 = vpop.xlane.xlu0 %31
  %v33 = vsel %vm16, %v29, 0.0
  %34 = vadd.xlane.f32.xlu0 %v33
  %v35 = vpop.xlane.xlu0 %34
  %v36 = vmul.f32 %v32, %v23
  %v37 = vmul.f32 %v35, %v23
  %v38 = vadd.f32 %v36, 1e-12
  %v39 = vadd.f32 %v37, 1e-12
  %v40 = vrsqrt.pop %v38
  %v41 = vrsqrt.pop %v39
  %v42 = vmul.f32 %v26, %v40
  %v43 = vmul.f32 %v27, %v41
  %v44 = vld [vmem:[%s1] sm:$0x1]
  %v46 = vlaneseq
  %v47 = vshrl.u32 %v46, 7
  %v48 = vsub.s32 0, %v47
  %v49 = vrot.slane %v44, %v48
  %v51 = vmul.f32 %v42, %v49
  %v52 = vmul.f32 %v43, %v49
  %v53 = vld [vmem:[%s2] sm:$0x1]
  %v55 = vlaneseq
  %v56 = vshrl.u32 %v55, 7
  %v57 = vsub.s32 0, %v56
  %v58 = vrot.slane %v53, %v57
  %v60 = vadd.f32 %v51, %v58
  %v61 = vadd.f32 %v52, %v58
  %v62 = vpack.c.bf16 %v61, %v60
  %v64 = vunpack.c.l.b16 %v62
  %v65 = vunpack.c.h.b16 %v62
  %v66 = vpack.c.b16 %v64, %v64
  %v67 = vpack.c.b16 %v65, %v65
  %vm70 = vcmask 257024
  %71 = vst.msk [vmem:[%s3] sm:$0xf] %vm70, %v66
  %72 = vst.msk [vmem:[%s3 + $0x4] sm:$0xf] %vm70, %v67
  // Predicated region
  $region14: #{bert_naive_forward.21} parent=0 // pred_check
    _
  $region15: #{bert_naive_forward.21} parent=0 // pred_check_branch
    %74 = sbr.rel (0) target = $region17
  $region16: #{bert_naive_forward.21} parent=0 // pred_region
    _
  $region17: #{bert_naive_forward.21} parent=0 // pred_fallthru
    _
  // Predicated region
  $region18: #{bert_naive_forward.21} parent=0 // pred_check
    _
  $region19: #{bert_naive_forward.21} parent=0 // pred_check_branch
    %76 = sbr.rel (0) target = $region21
  $region20: #{bert_naive_forward.21} parent=0 // pred_region
    _
  $region21: #{bert_naive_forward.21} parent=0 // pred_fallthru
    _

// kernel: bert_naive_forward.22
$region0: #{bert_naive_forward.22}
  #allocation0 [shape = 'u32[]', space=smem, size = 0x4, offset = 0x4, fixed_abs, tag = 'smem constant byte address 0x4 - core index']
  #allocation1 [shape = 'u32[144,128]{1,0:T(1,128)}', space=vmem, size = 0x12000, scoped, tag = 'internal scratch']
  #allocation2 [shape = 'f32[16,128]{1,0:T(8,128)}', space=vmem, size = 0x2000, scoped, tag = 'scratch operand']
  %s0 = inlined_call_operand.vmem [shape: bf16[16,128], index: 0, kind: input, shape index: {}]
  %s1 = inlined_call_operand.vmem [shape: bf16[128,128], index: 1, kind: input, shape index: {}]
  %s2 = inlined_call_operand.vmem [shape: f32[1,128], index: 2, kind: input, shape index: {}]
  %s3 = inlined_call_operand.vmem [shape: bf16[16,128], index: 3, kind: output, shape index: {}]
  %s4 = sld [smem:[#allocation0]]
  $region30: #{bert_naive_forward.22} parent=0
    _
  %s6 = ssub.s32 1, %s4
  %s7 = scalar_select 0, %s6, %s4
  // Predicated region
  $region2: #{bert_naive_forward.22} parent=0 // pred_check
    _
  $region3: #{bert_naive_forward.22} parent=0 // pred_check_branch
    %9 = sbr.rel (0) target = $region5
  $region4: #{bert_naive_forward.22} parent=0 // pred_region
    _
  $region5: #{bert_naive_forward.22} parent=0 // pred_fallthru
    _
  // Predicated region
  $region6: #{bert_naive_forward.22} parent=0 // pred_check
    _
  $region7: #{bert_naive_forward.22} parent=0 // pred_check_branch
    %11 = sbr.rel (0) target = $region9
  $region8: #{bert_naive_forward.22} parent=0 // pred_region
    _
  $region9: #{bert_naive_forward.22} parent=0 // pred_fallthru
    _
  // Predicated region
  $region10: #{bert_naive_forward.22} parent=0 // pred_check
    _
  $region11: #{bert_naive_forward.22} parent=0 // pred_check_branch
    %13 = sbr.rel (0) target = $region13
  $region12: #{bert_naive_forward.22} parent=0 // pred_region
    _
  $region13: #{bert_naive_forward.22} parent=0 // pred_fallthru
    _
  %p15 = scmp.eq.s32.totalorder 0, 0
  // Predicated region
  $region14: #{bert_naive_forward.22} parent=0 // pred_check
    %p16 = pneg %p15
  $region15: #{bert_naive_forward.22} parent=0 // pred_check_branch
    %18 = sbr.rel (%p16) target = $region17
  $region16: #{bert_naive_forward.22} parent=0 // pred_region
    %19 = vst [vmem:[#allocation2] sm:$0xff] 0.0
    %20 = vst [vmem:[#allocation2 + $0x8] sm:$0xff] 0.0
  $region17: #{bert_naive_forward.22} parent=0 // pred_fallthru
    _
  %v21 = vld [vmem:[#allocation2] sm:$0xff]
  %v22 = vld [vmem:[#allocation2 + $0x8] sm:$0xff]
  %v23 = vld [vmem:[%s0] sm:$0xf]
  %v24 = vld [vmem:[%s0 + $0x4] sm:$0xf]
  %v25 = vld [vmem:[%s1] sm:$0xf]
  %v26 = vld [vmem:[%s1 + $0x4] sm:$0xf]
  %v27 = vld [vmem:[%s1 + $0x8] sm:$0xf]
  %v28 = vld [vmem:[%s1 + $0xc] sm:$0xf]
  %v29 = vld [vmem:[%s1 + $0x10] sm:$0xf]
  %v30 = vld [vmem:[%s1 + $0x14] sm:$0xf]
  %v31 = vld [vmem:[%s1 + $0x18] sm:$0xf]
  %v32 = vld [vmem:[%s1 + $0x1c] sm:$0xf]
  %v33 = vld [vmem:[%s1 + $0x20] sm:$0xf]
  %v34 = vld [vmem:[%s1 + $0x24] sm:$0xf]
  %v35 = vld [vmem:[%s1 + $0x28] sm:$0xf]
  %v36 = vld [vmem:[%s1 + $0x2c] sm:$0xf]
  %v37 = vld [vmem:[%s1 + $0x30] sm:$0xf]
  %v38 = vld [vmem:[%s1 + $0x34] sm:$0xf]
  %v39 = vld [vmem:[%s1 + $0x38] sm:$0xf]
  %v40 = vld [vmem:[%s1 + $0x3c] sm:$0xf]
  %v43 = vunpack.c.l.b16 %v23
  %v44 = vunpack.c.l.b16 %v24
  %v45 = vpack.c.b16 %v44, %v43
  %v63 = vunpack.c.l.b16 %v25
  %v64 = vunpack.c.l.b16 %v26
  %v65 = vunpack.c.l.b16 %v27
  %v66 = vunpack.c.l.b16 %v28
  %v67 = vunpack.c.l.b16 %v29
  %v68 = vunpack.c.l.b16 %v30
  %v69 = vunpack.c.l.b16 %v31
  %v70 = vunpack.c.l.b16 %v32
  %v71 = vunpack.c.l.b16 %v33
  %v72 = vunpack.c.l.b16 %v34
  %v73 = vunpack.c.l.b16 %v35
  %v74 = vunpack.c.l.b16 %v36
  %v75 = vunpack.c.l.b16 %v37
  %v76 = vunpack.c.l.b16 %v38
  %v77 = vunpack.c.l.b16 %v39
  %v78 = vunpack.c.l.b16 %v40
  %v79 = vpack.c.b16 %v64, %v63
  %v80 = vpack.c.b16 %v66, %v65
  %v81 = vpack.c.b16 %v68, %v67
  %v82 = vpack.c.b16 %v70, %v69
  %v83 = vpack.c.b16 %v72, %v71
  %v84 = vpack.c.b16 %v74, %v73
  %v85 = vpack.c.b16 %v76, %v75
  %v86 = vpack.c.b16 %v78, %v77
  %95 = vmatprep.subr.bf16.mxu0 0
  %96 = vmatpush1.bf16.msra.mxu0 %v86
  %97 = vmatprep.subr.bf16.mxu0 0
  %98 = vmatpush1.bf16.msra.mxu0 %v85
  %99 = vmatprep.subr.bf16.mxu0 0
  %100 = vmatpush1.bf16.msra.mxu0 %v84
  %101 = vmatprep.subr.bf16.mxu0 0
  %102 = vmatpush1.bf16.msra.mxu0 %v83
  %103 = vmatprep.subr.bf16.mxu0 0
  %104 = vmatpush1.bf16.msra.mxu0 %v82
  %105 = vmatprep.subr.bf16.mxu0 0
  %106 = vmatpush1.bf16.msra.mxu0 %v81
  %107 = vmatprep.subr.bf16.mxu0 0
  %108 = vmatpush1.bf16.msra.mxu0 %v80
  %109 = vmatprep.subr.bf16.mxu0 0
  %110 = vmatpush1.bf16.msra.mxu0 %v79
  %111 = vmatprep.subr.bf16.mxu0 0
  %112 = vmatpush2.bf16.msra.mxu0 0
  %113 = vmatprep.subr.bf16.mxu0 0
  %114 = vmatpush2.bf16.msra.mxu0 0
  %115 = vmatprep.subr.bf16.mxu0 0
  %116 = vmatpush2.bf16.msra.mxu0 0
  %117 = vmatprep.subr.bf16.mxu0 0
  %118 = vmatpush2.bf16.msra.mxu0 0
  %119 = vmatprep.subr.bf16.mxu0 0
  %120 = vmatpush2.bf16.msra.mxu0 0
  %121 = vmatprep.subr.bf16.mxu0 0
  %122 = vmatpush2.bf16.msra.mxu0 0
  %123 = vmatprep.subr.bf16.mxu0 0
  %124 = vmatpush2.bf16.msra.mxu0 0
  %125 = vmatprep.subr.bf16.mxu0 0
  %126 = vmatpush2.bf16.msra.mxu0 0
  %127 = vmatprep.mubr.bf16.mxu0 0
  %128 = vmatmul.mubr.bf16.gmra.mxu0 %v45
  %v129 = vpop.f32.mrf.mxu0
  %v130 = vadd.f32 0.0, %v129
  %v131 = vpop.f32.mrf.mxu0
  %v132 = vpop.f32.mrf.mxu0
  %v133 = vadd.f32 0.0, %v132
  %v134 = vpop.f32.mrf.mxu0
  %135 = vdwg.mxu0
  %v136 = vadd.f32 %v21, %v130
  %v137 = vadd.f32 %v22, %v133
  %138 = vst [vmem:[#allocation2] sm:$0xff] %v136
  %139 = vst [vmem:[#allocation2 + $0x8] sm:$0xff] %v137
  // Predicated region
  $region18: #{bert_naive_forward.22} parent=0 // pred_check
    %p140 = pneg %p15
  $region19: #{bert_naive_forward.22} parent=0 // pred_check_branch
    %142 = sbr.rel (%p140) target = $region21
  $region20: #{bert_naive_forward.22} parent=0 // pred_region
    %v143 = vld [vmem:[#allocation2] sm:$0xff]
    %v144 = vld [vmem:[#allocation2 + $0x8] sm:$0xff]
    %v145 = vld [vmem:[%s2] sm:$0x1]
    %v147 = vlaneseq
    %v148 = vshrl.u32 %v147, 7
    %v149 = vsub.s32 0, %v148
    %v150 = vrot.slane %v145, %v149
    %v152 = vadd.f32 %v143, %v150
    %v153 = vadd.f32 %v144, %v150
    %v154 = vpack.c.bf16 %v153, %v152
    %v156 = vunpack.c.l.b16 %v154
    %v157 = vunpack.c.h.b16 %v154
    %v158 = vpack.c.b16 %v156, %v156
    %v159 = vpack.c.b16 %v157, %v157
    %162 = vst [vmem:[%s3] sm:$0xf] %v158
    %163 = vst [vmem:[%s3 + $0x4] sm:$0xf] %v159
  $region21: #{bert_naive_forward.22} parent=0 // pred_fallthru
    _
  // Predicated region
  $region22: #{bert_naive_forward.22} parent=0 // pred_check
    _
  $region23: #{bert_naive_forward.22} parent=0 // pred_check_branch
    %165 = sbr.rel (0) target = $region25
  $region24: #{bert_naive_forward.22} parent=0 // pred_region
    _
  $region25: #{bert_naive_forward.22} parent=0 // pred_fallthru
    _
  // Predicated region
  $region26: #{bert_naive_forward.22} parent=0 // pred_check
    _
  $region27: #{bert_naive_forward.22} parent=0 // pred_check_branch
    %167 = sbr.rel (0) target = $region29
  $region28: #{bert_naive_forward.22} parent=0 // pred_region
    _
  $region29: #{bert_naive_forward.22} parent=0 // pred_fallthru
    _

// kernel: bert_naive_forward.23
$region0: #{bert_naive_forward.23}
  #allocation0 [shape = 'u32[]', space=smem, size = 0x4, offset = 0x4, fixed_abs, tag = 'smem constant byte address 0x4 - core index']
  #allocation1 [shape = 'u32[144,128]{1,0:T(1,128)}', space=vmem, size = 0x12000, scoped, tag = 'internal scratch']
  %s0 = inlined_call_operand.vmem [shape: bf16[2,4,8,8], index: 0, kind: input, shape index: {}]
  %s1 = inlined_call_operand.vmem [shape: bf16[2,4,8,8], index: 1, kind: input, shape index: {}]
  %s2 = inlined_call_operand.vmem [shape: bf16[2,4,8,8], index: 2, kind: input, shape index: {}]
  %s3 = inlined_call_operand.vmem [shape: f32[2,1,8], index: 3, kind: input, shape index: {}]
  %s4 = inlined_call_operand.vmem [shape: bf16[2,4,8,8], index: 4, kind: output, shape index: {}]
  %s5 = sld [smem:[#allocation0]]
  $region49: #{bert_naive_forward.23} parent=0
    _
  %s7 = ssub.s32 1, %s5
  %s8 = scalar_select 0, %s7, %s5
  loop: start=0, step=1, limit=4
  $region2: #{bert_naive_forward.23} parent=0 // loop_pre_header
    _
  $region3: #{bert_naive_forward.23} parent=0 // loop_header
    %s10 = sphi 0, %s14
    %p11 = scmp.ge.s32.totalorder %s10, 4
    %s20 = sphi 0, %s22
    %s23 = sphi 0, %s20
    %s24 = sphi 0, %s23
    %s40 = sphi 0, %s24
    %s46 = sphi 0, %s48
    %s49 = sphi 0, %s46
    %s50 = sphi 0, %s49
    %s66 = sphi 0, %s50
    %s72 = sphi 0, %s74
    %s75 = sphi 0, %s72
    %s76 = sphi 0, %s75
    %s92 = sphi 0, %s76
    %s98 = sphi 0, %s100
    %s101 = sphi 0, %s98
    %s102 = sphi 0, %s101
    %s118 = sphi 0, %s102
    %s124 = sphi 0, %s126
    %s127 = sphi 0, %s124
    %s128 = sphi 0, %s127
    %s144 = sphi 0, %s128
  $region4: #{bert_naive_forward.23} parent=0 // loop_header_branch
    %13 = sbr.rel (%p11) target = $region8
  $region5: #{bert_naive_forward.23} parent=0 // loop_body
    %s15 = ssub.s32 %s10, 1
    %s16 = ssub.s32 %s10, 2
    %s17 = sadd.s32 %s10, 1
    %s18 = ssub.s32 %s10, %s17
    %p19 = scmp.eq.s32.totalorder %s18, 0
    %s21 = sadd.s32 %s20, 1
    %s22 = scalar_select %p19, %s20, %s21
    %p25 = pneg %p19
    %p26 = scmp.eq.s32.totalorder %s10, 1
    %p27 = por %p25, %p26
    %p28 = scmp.ne.s32.totalorder %s20, %s23
    %p29 = scmp.eq.s32.totalorder %s10, 0
    %p30 = por %p28, %p29
    %p31 = scmp.ne.s32.totalorder %s20, %s23
    %p32 = scmp.eq.s32.totalorder %s15, 1
    %p33 = por %p31, %p32
    %p34 = scmp.ne.s32.totalorder %s23, %s24
    %p35 = scmp.eq.s32.totalorder %s15, 0
    %p36 = por %p34, %p35
    %p37 = scmp.ne.s32.totalorder %s23, %s24
    %p38 = scmp.eq.s32.totalorder %s16, 1
    %p39 = por %p37, %p38
    %p41 = scmp.ne.s32.totalorder %s24, %s40
    %p42 = scmp.eq.s32.totalorder %s16, 0
    %p43 = por %p41, %p42
    %s44 = ssub.s32 %s10, %s17
    %p45 = scmp.eq.s32.totalorder %s44, 0
    %s47 = sadd.s32 %s46, 1
    %s48 = scalar_select %p45, %s46, %s47
    %p51 = pneg %p45
    %p52 = scmp.eq.s32.totalorder %s10, 1
    %p53 = por %p51, %p52
    %p54 = scmp.ne.s32.totalorder %s46, %s49
    %p55 = scmp.eq.s32.totalorder %s10, 0
    %p56 = por %p54, %p55
    %p57 = scmp.ne.s32.totalorder %s46, %s49
    %p58 = scmp.eq.s32.totalorder %s15, 1
    %p59 = por %p57, %p58
    %p60 = scmp.ne.s32.totalorder %s49, %s50
    %p61 = scmp.eq.s32.totalorder %s15, 0
    %p62 = por %p60, %p61
    %p63 = scmp.ne.s32.totalorder %s49, %s50
    %p64 = scmp.eq.s32.totalorder %s16, 1
    %p65 = por %p63, %p64
    %p67 = scmp.ne.s32.totalorder %s50, %s66
    %p68 = scmp.eq.s32.totalorder %s16, 0
    %p69 = por %p67, %p68
    %s70 = ssub.s32 %s10, %s17
    %p71 = scmp.eq.s32.totalorder %s70, 0
    %s73 = sadd.s32 %s72, 1
    %s74 = scalar_select %p71, %s72, %s73
    %p77 = pneg %p71
    %p78 = scmp.eq.s32.totalorder %s10, 1
    %p79 = por %p77, %p78
    %p80 = scmp.ne.s32.totalorder %s72, %s75
    %p81 = scmp.eq.s32.totalorder %s10, 0
    %p82 = por %p80, %p81
    %p83 = scmp.ne.s32.totalorder %s72, %s75
    %p84 = scmp.eq.s32.totalorder %s15, 1
    %p85 = por %p83, %p84
    %p86 = scmp.ne.s32.totalorder %s75, %s76
    %p87 = scmp.eq.s32.totalorder %s15, 0
    %p88 = por %p86, %p87
    %p89 = scmp.ne.s32.totalorder %s75, %s76
    %p90 = scmp.eq.s32.totalorder %s16, 1
    %p91 = por %p89, %p90
    %p93 = scmp.ne.s32.totalorder %s76, %s92
    %p94 = scmp.eq.s32.totalorder %s16, 0
    %p95 = por %p93, %p94
    %s96 = ssub.s32 %s10, %s17
    %p97 = scmp.eq.s32.totalorder %s96, 0
    %s99 = sadd.s32 %s98, 1
    %s100 = scalar_select %p97, %s98, %s99
    %p103 = pneg %p97
    %p104 = scmp.eq.s32.totalorder %s10, 1
    %p105 = por %p103, %p104
    %p106 = scmp.ne.s32.totalorder %s98, %s101
    %p107 = scmp.eq.s32.totalorder %s10, 0
    %p108 = por %p106, %p107
    %p109 = scmp.ne.s32.totalorder %s98, %s101
    %p110 = scmp.eq.s32.totalorder %s15, 1
    %p111 = por %p109, %p110
    %p112 = scmp.ne.s32.totalorder %s101, %s102
    %p113 = scmp.eq.s32.totalorder %s15, 0
    %p114 = por %p112, %p113
    %p115 = scmp.ne.s32.totalorder %s101, %s102
    %p116 = scmp.eq.s32.totalorder %s16, 1
    %p117 = por %p115, %p116
    %p119 = scmp.ne.s32.totalorder %s102, %s118
    %p120 = scmp.eq.s32.totalorder %s16, 0
    %p121 = por %p119, %p120
    %s122 = ssub.s32 %s10, %s17
    %p123 = scmp.eq.s32.totalorder %s122, 0
    %s125 = sadd.s32 %s124, 1
    %s126 = scalar_select %p123, %s124, %s125
    %p129 = pneg %p123
    %p130 = scmp.eq.s32.totalorder %s10, 1
    %p131 = por %p129, %p130
    %p132 = scmp.ne.s32.totalorder %s124, %s127
    %p133 = scmp.eq.s32.totalorder %s10, 0
    %p134 = por %p132, %p133
    %p135 = scmp.ne.s32.totalorder %s124, %s127
    %p136 = scmp.eq.s32.totalorder %s15, 1
    %p137 = por %p135, %p136
    %p138 = scmp.ne.s32.totalorder %s127, %s128
    %p139 = scmp.eq.s32.totalorder %s15, 0
    %p140 = por %p138, %p139
    %p141 = scmp.ne.s32.totalorder %s127, %s128
    %p142 = scmp.eq.s32.totalorder %s16, 1
    %p143 = por %p141, %p142
    %p145 = scmp.ne.s32.totalorder %s128, %s144
    %p146 = scmp.eq.s32.totalorder %s16, 0
    %p147 = por %p145, %p146
    %p148 = scmp.le.s32.totalorder 1, %s10
    %p149 = scmp.lt.s32.totalorder %s10, 3
    %p150 = pnand %p148, %p149
    %p151 = pneg %p150
    // Predicated region
    $region9: #{bert_naive_forward.23} parent=5 // pred_check
      _
    $region10: #{bert_naive_forward.23} parent=5 // pred_check_branch
      %153 = sbr.rel (%p150) target = $region12
    $region11: #{bert_naive_forward.23} parent=5 // pred_region
      %s154 = ssub.s32 %s10, 1
    $region12: #{bert_naive_forward.23} parent=5 // pred_fallthru
      _
    %p155 = scmp.lt.s32.totalorder %s10, 2
    // Predicated region
    $region13: #{bert_naive_forward.23} parent=5 // pred_check
      %p156 = pneg %p155
    $region14: #{bert_naive_forward.23} parent=5 // pred_check_branch
      %158 = sbr.rel (%p156) target = $region16
    $region15: #{bert_naive_forward.23} parent=5 // pred_region
      // Predicated region
      $region17: #{bert_naive_forward.23} parent=15 // pred_check
        %p159 = pneg %p30
      $region18: #{bert_naive_forward.23} parent=15 // pred_check_branch
        %161 = sbr.rel (%p159) target = $region20
      $region19: #{bert_naive_forward.23} parent=15 // pred_region
        %p162 = scmp.lt.s32.totalorder %s10, 1
        %s163 = scalar_select %p162, %s10, 1
        %s164 = smul.addr %s163, 4
        %s165 = smul.addr %s164, 4
        %s166 = scalar_lea.vmem %s0, %s165
      $region20: #{bert_naive_forward.23} parent=15 // pred_fallthru
        _
      // Predicated region
      $region21: #{bert_naive_forward.23} parent=15 // pred_check
        %p167 = pneg %p56
      $region22: #{bert_naive_forward.23} parent=15 // pred_check_branch
        %169 = sbr.rel (%p167) target = $region24
      $region23: #{bert_naive_forward.23} parent=15 // pred_region
        %p170 = scmp.lt.s32.totalorder %s10, 1
        %s171 = scalar_select %p170, %s10, 1
        %s172 = smul.addr %s171, 4
        %s173 = smul.addr %s172, 4
        %s174 = scalar_lea.vmem %s1, %s173
      $region24: #{bert_naive_forward.23} parent=15 // pred_fallthru
        _
      // Predicated region
      $region25: #{bert_naive_forward.23} parent=15 // pred_check
        %p175 = pneg %p82
      $region26: #{bert_naive_forward.23} parent=15 // pred_check_branch
        %177 = sbr.rel (%p175) target = $region28
      $region27: #{bert_naive_forward.23} parent=15 // pred_region
        %p178 = scmp.lt.s32.totalorder %s10, 1
        %s179 = scalar_select %p178, %s10, 1
        %s180 = smul.addr %s179, 4
        %s181 = smul.addr %s180, 4
        %s182 = scalar_lea.vmem %s2, %s181
      $region28: #{bert_naive_forward.23} parent=15 // pred_fallthru
        _
      // Predicated region
      $region29: #{bert_naive_forward.23} parent=15 // pred_check
        %p183 = pneg %p108
      $region30: #{bert_naive_forward.23} parent=15 // pred_check_branch
        %185 = sbr.rel (%p183) target = $region32
      $region31: #{bert_naive_forward.23} parent=15 // pred_region
        %p186 = scmp.lt.s32.totalorder %s10, 1
        %s187 = scalar_select %p186, %s10, 1
        %s188 = scalar_lea.vmem %s3, %s187
      $region32: #{bert_naive_forward.23} parent=15 // pred_fallthru
        _
    $region16: #{bert_naive_forward.23} parent=5 // pred_fallthru
      _
    %p189 = scmp.le.s32.totalorder 1, %s10
    %p190 = scmp.lt.s32.totalorder %s10, 3
    %p191 = pnand %p189, %p190
    %p192 = pneg %p191
    // Predicated region
    $region33: #{bert_naive_forward.23} parent=5 // pred_check
      _
    $region34: #{bert_naive_forward.23} parent=5 // pred_check_branch
      %194 = sbr.rel (%p191) target = $region36
    $region35: #{bert_naive_forward.23} parent=5 // pred_region
      %s195 = ssub.s32 %s10, 1
      %p196 = scmp.lt.s32.totalorder %s15, 1
      %s197 = scalar_select %p196, %s15, 1
      %s198 = smul.addr %s197, 4
      %s199 = smul.addr %s198, 4
      %s200 = scalar_lea.vmem %s0, %s199
      %p201 = pneg %p36
      %p202 = pneg %p33
      %p203 = scmp.lt.s32.totalorder %s15, 1
      %s204 = scalar_select %p203, %s15, 1
      %s205 = smul.addr %s204, 4
      %s206 = smul.addr %s205, 4
      %s207 = scalar_lea.vmem %s1, %s206
      %p208 = pneg %p62
      %p209 = pneg %p59
      %p210 = scmp.lt.s32.totalorder %s15, 1
      %s211 = scalar_select %p210, %s15, 1
      %s212 = smul.addr %s211, 4
      %s213 = smul.addr %s212, 4
      %s214 = scalar_lea.vmem %s2, %s213
      %p215 = pneg %p88
      %p216 = pneg %p85
      %p217 = scmp.lt.s32.totalorder %s15, 1
      %s218 = scalar_select %p217, %s15, 1
      %s219 = scalar_lea.vmem %s3, %s218
      %p220 = pneg %p114
      %p221 = pneg %p111
      %p222 = pneg %p140
      %p223 = pneg %p137
      %p224 = scmp.lt.s32.totalorder %s15, 1
      %s225 = scalar_select %p224, %s15, 1
      %s226 = smul.addr %s225, 4
      %s227 = smul.addr %s226, 4
      %s228 = scalar_lea.vmem %s4, %s227
      %p229 = scmp.lt.s32.totalorder %s15, 1
      %s230 = scalar_select %p229, %s15, 1
      %s231 = smul.addr %s230, 4
      %s232 = smul.addr %s231, 4
      %s233 = scalar_lea.vmem %s0, %s232
      %p234 = scmp.lt.s32.totalorder %s15, 1
      %s235 = scalar_select %p234, %s15, 1
      %s236 = smul.addr %s235, 4
      %s237 = smul.addr %s236, 4
      %s238 = scalar_lea.vmem %s1, %s237
      %p239 = scmp.lt.s32.totalorder %s15, 1
      %s240 = scalar_select %p239, %s15, 1
      %s241 = smul.addr %s240, 4
      %s242 = smul.addr %s241, 4
      %s243 = scalar_lea.vmem %s2, %s242
      %p244 = scmp.lt.s32.totalorder %s15, 1
      %s245 = scalar_select %p244, %s15, 1
      %s246 = scalar_lea.vmem %s3, %s245
      %p247 = scmp.lt.s32.totalorder %s15, 1
      %s248 = scalar_select %p247, %s15, 1
      %s249 = smul.addr %s248, 4
      %s250 = smul.addr %s249, 4
      %s251 = scalar_lea.vmem %s4, %s250
      %v253 = vld [vmem:[%s233] sm:$0xf]
      %v254 = vld [vmem:[%s233 + $0x4] sm:$0xf]
      %v255 = vld [vmem:[%s233 + $0x8] sm:$0xf]
      %v256 = vld [vmem:[%s233 + $0xc] sm:$0xf]
      %v257 = vld [vmem:[%s238] sm:$0xf]
      %v258 = vld [vmem:[%s238 + $0x4] sm:$0xf]
      %v259 = vld [vmem:[%s238 + $0x8] sm:$0xf]
      %v260 = vld [vmem:[%s238 + $0xc] sm:$0xf]
      %v261 = vld [vmem:[%s243] sm:$0xf]
      %v262 = vld [vmem:[%s243 + $0x4] sm:$0xf]
      %v263 = vld [vmem:[%s243 + $0x8] sm:$0xf]
      %v264 = vld [vmem:[%s243 + $0xc] sm:$0xf]
      %vm265 = vcmask 64512
      %v267 = vsel %vm265, %v253, 0
      %v270 = vsel %vm265, %v257, 0
      %272 = vmatprep.subr.bf16.mxu0 0
      %273 = vmatpush1.bf16.xpose.msra.mxu0 0
      %274 = vmatprep.subr.bf16.mxu0 0
      %275 = vmatpush1.bf16.xpose.msra.mxu0 0
      %276 = vmatprep.subr.bf16.mxu0 0
      %277 = vmatpush1.bf16.xpose.msra.mxu0 0
      %278 = vmatprep.subr.bf16.mxu0 0
      %279 = vmatpush1.bf16.xpose.msra.mxu0 0
      %280 = vmatprep.subr.bf16.mxu0 0
      %281 = vmatpush1.bf16.xpose.msra.mxu0 0
      %282 = vmatprep.subr.bf16.mxu0 0
      %283 = vmatpush1.bf16.xpose.msra.mxu0 0
      %284 = vmatprep.subr.bf16.mxu0 0
      %285 = vmatpush1.bf16.xpose.msra.mxu0 0
      %286 = vmatprep.subr.bf16.mxu0 0
      %287 = vmatpush1.bf16.xpose.msra.mxu0 %v270
      %288 = vmatprep.subr.bf16.mxu0 0
      %289 = vmatpush2.bf16.xpose.msra.mxu0 0
      %290 = vmatprep.subr.bf16.mxu0 0
      %291 = vmatpush2.bf16.xpose.msra.mxu0 0
      %292 = vmatprep.subr.bf16.mxu0 0
      %293 = vmatpush2.bf16.xpose.msra.mxu0 0
      %294 = vmatprep.subr.bf16.mxu0 0
      %295 = vmatpush2.bf16.xpose.msra.mxu0 0
      %296 = vmatprep.subr.bf16.mxu0 0
      %297 = vmatpush2.bf16.xpose.msra.mxu0 0
      %298 = vmatprep.subr.bf16.mxu0 0
      %299 = vmatpush2.bf16.xpose.msra.mxu0 0
      %300 = vmatprep.subr.bf16.mxu0 0
      %301 = vmatpush2.bf16.xpose.msra.mxu0 0
      %302 = vmatprep.subr.bf16.mxu0 0
      %303 = vmatpush2.bf16.xpose.msra.mxu0 0
      %304 = vmatprep.mubr.bf16.mxu0 0
      %305 = vmatmul.mubr.bf16.gmra.mxu0 %v267
      %v306 = vpop.f32.mrf.mxu0
      %v307 = vadd.f32 0.0, %v306
      %v308 = vpop.f32.mrf.mxu0
      %v309 = vpop.f32.mrf.mxu0
      %v310 = vpop.f32.mrf.mxu0
      %311 = vdwg.mxu0
      %v313 = vsel %vm265, %v254, 0
      %v316 = vsel %vm265, %v258, 0
      %318 = vmatprep.subr.bf16.mxu0 0
      %319 = vmatpush1.bf16.xpose.msra.mxu0 0
      %320 = vmatprep.subr.bf16.mxu0 0
      %321 = vmatpush1.bf16.xpose.msra.mxu0 0
      %322 = vmatprep.subr.bf16.mxu0 0
      %323 = vmatpush1.bf16.xpose.msra.mxu0 0
      %324 = vmatprep.subr.bf16.mxu0 0
      %325 = vmatpush1.bf16.xpose.msra.mxu0 0
      %326 = vmatprep.subr.bf16.mxu0 0
      %327 = vmatpush1.bf16.xpose.msra.mxu0 0
      %328 = vmatprep.subr.bf16.mxu0 0
      %329 = vmatpush1.bf16.xpose.msra.mxu0 0
      %330 = vmatprep.subr.bf16.mxu0 0
      %331 = vmatpush1.bf16.xpose.msra.mxu0 0
      %332 = vmatprep.subr.bf16.mxu0 0
      %333 = vmatpush1.bf16.xpose.msra.mxu0 %v316
      %334 = vmatprep.subr.bf16.mxu0 0
      %335 = vmatpush2.bf16.xpose.msra.mxu0 0
      %336 = vmatprep.subr.bf16.mxu0 0
      %337 = vmatpush2.bf16.xpose.msra.mxu0 0
      %338 = vmatprep.subr.bf16.mxu0 0
      %339 = vmatpush2.bf16.xpose.msra.mxu0 0
      %340 = vmatprep.subr.bf16.mxu0 0
      %341 = vmatpush2.bf16.xpose.msra.mxu0 0
      %342 = vmatprep.subr.bf16.mxu0 0
      %343 = vmatpush2.bf16.xpose.msra.mxu0 0
      %344 = vmatprep.subr.bf16.mxu0 0
      %345 = vmatpush2.bf16.xpose.msra.mxu0 0
      %346 = vmatprep.subr.bf16.mxu0 0
      %347 = vmatpush2.bf16.xpose.msra.mxu0 0
      %348 = vmatprep.subr.bf16.mxu0 0
      %349 = vmatpush2.bf16.xpose.msra.mxu0 0
      %350 = vmatprep.mubr.bf16.mxu0 0
      %351 = vmatmul.mubr.bf16.gmra.mxu0 %v313
      %v352 = vpop.f32.mrf.mxu0
      %v353 = vadd.f32 0.0, %v352
      %v354 = vpop.f32.mrf.mxu0
      %v355 = vpop.f32.mrf.mxu0
      %v356 = vpop.f32.mrf.mxu0
      %357 = vdwg.mxu0
      %v359 = vsel %vm265, %v255, 0
      %v362 = vsel %vm265, %v259, 0
      %364 = vmatprep.subr.bf16.mxu0 0
      %365 = vmatpush1.bf16.xpose.msra.mxu0 0
      %366 = vmatprep.subr.bf16.mxu0 0
      %367 = vmatpush1.bf16.xpose.msra.mxu0 0
      %368 = vmatprep.subr.bf16.mxu0 0
      %369 = vmatpush1.bf16.xpose.msra.mxu0 0
      %370 = vmatprep.subr.bf16.mxu0 0
      %371 = vmatpush1.bf16.xpose.msra.mxu0 0
      %372 = vmatprep.subr.bf16.mxu0 0
      %373 = vmatpush1.bf16.xpose.msra.mxu0 0
      %374 = vmatprep.subr.bf16.mxu0 0
      %375 = vmatpush1.bf16.xpose.msra.mxu0 0
      %376 = vmatprep.subr.bf16.mxu0 0
      %377 = vmatpush1.bf16.xpose.msra.mxu0 0
      %378 = vmatprep.subr.bf16.mxu0 0
      %379 = vmatpush1.bf16.xpose.msra.mxu0 %v362
      %380 = vmatprep.subr.bf16.mxu0 0
      %381 = vmatpush2.bf16.xpose.msra.mxu0 0
      %382 = vmatprep.subr.bf16.mxu0 0
      %383 = vmatpush2.bf16.xpose.msra.mxu0 0
      %384 = vmatprep.subr.bf16.mxu0 0
      %385 = vmatpush2.bf16.xpose.msra.mxu0 0
      %386 = vmatprep.subr.bf16.mxu0 0
      %387 = vmatpush2.bf16.xpose.msra.mxu0 0
      %388 = vmatprep.subr.bf16.mxu0 0
      %389 = vmatpush2.bf16.xpose.msra.mxu0 0
      %390 = vmatprep.subr.bf16.mxu0 0
      %391 = vmatpush2.bf16.xpose.msra.mxu0 0
      %392 = vmatprep.subr.bf16.mxu0 0
      %393 = vmatpush2.bf16.xpose.msra.mxu0 0
      %394 = vmatprep.subr.bf16.mxu0 0
      %395 = vmatpush2.bf16.xpose.msra.mxu0 0
      %396 = vmatprep.mubr.bf16.mxu0 0
      %397 = vmatmul.mubr.bf16.gmra.mxu0 %v359
      %v398 = vpop.f32.mrf.mxu0
      %v399 = vadd.f32 0.0, %v398
      %v400 = vpop.f32.mrf.mxu0
      %v401 = vpop.f32.mrf.mxu0
      %v402 = vpop.f32.mrf.mxu0
      %403 = vdwg.mxu0
      %v405 = vsel %vm265, %v256, 0
      %v408 = vsel %vm265, %v260, 0
      %410 = vmatprep.subr.bf16.mxu0 0
      %411 = vmatpush1.bf16.xpose.msra.mxu0 0
      %412 = vmatprep.subr.bf16.mxu0 0
      %413 = vmatpush1.bf16.xpose.msra.mxu0 0
      %414 = vmatprep.subr.bf16.mxu0 0
      %415 = vmatpush1.bf16.xpose.msra.mxu0 0
      %416 = vmatprep.subr.bf16.mxu0 0
      %417 = vmatpush1.bf16.xpose.msra.mxu0 0
      %418 = vmatprep.subr.bf16.mxu0 0
      %419 = vmatpush1.bf16.xpose.msra.mxu0 0
      %420 = vmatprep.subr.bf16.mxu0 0
      %421 = vmatpush1.bf16.xpose.msra.mxu0 0
      %422 = vmatprep.subr.bf16.mxu0 0
      %423 = vmatpush1.bf16.xpose.msra.mxu0 0
      %424 = vmatprep.subr.bf16.mxu0 0
      %425 = vmatpush1.bf16.xpose.msra.mxu0 %v408
      %426 = vmatprep.subr.bf16.mxu0 0
      %427 = vmatpush2.bf16.xpose.msra.mxu0 0
      %428 = vmatprep.subr.bf16.mxu0 0
      %429 = vmatpush2.bf16.xpose.msra.mxu0 0
      %430 = vmatprep.subr.bf16.mxu0 0
      %431 = vmatpush2.bf16.xpose.msra.mxu0 0
      %432 = vmatprep.subr.bf16.mxu0 0
      %433 = vmatpush2.bf16.xpose.msra.mxu0 0
      %434 = vmatprep.subr.bf16.mxu0 0
      %435 = vmatpush2.bf16.xpose.msra.mxu0 0
      %436 = vmatprep.subr.bf16.mxu0 0
      %437 = vmatpush2.bf16.xpose.msra.mxu0 0
      %438 = vmatprep.subr.bf16.mxu0 0
      %439 = vmatpush2.bf16.xpose.msra.mxu0 0
      %440 = vmatprep.subr.bf16.mxu0 0
      %441 = vmatpush2.bf16.xpose.msra.mxu0 0
      %442 = vmatprep.mubr.bf16.mxu0 0
      %443 = vmatmul.mubr.bf16.gmra.mxu0 %v405
      %v444 = vpop.f32.mrf.mxu0
      %v445 = vadd.f32 0.0, %v444
      %v446 = vpop.f32.mrf.mxu0
      %v447 = vpop.f32.mrf.mxu0
      %v448 = vpop.f32.mrf.mxu0
      %449 = vdwg.mxu0
      %v450 = vmul.f32 %v307, 0.35355338
      %v451 = vmul.f32 %v353, 0.35355338
      %v452 = vmul.f32 %v399, 0.35355338
      %v453 = vmul.f32 %v445, 0.35355338
      %v454 = vld [vmem:[%s246] sm:$0x1]
      %v456 = vlaneseq
      %v457 = vshrl.u32 %v456, 7
      %v458 = vsub.s32 0, %v457
      %v459 = vrot.slane %v454, %v458
      %v461 = vadd.f32 %v450, %v459
      %v462 = vadd.f32 %v451, %v459
      %v463 = vadd.f32 %v452, %v459
      %v464 = vadd.f32 %v453, %v459
      %v465 = vsel %vm265, %v461, -inf
      %466 = vmax.xlane.f32.xlu0 %v465
      %v467 = vpop.xlane.xlu0 %466
      %v468 = vsel %vm265, %v462, -inf
      %469 = vmax.xlane.f32.xlu0 %v468
      %v470 = vpop.xlane.xlu0 %469
      %v471 = vsel %vm265, %v463, -inf
      %472 = vmax.xlane.f32.xlu0 %v471
      %v473 = vpop.xlane.xlu0 %472
      %v474 = vsel %vm265, %v464, -inf
      %475 = vmax.xlane.f32.xlu0 %v474
      %v476 = vpop.xlane.xlu0 %475
      %v477 = vsub.f32 %v461, %v467
      %v478 = vsub.f32 %v462, %v470
      %v479 = vsub.f32 %v463, %v473
      %v480 = vsub.f32 %v464, %v476
      %v481 = vmul.f32 %v477, 1.442695
      %v482 = vpow.pop %v481
      %v483 = vmul.f32 %v478, 1.442695
      %v484 = vpow.pop %v483
      %v485 = vmul.f32 %v479, 1.442695
      %v486 = vpow.pop %v485
      %v487 = vmul.f32 %v480, 1.442695
      %v488 = vpow.pop %v487
      %v489 = vsel %vm265, %v482, 0.0
      %490 = vadd.xlane.f32.xlu0 %v489
      %v491 = vpop.xlane.xlu0 %490
      %v492 = vsel %vm265, %v484, 0.0
      %493 = vadd.xlane.f32.xlu0 %v492
      %v494 = vpop.xlane.xlu0 %493
      %v495 = vsel %vm265, %v486, 0.0
      %496 = vadd.xlane.f32.xlu0 %v495
      %v497 = vpop.xlane.xlu0 %496
      %v498 = vsel %vm265, %v488, 0.0
      %499 = vadd.xlane.f32.xlu0 %v498
      %v500 = vpop.xlane.xlu0 %499
      %v501 = vrcp.pop %v491
      %v502 = vmul.f32 %v482, %v501
      %v503 = vrcp.pop %v494
      %v504 = vmul.f32 %v484, %v503
      %v505 = vrcp.pop %v497
      %v506 = vmul.f32 %v486, %v505
      %v507 = vrcp.pop %v500
      %v508 = vmul.f32 %v488, %v507
      %v509 = vpack.c.bf16 %v502, %v502
      %v510 = vpack.c.bf16 %v504, %v504
      %v511 = vpack.c.bf16 %v506, %v506
      %v512 = vpack.c.bf16 %v508, %v508
      %v514 = vsel %vm265, %v509, 0
      %vm516 = vcmask 1043456
      %v518 = vsel %vm516, %v261, 0
      %520 = vmatprep.subr.bf16.mxu0 0
      %521 = vmatpush1.bf16.msra.mxu0 0
      %522 = vmatprep.subr.bf16.mxu0 0
      %523 = vmatpush1.bf16.msra.mxu0 0
      %524 = vmatprep.subr.bf16.mxu0 0
      %525 = vmatpush1.bf16.msra.mxu0 0
      %526 = vmatprep.subr.bf16.mxu0 0
      %527 = vmatpush1.bf16.msra.mxu0 0
      %528 = vmatprep.subr.bf16.mxu0 0
      %529 = vmatpush1.bf16.msra.mxu0 0
      %530 = vmatprep.subr.bf16.mxu0 0
      %531 = vmatpush1.bf16.msra.mxu0 0
      %532 = vmatprep.subr.bf16.mxu0 0
      %533 = vmatpush1.bf16.msra.mxu0 0
      %534 = vmatprep.subr.bf16.mxu0 0
      %535 = vmatpush1.bf16.msra.mxu0 %v518
      %536 = vmatprep.subr.bf16.mxu0 0
      %537 = vmatpush2.bf16.msra.mxu0 0
      %538 = vmatprep.subr.bf16.mxu0 0
      %539 = vmatpush2.bf16.msra.mxu0 0
      %540 = vmatprep.subr.bf16.mxu0 0
      %541 = vmatpush2.bf16.msra.mxu0 0
      %542 = vmatprep.subr.bf16.mxu0 0
      %543 = vmatpush2.bf16.msra.mxu0 0
      %544 = vmatprep.subr.bf16.mxu0 0
      %545 = vmatpush2.bf16.msra.mxu0 0
      %546 = vmatprep.subr.bf16.mxu0 0
      %547 = vmatpush2.bf16.msra.mxu0 0
      %548 = vmatprep.subr.bf16.mxu0 0
      %549 = vmatpush2.bf16.msra.mxu0 0
      %550 = vmatprep.subr.bf16.mxu0 0
      %551 = vmatpush2.bf16.msra.mxu0 0
      %552 = vmatprep.mubr.bf16.mxu0 0
      %553 = vmatmul.mubr.bf16.gmra.mxu0 %v514
      %v554 = vpop.f32.mrf.mxu0
      %v555 = vadd.f32 0.0, %v554
      %v556 = vpop.f32.mrf.mxu0
      %v557 = vpop.f32.mrf.mxu0
      %v558 = vpop.f32.mrf.mxu0
      %559 = vdwg.mxu0
      %v561 = vsel %vm265, %v510, 0
      %v564 = vsel %vm516, %v262, 0
      %566 = vmatprep.subr.bf16.mxu0 0
      %567 = vmatpush1.bf16.msra.mxu0 0
      %568 = vmatprep.subr.bf16.mxu0 0
      %569 = vmatpush1.bf16.msra.mxu0 0
      %570 = vmatprep.subr.bf16.mxu0 0
      %571 = vmatpush1.bf16.msra.mxu0 0
      %572 = vmatprep.subr.bf16.mxu0 0
      %573 = vmatpush1.bf16.msra.mxu0 0
      %574 = vmatprep.subr.bf16.mxu0 0
      %575 = vmatpush1.bf16.msra.mxu0 0
      %576 = vmatprep.subr.bf16.mxu0 0
      %577 = vmatpush1.bf16.msra.mxu0 0
      %578 = vmatprep.subr.bf16.mxu0 0
      %579 = vmatpush1.bf16.msra.mxu0 0
      %580 = vmatprep.subr.bf16.mxu0 0
      %581 = vmatpush1.bf16.msra.mxu0 %v564
      %582 = vmatprep.subr.bf16.mxu0 0
      %583 = vmatpush2.bf16.msra.mxu0 0
      %584 = vmatprep.subr.bf16.mxu0 0
      %585 = vmatpush2.bf16.msra.mxu0 0
      %586 = vmatprep.subr.bf16.mxu0 0
      %587 = vmatpush2.bf16.msra.mxu0 0
      %588 = vmatprep.subr.bf16.mxu0 0
      %589 = vmatpush2.bf16.msra.mxu0 0
      %590 = vmatprep.subr.bf16.mxu0 0
      %591 = vmatpush2.bf16.msra.mxu0 0
      %592 = vmatprep.subr.bf16.mxu0 0
      %593 = vmatpush2.bf16.msra.mxu0 0
      %594 = vmatprep.subr.bf16.mxu0 0
      %595 = vmatpush2.bf16.msra.mxu0 0
      %596 = vmatprep.subr.bf16.mxu0 0
      %597 = vmatpush2.bf16.msra.mxu0 0
      %598 = vmatprep.mubr.bf16.mxu0 0
      %599 = vmatmul.mubr.bf16.gmra.mxu0 %v561
      %v600 = vpop.f32.mrf.mxu0
      %v601 = vadd.f32 0.0, %v600
      %v602 = vpop.f32.mrf.mxu0
      %v603 = vpop.f32.mrf.mxu0
      %v604 = vpop.f32.mrf.mxu0
      %605 = vdwg.mxu0
      %v607 = vsel %vm265, %v511, 0
      %v610 = vsel %vm516, %v263, 0
      %612 = vmatprep.subr.bf16.mxu0 0
      %613 = vmatpush1.bf16.msra.mxu0 0
      %614 = vmatprep.subr.bf16.mxu0 0
      %615 = vmatpush1.bf16.msra.mxu0 0
      %616 = vmatprep.subr.bf16.mxu0 0
      %617 = vmatpush1.bf16.msra.mxu0 0
      %618 = vmatprep.subr.bf16.mxu0 0
      %619 = vmatpush1.bf16.msra.mxu0 0
      %620 = vmatprep.subr.bf16.mxu0 0
      %621 = vmatpush1.bf16.msra.mxu0 0
      %622 = vmatprep.subr.bf16.mxu0 0
      %623 = vmatpush1.bf16.msra.mxu0 0
      %624 = vmatprep.subr.bf16.mxu0 0
      %625 = vmatpush1.bf16.msra.mxu0 0
      %626 = vmatprep.subr.bf16.mxu0 0
      %627 = vmatpush1.bf16.msra.mxu0 %v610
      %628 = vmatprep.subr.bf16.mxu0 0
      %629 = vmatpush2.bf16.msra.mxu0 0
      %630 = vmatprep.subr.bf16.mxu0 0
      %631 = vmatpush2.bf16.msra.mxu0 0
      %632 = vmatprep.subr.bf16.mxu0 0
      %633 = vmatpush2.bf16.msra.mxu0 0
      %634 = vmatprep.subr.bf16.mxu0 0
      %635 = vmatpush2.bf16.msra.mxu0 0
      %636 = vmatprep.subr.bf16.mxu0 0
      %637 = vmatpush2.bf16.msra.mxu0 0
      %638 = vmatprep.subr.bf16.mxu0 0
      %639 = vmatpush2.bf16.msra.mxu0 0
      %640 = vmatprep.subr.bf16.mxu0 0
      %641 = vmatpush2.bf16.msra.mxu0 0
      %642 = vmatprep.subr.bf16.mxu0 0
      %643 = vmatpush2.bf16.msra.mxu0 0
      %644 = vmatprep.mubr.bf16.mxu0 0
      %645 = vmatmul.mubr.bf16.gmra.mxu0 %v607
      %v646 = vpop.f32.mrf.mxu0
      %v647 = vadd.f32 0.0, %v646
      %v648 = vpop.f32.mrf.mxu0
      %v649 = vpop.f32.mrf.mxu0
      %v650 = vpop.f32.mrf.mxu0
      %651 = vdwg.mxu0
      %v653 = vsel %vm265, %v512, 0
      %v656 = vsel %vm516, %v264, 0
      %658 = vmatprep.subr.bf16.mxu0 0
      %659 = vmatpush1.bf16.msra.mxu0 0
      %660 = vmatprep.subr.bf16.mxu0 0
      %661 = vmatpush1.bf16.msra.mxu0 0
      %662 = vmatprep.subr.bf16.mxu0 0
      %663 = vmatpush1.bf16.msra.mxu0 0
      %664 = vmatprep.subr.bf16.mxu0 0
      %665 = vmatpush1.bf16.msra.mxu0 0
      %666 = vmatprep.subr.bf16.mxu0 0
      %667 = vmatpush1.bf16.msra.mxu0 0
      %668 = vmatprep.subr.bf16.mxu0 0
      %669 = vmatpush1.bf16.msra.mxu0 0
      %670 = vmatprep.subr.bf16.mxu0 0
      %671 = vmatpush1.bf16.msra.mxu0 0
      %672 = vmatprep.subr.bf16.mxu0 0
      %673 = vmatpush1.bf16.msra.mxu0 %v656
      %674 = vmatprep.subr.bf16.mxu0 0
      %675 = vmatpush2.bf16.msra.mxu0 0
      %676 = vmatprep.subr.bf16.mxu0 0
      %677 = vmatpush2.bf16.msra.mxu0 0
      %678 = vmatprep.subr.bf16.mxu0 0
      %679 = vmatpush2.bf16.msra.mxu0 0
      %680 = vmatprep.subr.bf16.mxu0 0
      %681 = vmatpush2.bf16.msra.mxu0 0
      %682 = vmatprep.subr.bf16.mxu0 0
      %683 = vmatpush2.bf16.msra.mxu0 0
      %684 = vmatprep.subr.bf16.mxu0 0
      %685 = vmatpush2.bf16.msra.mxu0 0
      %686 = vmatprep.subr.bf16.mxu0 0
      %687 = vmatpush2.bf16.msra.mxu0 0
      %688 = vmatprep.subr.bf16.mxu0 0
      %689 = vmatpush2.bf16.msra.mxu0 0
      %690 = vmatprep.mubr.bf16.mxu0 0
      %691 = vmatmul.mubr.bf16.gmra.mxu0 %v653
      %v692 = vpop.f32.mrf.mxu0
      %v693 = vadd.f32 0.0, %v692
      %v694 = vpop.f32.mrf.mxu0
      %v695 = vpop.f32.mrf.mxu0
      %v696 = vpop.f32.mrf.mxu0
      %697 = vdwg.mxu0
      %v698 = vpack.c.bf16 %v555, %v555
      %v699 = vpack.c.bf16 %v601, %v601
      %v700 = vpack.c.bf16 %v647, %v647
      %v701 = vpack.c.bf16 %v693, %v693
      %vm702 = vcmask 60416
      %703 = vst.msk [vmem:[%s251] sm:$0xf] %vm702, %v698
      %704 = vst.msk [vmem:[%s251 + $0x4] sm:$0xf] %vm702, %v699
      %705 = vst.msk [vmem:[%s251 + $0x8] sm:$0xf] %vm702, %v700
      %706 = vst.msk [vmem:[%s251 + $0xc] sm:$0xf] %vm702, %v701
      %p707 = scmp.lt.s32.totalorder %s15, 1
      %s708 = scalar_select %p707, %s15, 1
      %s709 = smul.addr %s708, 4
      %s710 = smul.addr %s709, 4
      %s711 = scalar_lea.vmem %s4, %s710
      // Predicated region
      $region37: #{bert_naive_forward.23} parent=35 // pred_check
        %p712 = pneg %p137
      $region38: #{bert_naive_forward.23} parent=35 // pred_check_branch
        %714 = sbr.rel (%p712) target = $region40
      $region39: #{bert_naive_forward.23} parent=35 // pred_region
        _
      $region40: #{bert_naive_forward.23} parent=35 // pred_fallthru
        _
    $region36: #{bert_naive_forward.23} parent=5 // pred_fallthru
      _
    %p715 = scmp.le.s32.totalorder 2, %s10
    // Predicated region
    $region41: #{bert_naive_forward.23} parent=5 // pred_check
      %p716 = pneg %p715
    $region42: #{bert_naive_forward.23} parent=5 // pred_check_branch
      %718 = sbr.rel (%p716) target = $region44
    $region43: #{bert_naive_forward.23} parent=5 // pred_region
      %s719 = ssub.s32 %s10, 2
      // Predicated region
      $region45: #{bert_naive_forward.23} parent=43 // pred_check
        %p720 = pneg %p143
      $region46: #{bert_naive_forward.23} parent=43 // pred_check_branch
        %722 = sbr.rel (%p720) target = $region48
      $region47: #{bert_naive_forward.23} parent=43 // pred_region
        %p723 = scmp.lt.s32.totalorder %s16, 1
        %s724 = scalar_select %p723, %s16, 1
        %s725 = smul.addr %s724, 4
        %s726 = smul.addr %s725, 4
        %s727 = scalar_lea.vmem %s4, %s726
      $region48: #{bert_naive_forward.23} parent=43 // pred_fallthru
        _
    $region44: #{bert_naive_forward.23} parent=5 // pred_fallthru
      _
  $region6: #{bert_naive_forward.23} parent=0 // loop_footer
    %s14 = sadd.s32 1, %s10
  $region7: #{bert_naive_forward.23} parent=0 // loop_footer_branch
    %9 = sbr.rel target = $region3
  $region8: #{bert_naive_forward.23} parent=0 // loop_exit
    _

// kernel: bert_naive_forward.25
$region0: #{bert_naive_forward.25}
  #allocation0 [shape = 'u32[]', space=smem, size = 0x4, offset = 0x4, fixed_abs, tag = 'smem constant byte address 0x4 - core index']
  #allocation1 [shape = 'u32[144,128]{1,0:T(1,128)}', space=vmem, size = 0x12000, scoped, tag = 'internal scratch']
  %s0 = inlined_call_operand.vmem [shape: bf16[16,32], index: 0, kind: input, shape index: {}]
  %s1 = inlined_call_operand.vmem [shape: bf16[16,32], index: 1, kind: input, shape index: {}]
  %s2 = inlined_call_operand.vmem [shape: f32[1,32], index: 2, kind: input, shape index: {}]
  %s3 = inlined_call_operand.vmem [shape: f32[1,32], index: 3, kind: input, shape index: {}]
  %s4 = inlined_call_operand.vmem [shape: bf16[16,32], index: 4, kind: output, shape index: {}]
  %s5 = sld [smem:[#allocation0]]
  $region26: #{bert_naive_forward.25} parent=0
    _
  %s7 = ssub.s32 1, %s5
  %s8 = scalar_select 0, %s7, %s5
  // Predicated region
  $region2: #{bert_naive_forward.25} parent=0 // pred_check
    _
  $region3: #{bert_naive_forward.25} parent=0 // pred_check_branch
    %10 = sbr.rel (0) target = $region5
  $region4: #{bert_naive_forward.25} parent=0 // pred_region
    _
  $region5: #{bert_naive_forward.25} parent=0 // pred_fallthru
    _
  // Predicated region
  $region6: #{bert_naive_forward.25} parent=0 // pred_check
    _
  $region7: #{bert_naive_forward.25} parent=0 // pred_check_branch
    %12 = sbr.rel (0) target = $region9
  $region8: #{bert_naive_forward.25} parent=0 // pred_region
    _
  $region9: #{bert_naive_forward.25} parent=0 // pred_fallthru
    _
  // Predicated region
  $region10: #{bert_naive_forward.25} parent=0 // pred_check
    _
  $region11: #{bert_naive_forward.25} parent=0 // pred_check_branch
    %14 = sbr.rel (0) target = $region13
  $region12: #{bert_naive_forward.25} parent=0 // pred_region
    _
  $region13: #{bert_naive_forward.25} parent=0 // pred_fallthru
    _
  // Predicated region
  $region14: #{bert_naive_forward.25} parent=0 // pred_check
    _
  $region15: #{bert_naive_forward.25} parent=0 // pred_check_branch
    %16 = sbr.rel (0) target = $region17
  $region16: #{bert_naive_forward.25} parent=0 // pred_region
    _
  $region17: #{bert_naive_forward.25} parent=0 // pred_fallthru
    _
  %v17 = vld [vmem:[%s0] sm:$0xf]
  %v18 = vld [vmem:[%s0 + $0x4] sm:$0xf]
  %v19 = vunpack.c.l.bf16 %v17
  %v20 = vunpack.c.l.bf16 %v18
  %v21 = vld [vmem:[%s1] sm:$0xf]
  %v22 = vld [vmem:[%s1 + $0x4] sm:$0xf]
  %v23 = vunpack.c.l.bf16 %v21
  %v24 = vunpack.c.l.bf16 %v22
  %v25 = vadd.f32 %v19, %v23
  %v26 = vadd.f32 %v20, %v24
  %vm27 = vcmask 261120
  %v28 = vsel %vm27, %v25, 0.0
  %29 = vadd.xlane.f32.xlu0 %v28
  %v30 = vpop.xlane.xlu0 %29
  %v31 = vsel %vm27, %v26, 0.0
  %32 = vadd.xlane.f32.xlu0 %v31
  %v33 = vpop.xlane.xlu0 %32
  %v34 = vrcp.pop 32.0
  %v35 = vmul.f32 %v30, %v34
  %v36 = vmul.f32 %v33, %v34
  %v37 = vsub.f32 %v25, %v35
  %v38 = vsub.f32 %v26, %v36
  %v39 = vmul.f32 %v37, %v37
  %v40 = vmul.f32 %v38, %v38
  %v41 = vsel %vm27, %v39, 0.0
  %42 = vadd.xlane.f32.xlu0 %v41
  %v43 = vpop.xlane.xlu0 %42
  %v44 = vsel %vm27, %v40, 0.0
  %45 = vadd.xlane.f32.xlu0 %v44
  %v46 = vpop.xlane.xlu0 %45
  %v47 = vmul.f32 %v43, %v34
  %v48 = vmul.f32 %v46, %v34
  %v49 = vadd.f32 %v47, 1e-12
  %v50 = vadd.f32 %v48, 1e-12
  %v51 = vrsqrt.pop %v49
  %v52 = vrsqrt.pop %v50
  %v53 = vmul.f32 %v37, %v51
  %v54 = vmul.f32 %v38, %v52
  %v55 = vld [vmem:[%s2] sm:$0x1]
  %v57 = vlaneseq
  %v58 = vshrl.u32 %v57, 7
  %v59 = vsub.s32 0, %v58
  %v60 = vrot.slane %v55, %v59
  %v62 = vmul.f32 %v53, %v60
  %v63 = vmul.f32 %v54, %v60
  %v64 = vld [vmem:[%s3] sm:$0x1]
  %v66 = vlaneseq
  %v67 = vshrl.u32 %v66, 7
  %v68 = vsub.s32 0, %v67
  %v69 = vrot.slane %v64, %v68
  %v71 = vadd.f32 %v62, %v69
  %v72 = vadd.f32 %v63, %v69
  %v73 = vpack.c.bf16 %v72, %v71
  %v75 = vunpack.c.l.b16 %v73
  %v76 = vunpack.c.h.b16 %v73
  %v77 = vpack.c.b16 %v75, %v75
  %v78 = vpack.c.b16 %v76, %v76
  %vm81 = vcmask 257024
  %82 = vst.msk [vmem:[%s4] sm:$0xf] %vm81, %v77
  %83 = vst.msk [vmem:[%s4 + $0x4] sm:$0xf] %vm81, %v78
  // Predicated region
  $region18: #{bert_naive_forward.25} parent=0 // pred_check
    _
  $region19: #{bert_naive_forward.25} parent=0 // pred_check_branch
    %85 = sbr.rel (0) target = $region21
  $region20: #{bert_naive_forward.25} parent=0 // pred_region
    _
  $region21: #{bert_naive_forward.25} parent=0 // pred_fallthru
    _
  // Predicated region
  $region22: #{bert_naive_forward.25} parent=0 // pred_check
    _
  $region23: #{bert_naive_forward.25} parent=0 // pred_check_branch
    %87 = sbr.rel (0) target = $region25
  $region24: #{bert_naive_forward.25} parent=0 // pred_region
    _
  $region25: #{bert_naive_forward.25} parent=0 // pred_fallthru
    _

// kernel: bert_naive_forward.26
$region0: #{bert_naive_forward.26}
  #allocation0 [shape = 'u32[]', space=smem, size = 0x4, offset = 0x4, fixed_abs, tag = 'smem constant byte address 0x4 - core index']
  #allocation1 [shape = 'u32[144,128]{1,0:T(1,128)}', space=vmem, size = 0x12000, scoped, tag = 'internal scratch']
  #allocation2 [shape = 'f32[16,128]{1,0:T(8,128)}', space=vmem, size = 0x2000, scoped, tag = 'scratch operand']
  %s0 = inlined_call_operand.vmem [shape: bf16[16,128], index: 0, kind: input, shape index: {}]
  %s1 = inlined_call_operand.vmem [shape: bf16[128,128], index: 1, kind: input, shape index: {}]
  %s2 = inlined_call_operand.vmem [shape: f32[1,128], index: 2, kind: input, shape index: {}]
  %s3 = inlined_call_operand.vmem [shape: bf16[16,128], index: 3, kind: output, shape index: {}]
  %s4 = sld [smem:[#allocation0]]
  $region30: #{bert_naive_forward.26} parent=0
    _
  %s6 = ssub.s32 1, %s4
  %s7 = scalar_select 0, %s6, %s4
  // Predicated region
  $region2: #{bert_naive_forward.26} parent=0 // pred_check
    _
  $region3: #{bert_naive_forward.26} parent=0 // pred_check_branch
    %9 = sbr.rel (0) target = $region5
  $region4: #{bert_naive_forward.26} parent=0 // pred_region
    _
  $region5: #{bert_naive_forward.26} parent=0 // pred_fallthru
    _
  // Predicated region
  $region6: #{bert_naive_forward.26} parent=0 // pred_check
    _
  $region7: #{bert_naive_forward.26} parent=0 // pred_check_branch
    %11 = sbr.rel (0) target = $region9
  $region8: #{bert_naive_forward.26} parent=0 // pred_region
    _
  $region9: #{bert_naive_forward.26} parent=0 // pred_fallthru
    _
  // Predicated region
  $region10: #{bert_naive_forward.26} parent=0 // pred_check
    _
  $region11: #{bert_naive_forward.26} parent=0 // pred_check_branch
    %13 = sbr.rel (0) target = $region13
  $region12: #{bert_naive_forward.26} parent=0 // pred_region
    _
  $region13: #{bert_naive_forward.26} parent=0 // pred_fallthru
    _
  %p15 = scmp.eq.s32.totalorder 0, 0
  // Predicated region
  $region14: #{bert_naive_forward.26} parent=0 // pred_check
    %p16 = pneg %p15
  $region15: #{bert_naive_forward.26} parent=0 // pred_check_branch
    %18 = sbr.rel (%p16) target = $region17
  $region16: #{bert_naive_forward.26} parent=0 // pred_region
    %19 = vst [vmem:[#allocation2] sm:$0xff] 0.0
    %20 = vst [vmem:[#allocation2 + $0x8] sm:$0xff] 0.0
  $region17: #{bert_naive_forward.26} parent=0 // pred_fallthru
    _
  %v21 = vld [vmem:[#allocation2] sm:$0xff]
  %v22 = vld [vmem:[#allocation2 + $0x8] sm:$0xff]
  %v23 = vld [vmem:[%s0] sm:$0xf]
  %v24 = vld [vmem:[%s0 + $0x4] sm:$0xf]
  %v25 = vld [vmem:[%s1] sm:$0xf]
  %v26 = vld [vmem:[%s1 + $0x4] sm:$0xf]
  %v27 = vld [vmem:[%s1 + $0x8] sm:$0xf]
  %v28 = vld [vmem:[%s1 + $0xc] sm:$0xf]
  %v29 = vld [vmem:[%s1 + $0x10] sm:$0xf]
  %v30 = vld [vmem:[%s1 + $0x14] sm:$0xf]
  %v31 = vld [vmem:[%s1 + $0x18] sm:$0xf]
  %v32 = vld [vmem:[%s1 + $0x1c] sm:$0xf]
  %v33 = vld [vmem:[%s1 + $0x20] sm:$0xf]
  %v34 = vld [vmem:[%s1 + $0x24] sm:$0xf]
  %v35 = vld [vmem:[%s1 + $0x28] sm:$0xf]
  %v36 = vld [vmem:[%s1 + $0x2c] sm:$0xf]
  %v37 = vld [vmem:[%s1 + $0x30] sm:$0xf]
  %v38 = vld [vmem:[%s1 + $0x34] sm:$0xf]
  %v39 = vld [vmem:[%s1 + $0x38] sm:$0xf]
  %v40 = vld [vmem:[%s1 + $0x3c] sm:$0xf]
  %v43 = vunpack.c.l.b16 %v23
  %v44 = vunpack.c.l.b16 %v24
  %v45 = vpack.c.b16 %v44, %v43
  %v63 = vunpack.c.l.b16 %v25
  %v64 = vunpack.c.l.b16 %v26
  %v65 = vunpack.c.l.b16 %v27
  %v66 = vunpack.c.l.b16 %v28
  %v67 = vunpack.c.l.b16 %v29
  %v68 = vunpack.c.l.b16 %v30
  %v69 = vunpack.c.l.b16 %v31
  %v70 = vunpack.c.l.b16 %v32
  %v71 = vunpack.c.l.b16 %v33
  %v72 = vunpack.c.l.b16 %v34
  %v73 = vunpack.c.l.b16 %v35
  %v74 = vunpack.c.l.b16 %v36
  %v75 = vunpack.c.l.b16 %v37
  %v76 = vunpack.c.l.b16 %v38
  %v77 = vunpack.c.l.b16 %v39
  %v78 = vunpack.c.l.b16 %v40
  %v79 = vpack.c.b16 %v64, %v63
  %v80 = vpack.c.b16 %v66, %v65
  %v81 = vpack.c.b16 %v68, %v67
  %v82 = vpack.c.b16 %v70, %v69
  %v83 = vpack.c.b16 %v72, %v71
  %v84 = vpack.c.b16 %v74, %v73
  %v85 = vpack.c.b16 %v76, %v75
  %v86 = vpack.c.b16 %v78, %v77
  %95 = vmatprep.subr.bf16.mxu0 0
  %96 = vmatpush1.bf16.msra.mxu0 %v86
  %97 = vmatprep.subr.bf16.mxu0 0
  %98 = vmatpush1.bf16.msra.mxu0 %v85
  %99 = vmatprep.subr.bf16.mxu0 0
  %100 = vmatpush1.bf16.msra.mxu0 %v84
  %101 = vmatprep.subr.bf16.mxu0 0
  %102 = vmatpush1.bf16.msra.mxu0 %v83
  %103 = vmatprep.subr.bf16.mxu0 0
  %104 = vmatpush1.bf16.msra.mxu0 %v82
  %105 = vmatprep.subr.bf16.mxu0 0
  %106 = vmatpush1.bf16.msra.mxu0 %v81
  %107 = vmatprep.subr.bf16.mxu0 0
  %108 = vmatpush1.bf16.msra.mxu0 %v80
  %109 = vmatprep.subr.bf16.mxu0 0
  %110 = vmatpush1.bf16.msra.mxu0 %v79
  %111 = vmatprep.subr.bf16.mxu0 0
  %112 = vmatpush2.bf16.msra.mxu0 0
  %113 = vmatprep.subr.bf16.mxu0 0
  %114 = vmatpush2.bf16.msra.mxu0 0
  %115 = vmatprep.subr.bf16.mxu0 0
  %116 = vmatpush2.bf16.msra.mxu0 0
  %117 = vmatprep.subr.bf16.mxu0 0
  %118 = vmatpush2.bf16.msra.mxu0 0
  %119 = vmatprep.subr.bf16.mxu0 0
  %120 = vmatpush2.bf16.msra.mxu0 0
  %121 = vmatprep.subr.bf16.mxu0 0
  %122 = vmatpush2.bf16.msra.mxu0 0
  %123 = vmatprep.subr.bf16.mxu0 0
  %124 = vmatpush2.bf16.msra.mxu0 0
  %125 = vmatprep.subr.bf16.mxu0 0
  %126 = vmatpush2.bf16.msra.mxu0 0
  %127 = vmatprep.mubr.bf16.mxu0 0
  %128 = vmatmul.mubr.bf16.gmra.mxu0 %v45
  %v129 = vpop.f32.mrf.mxu0
  %v130 = vadd.f32 0.0, %v129
  %v131 = vpop.f32.mrf.mxu0
  %v132 = vpop.f32.mrf.mxu0
  %v133 = vadd.f32 0.0, %v132
  %v134 = vpop.f32.mrf.mxu0
  %135 = vdwg.mxu0
  %v136 = vadd.f32 %v21, %v130
  %v137 = vadd.f32 %v22, %v133
  %138 = vst [vmem:[#allocation2] sm:$0xff] %v136
  %139 = vst [vmem:[#allocation2 + $0x8] sm:$0xff] %v137
  // Predicated region
  $region18: #{bert_naive_forward.26} parent=0 // pred_check
    %p140 = pneg %p15
  $region19: #{bert_naive_forward.26} parent=0 // pred_check_branch
    %142 = sbr.rel (%p140) target = $region21
  $region20: #{bert_naive_forward.26} parent=0 // pred_region
    %v143 = vld [vmem:[#allocation2] sm:$0xff]
    %v144 = vld [vmem:[#allocation2 + $0x8] sm:$0xff]
    %v145 = vld [vmem:[%s2] sm:$0x1]
    %v147 = vlaneseq
    %v148 = vshrl.u32 %v147, 7
    %v149 = vsub.s32 0, %v148
    %v150 = vrot.slane %v145, %v149
    %v152 = vadd.f32 %v143, %v150
    %v153 = vadd.f32 %v144, %v150
    %v154 = vmul.f32 %v152, %v152
    %v155 = vmul.f32 %v153, %v153
    %v156 = vmul.f32 %v152, %v154
    %v157 = vmul.f32 %v153, %v155
    %v158 = vmul.f32 %v156, 0.044715
    %v159 = vmul.f32 %v157, 0.044715
    %v160 = vadd.f32 %v152, %v158
    %v161 = vadd.f32 %v153, %v159
    %v162 = vmul.f32 %v160, 0.7978846
    %v163 = vmul.f32 %v161, 0.7978846
    %v164 = vtanh.pop %v162
    %v165 = vtanh.pop %v163
    %v166 = vadd.f32 %v164, 1.0
    %v167 = vadd.f32 %v165, 1.0
    %v168 = vmul.f32 %v166, 0.5
    %v169 = vmul.f32 %v167, 0.5
    %v170 = vmul.f32 %v152, %v168
    %v171 = vmul.f32 %v153, %v169
    %v172 = vpack.c.bf16 %v171, %v170
    %v174 = vunpack.c.l.b16 %v172
    %v175 = vunpack.c.h.b16 %v172
    %v176 = vpack.c.b16 %v174, %v174
    %v177 = vpack.c.b16 %v175, %v175
    %180 = vst [vmem:[%s3] sm:$0xf] %v176
    %181 = vst [vmem:[%s3 + $0x4] sm:$0xf] %v177
  $region21: #{bert_naive_forward.26} parent=0 // pred_fallthru
    _
  // Predicated region
  $region22: #{bert_naive_forward.26} parent=0 // pred_check
    _
  $region23: #{bert_naive_forward.26} parent=0 // pred_check_branch
    %183 = sbr.rel (0) target = $region25
  $region24: #{bert_naive_forward.26} parent=0 // pred_region
    _
  $region25: #{bert_naive_forward.26} parent=0 // pred_fallthru
    _
  // Predicated region
  $region26: #{bert_naive_forward.26} parent=0 // pred_check
    _
  $region27: #{bert_naive_forward.26} parent=0 // pred_check_branch
    %185 = sbr.rel (0) target = $region29
  $region28: #{bert_naive_forward.26} parent=0 // pred_region
    _
  $region29: #{bert_naive_forward.26} parent=0 // pred_fallthru
    _

// kernel: bert_naive_forward.37
$region0: #{bert_naive_forward.37}
  #allocation0 [shape = 'u32[]', space=smem, size = 0x4, offset = 0x4, fixed_abs, tag = 'smem constant byte address 0x4 - core index']
  #allocation1 [shape = 'u32[144,128]{1,0:T(1,128)}', space=vmem, size = 0x12000, scoped, tag = 'internal scratch']
  #allocation2 [shape = 'f32[8,128]{1,0:T(8,128)}', space=vmem, size = 0x1000, scoped, tag = 'scratch operand']
  %s0 = inlined_call_operand.vmem [shape: bf16[8,128], index: 0, kind: input, shape index: {}]
  %s1 = inlined_call_operand.vmem [shape: bf16[128,128], index: 1, kind: input, shape index: {}]
  %s2 = inlined_call_operand.vmem [shape: f32[1,128], index: 2, kind: input, shape index: {}]
  %s3 = inlined_call_operand.vmem [shape: bf16[8,128], index: 3, kind: output, shape index: {}]
  %s4 = sld [smem:[#allocation0]]
  $region30: #{bert_naive_forward.37} parent=0
    _
  %s6 = ssub.s32 1, %s4
  %s7 = scalar_select 0, %s6, %s4
  // Predicated region
  $region2: #{bert_naive_forward.37} parent=0 // pred_check
    _
  $region3: #{bert_naive_forward.37} parent=0 // pred_check_branch
    %9 = sbr.rel (0) target = $region5
  $region4: #{bert_naive_forward.37} parent=0 // pred_region
    _
  $region5: #{bert_naive_forward.37} parent=0 // pred_fallthru
    _
  // Predicated region
  $region6: #{bert_naive_forward.37} parent=0 // pred_check
    _
  $region7: #{bert_naive_forward.37} parent=0 // pred_check_branch
    %11 = sbr.rel (0) target = $region9
  $region8: #{bert_naive_forward.37} parent=0 // pred_region
    _
  $region9: #{bert_naive_forward.37} parent=0 // pred_fallthru
    _
  // Predicated region
  $region10: #{bert_naive_forward.37} parent=0 // pred_check
    _
  $region11: #{bert_naive_forward.37} parent=0 // pred_check_branch
    %13 = sbr.rel (0) target = $region13
  $region12: #{bert_naive_forward.37} parent=0 // pred_region
    _
  $region13: #{bert_naive_forward.37} parent=0 // pred_fallthru
    _
  %p15 = scmp.eq.s32.totalorder 0, 0
  // Predicated region
  $region14: #{bert_naive_forward.37} parent=0 // pred_check
    %p16 = pneg %p15
  $region15: #{bert_naive_forward.37} parent=0 // pred_check_branch
    %18 = sbr.rel (%p16) target = $region17
  $region16: #{bert_naive_forward.37} parent=0 // pred_region
    %19 = vst [vmem:[#allocation2] sm:$0xff] 0.0
  $region17: #{bert_naive_forward.37} parent=0 // pred_fallthru
    _
  %v20 = vld [vmem:[#allocation2] sm:$0xff]
  %v21 = vld [vmem:[%s0] sm:$0xf]
  %v22 = vld [vmem:[%s1] sm:$0xf]
  %v23 = vld [vmem:[%s1 + $0x4] sm:$0xf]
  %v24 = vld [vmem:[%s1 + $0x8] sm:$0xf]
  %v25 = vld [vmem:[%s1 + $0xc] sm:$0xf]
  %v26 = vld [vmem:[%s1 + $0x10] sm:$0xf]
  %v27 = vld [vmem:[%s1 + $0x14] sm:$0xf]
  %v28 = vld [vmem:[%s1 + $0x18] sm:$0xf]
  %v29 = vld [vmem:[%s1 + $0x1c] sm:$0xf]
  %v30 = vld [vmem:[%s1 + $0x20] sm:$0xf]
  %v31 = vld [vmem:[%s1 + $0x24] sm:$0xf]
  %v32 = vld [vmem:[%s1 + $0x28] sm:$0xf]
  %v33 = vld [vmem:[%s1 + $0x2c] sm:$0xf]
  %v34 = vld [vmem:[%s1 + $0x30] sm:$0xf]
  %v35 = vld [vmem:[%s1 + $0x34] sm:$0xf]
  %v36 = vld [vmem:[%s1 + $0x38] sm:$0xf]
  %v37 = vld [vmem:[%s1 + $0x3c] sm:$0xf]
  %v54 = vunpack.c.l.b16 %v22
  %v55 = vunpack.c.l.b16 %v23
  %v56 = vunpack.c.l.b16 %v24
  %v57 = vunpack.c.l.b16 %v25
  %v58 = vunpack.c.l.b16 %v26
  %v59 = vunpack.c.l.b16 %v27
  %v60 = vunpack.c.l.b16 %v28
  %v61 = vunpack.c.l.b16 %v29
  %v62 = vunpack.c.l.b16 %v30
  %v63 = vunpack.c.l.b16 %v31
  %v64 = vunpack.c.l.b16 %v32
  %v65 = vunpack.c.l.b16 %v33
  %v66 = vunpack.c.l.b16 %v34
  %v67 = vunpack.c.l.b16 %v35
  %v68 = vunpack.c.l.b16 %v36
  %v69 = vunpack.c.l.b16 %v37
  %v70 = vpack.c.b16 %v55, %v54
  %v71 = vpack.c.b16 %v57, %v56
  %v72 = vpack.c.b16 %v59, %v58
  %v73 = vpack.c.b16 %v61, %v60
  %v74 = vpack.c.b16 %v63, %v62
  %v75 = vpack.c.b16 %v65, %v64
  %v76 = vpack.c.b16 %v67, %v66
  %v77 = vpack.c.b16 %v69, %v68
  %86 = vmatprep.subr.bf16.mxu0 0
  %87 = vmatpush1.bf16.msra.mxu0 %v77
  %88 = vmatprep.subr.bf16.mxu0 0
  %89 = vmatpush1.bf16.msra.mxu0 %v76
  %90 = vmatprep.subr.bf16.mxu0 0
  %91 = vmatpush1.bf16.msra.mxu0 %v75
  %92 = vmatprep.subr.bf16.mxu0 0
  %93 = vmatpush1.bf16.msra.mxu0 %v74
  %94 = vmatprep.subr.bf16.mxu0 0
  %95 = vmatpush1.bf16.msra.mxu0 %v73
  %96 = vmatprep.subr.bf16.mxu0 0
  %97 = vmatpush1.bf16.msra.mxu0 %v72
  %98 = vmatprep.subr.bf16.mxu0 0
  %99 = vmatpush1.bf16.msra.mxu0 %v71
  %100 = vmatprep.subr.bf16.mxu0 0
  %101 = vmatpush1.bf16.msra.mxu0 %v70
  %102 = vmatprep.subr.bf16.mxu0 0
  %103 = vmatpush2.bf16.msra.mxu0 0
  %104 = vmatprep.subr.bf16.mxu0 0
  %105 = vmatpush2.bf16.msra.mxu0 0
  %106 = vmatprep.subr.bf16.mxu0 0
  %107 = vmatpush2.bf16.msra.mxu0 0
  %108 = vmatprep.subr.bf16.mxu0 0
  %109 = vmatpush2.bf16.msra.mxu0 0
  %110 = vmatprep.subr.bf16.mxu0 0
  %111 = vmatpush2.bf16.msra.mxu0 0
  %112 = vmatprep.subr.bf16.mxu0 0
  %113 = vmatpush2.bf16.msra.mxu0 0
  %114 = vmatprep.subr.bf16.mxu0 0
  %115 = vmatpush2.bf16.msra.mxu0 0
  %116 = vmatprep.subr.bf16.mxu0 0
  %117 = vmatpush2.bf16.msra.mxu0 0
  %118 = vmatprep.mubr.bf16.mxu0 0
  %119 = vmatmul.mubr.bf16.gmra.mxu0 %v21
  %v120 = vpop.f32.mrf.mxu0
  %v121 = vadd.f32 0.0, %v120
  %v122 = vpop.f32.mrf.mxu0
  %v123 = vpop.f32.mrf.mxu0
  %v124 = vpop.f32.mrf.mxu0
  %125 = vdwg.mxu0
  %v126 = vadd.f32 %v20, %v121
  %127 = vst [vmem:[#allocation2] sm:$0xff] %v126
  // Predicated region
  $region18: #{bert_naive_forward.37} parent=0 // pred_check
    %p128 = pneg %p15
  $region19: #{bert_naive_forward.37} parent=0 // pred_check_branch
    %130 = sbr.rel (%p128) target = $region21
  $region20: #{bert_naive_forward.37} parent=0 // pred_region
    %v131 = vld [vmem:[#allocation2] sm:$0xff]
    %v132 = vld [vmem:[%s2] sm:$0x1]
    %v134 = vlaneseq
    %v135 = vshrl.u32 %v134, 7
    %v136 = vsub.s32 0, %v135
    %v137 = vrot.slane %v132, %v136
    %v139 = vadd.f32 %v131, %v137
    %v140 = vpack.c.bf16 %v139, %v139
    %141 = vst [vmem:[%s3] sm:$0xf] %v140
  $region21: #{bert_naive_forward.37} parent=0 // pred_fallthru
    _
  // Predicated region
  $region22: #{bert_naive_forward.37} parent=0 // pred_check
    _
  $region23: #{bert_naive_forward.37} parent=0 // pred_check_branch
    %143 = sbr.rel (0) target = $region25
  $region24: #{bert_naive_forward.37} parent=0 // pred_region
    _
  $region25: #{bert_naive_forward.37} parent=0 // pred_fallthru
    _
  // Predicated region
  $region26: #{bert_naive_forward.37} parent=0 // pred_check
    _
  $region27: #{bert_naive_forward.37} parent=0 // pred_check_branch
    %145 = sbr.rel (0) target = $region29
  $region28: #{bert_naive_forward.37} parent=0 // pred_region
    _
  $region29: #{bert_naive_forward.37} parent=0 // pred_fallthru
    _

// kernel: bert_naive_forward.36
$region0: #{bert_naive_forward.36}
  #allocation0 [shape = 'u32[]', space=smem, size = 0x4, offset = 0x4, fixed_abs, tag = 'smem constant byte address 0x4 - core index']
  #allocation1 [shape = 'u32[144,128]{1,0:T(1,128)}', space=vmem, size = 0x12000, scoped, tag = 'internal scratch']
  #allocation2 [shape = 'f32[8,128]{1,0:T(8,128)}', space=vmem, size = 0x1000, scoped, tag = 'scratch operand']
  %s0 = inlined_call_operand.vmem [shape: bf16[8,128], index: 0, kind: input, shape index: {}]
  %s1 = inlined_call_operand.vmem [shape: bf16[128,128], index: 1, kind: input, shape index: {}]
  %s2 = inlined_call_operand.vmem [shape: f32[1,128], index: 2, kind: input, shape index: {}]
  %s3 = inlined_call_operand.vmem [shape: bf16[8,128], index: 3, kind: output, shape index: {}]
  %s4 = sld [smem:[#allocation0]]
  $region30: #{bert_naive_forward.36} parent=0
    _
  %s6 = ssub.s32 1, %s4
  %s7 = scalar_select 0, %s6, %s4
  // Predicated region
  $region2: #{bert_naive_forward.36} parent=0 // pred_check
    _
  $region3: #{bert_naive_forward.36} parent=0 // pred_check_branch
    %9 = sbr.rel (0) target = $region5
  $region4: #{bert_naive_forward.36} parent=0 // pred_region
    _
  $region5: #{bert_naive_forward.36} parent=0 // pred_fallthru
    _
  // Predicated region
  $region6: #{bert_naive_forward.36} parent=0 // pred_check
    _
  $region7: #{bert_naive_forward.36} parent=0 // pred_check_branch
    %11 = sbr.rel (0) target = $region9
  $region8: #{bert_naive_forward.36} parent=0 // pred_region
    _
  $region9: #{bert_naive_forward.36} parent=0 // pred_fallthru
    _
  // Predicated region
  $region10: #{bert_naive_forward.36} parent=0 // pred_check
    _
  $region11: #{bert_naive_forward.36} parent=0 // pred_check_branch
    %13 = sbr.rel (0) target = $region13
  $region12: #{bert_naive_forward.36} parent=0 // pred_region
    _
  $region13: #{bert_naive_forward.36} parent=0 // pred_fallthru
    _
  %p15 = scmp.eq.s32.totalorder 0, 0
  // Predicated region
  $region14: #{bert_naive_forward.36} parent=0 // pred_check
    %p16 = pneg %p15
  $region15: #{bert_naive_forward.36} parent=0 // pred_check_branch
    %18 = sbr.rel (%p16) target = $region17
  $region16: #{bert_naive_forward.36} parent=0 // pred_region
    %19 = vst [vmem:[#allocation2] sm:$0xff] 0.0
  $region17: #{bert_naive_forward.36} parent=0 // pred_fallthru
    _
  %v20 = vld [vmem:[#allocation2] sm:$0xff]
  %v21 = vld [vmem:[%s0] sm:$0xf]
  %v22 = vld [vmem:[%s1] sm:$0xf]
  %v23 = vld [vmem:[%s1 + $0x4] sm:$0xf]
  %v24 = vld [vmem:[%s1 + $0x8] sm:$0xf]
  %v25 = vld [vmem:[%s1 + $0xc] sm:$0xf]
  %v26 = vld [vmem:[%s1 + $0x10] sm:$0xf]
  %v27 = vld [vmem:[%s1 + $0x14] sm:$0xf]
  %v28 = vld [vmem:[%s1 + $0x18] sm:$0xf]
  %v29 = vld [vmem:[%s1 + $0x1c] sm:$0xf]
  %v30 = vld [vmem:[%s1 + $0x20] sm:$0xf]
  %v31 = vld [vmem:[%s1 + $0x24] sm:$0xf]
  %v32 = vld [vmem:[%s1 + $0x28] sm:$0xf]
  %v33 = vld [vmem:[%s1 + $0x2c] sm:$0xf]
  %v34 = vld [vmem:[%s1 + $0x30] sm:$0xf]
  %v35 = vld [vmem:[%s1 + $0x34] sm:$0xf]
  %v36 = vld [vmem:[%s1 + $0x38] sm:$0xf]
  %v37 = vld [vmem:[%s1 + $0x3c] sm:$0xf]
  %v54 = vunpack.c.l.b16 %v22
  %v55 = vunpack.c.l.b16 %v23
  %v56 = vunpack.c.l.b16 %v24
  %v57 = vunpack.c.l.b16 %v25
  %v58 = vunpack.c.l.b16 %v26
  %v59 = vunpack.c.l.b16 %v27
  %v60 = vunpack.c.l.b16 %v28
  %v61 = vunpack.c.l.b16 %v29
  %v62 = vunpack.c.l.b16 %v30
  %v63 = vunpack.c.l.b16 %v31
  %v64 = vunpack.c.l.b16 %v32
  %v65 = vunpack.c.l.b16 %v33
  %v66 = vunpack.c.l.b16 %v34
  %v67 = vunpack.c.l.b16 %v35
  %v68 = vunpack.c.l.b16 %v36
  %v69 = vunpack.c.l.b16 %v37
  %v70 = vpack.c.b16 %v55, %v54
  %v71 = vpack.c.b16 %v57, %v56
  %v72 = vpack.c.b16 %v59, %v58
  %v73 = vpack.c.b16 %v61, %v60
  %v74 = vpack.c.b16 %v63, %v62
  %v75 = vpack.c.b16 %v65, %v64
  %v76 = vpack.c.b16 %v67, %v66
  %v77 = vpack.c.b16 %v69, %v68
  %86 = vmatprep.subr.bf16.mxu0 0
  %87 = vmatpush1.bf16.msra.mxu0 %v77
  %88 = vmatprep.subr.bf16.mxu0 0
  %89 = vmatpush1.bf16.msra.mxu0 %v76
  %90 = vmatprep.subr.bf16.mxu0 0
  %91 = vmatpush1.bf16.msra.mxu0 %v75
  %92 = vmatprep.subr.bf16.mxu0 0
  %93 = vmatpush1.bf16.msra.mxu0 %v74
  %94 = vmatprep.subr.bf16.mxu0 0
  %95 = vmatpush1.bf16.msra.mxu0 %v73
  %96 = vmatprep.subr.bf16.mxu0 0
  %97 = vmatpush1.bf16.msra.mxu0 %v72
  %98 = vmatprep.subr.bf16.mxu0 0
  %99 = vmatpush1.bf16.msra.mxu0 %v71
  %100 = vmatprep.subr.bf16.mxu0 0
  %101 = vmatpush1.bf16.msra.mxu0 %v70
  %102 = vmatprep.subr.bf16.mxu0 0
  %103 = vmatpush2.bf16.msra.mxu0 0
  %104 = vmatprep.subr.bf16.mxu0 0
  %105 = vmatpush2.bf16.msra.mxu0 0
  %106 = vmatprep.subr.bf16.mxu0 0
  %107 = vmatpush2.bf16.msra.mxu0 0
  %108 = vmatprep.subr.bf16.mxu0 0
  %109 = vmatpush2.bf16.msra.mxu0 0
  %110 = vmatprep.subr.bf16.mxu0 0
  %111 = vmatpush2.bf16.msra.mxu0 0
  %112 = vmatprep.subr.bf16.mxu0 0
  %113 = vmatpush2.bf16.msra.mxu0 0
  %114 = vmatprep.subr.bf16.mxu0 0
  %115 = vmatpush2.bf16.msra.mxu0 0
  %116 = vmatprep.subr.bf16.mxu0 0
  %117 = vmatpush2.bf16.msra.mxu0 0
  %118 = vmatprep.mubr.bf16.mxu0 0
  %119 = vmatmul.mubr.bf16.gmra.mxu0 %v21
  %v120 = vpop.f32.mrf.mxu0
  %v121 = vadd.f32 0.0, %v120
  %v122 = vpop.f32.mrf.mxu0
  %v123 = vpop.f32.mrf.mxu0
  %v124 = vpop.f32.mrf.mxu0
  %125 = vdwg.mxu0
  %v126 = vadd.f32 %v20, %v121
  %127 = vst [vmem:[#allocation2] sm:$0xff] %v126
  // Predicated region
  $region18: #{bert_naive_forward.36} parent=0 // pred_check
    %p128 = pneg %p15
  $region19: #{bert_naive_forward.36} parent=0 // pred_check_branch
    %130 = sbr.rel (%p128) target = $region21
  $region20: #{bert_naive_forward.36} parent=0 // pred_region
    %v131 = vld [vmem:[#allocation2] sm:$0xff]
    %v132 = vld [vmem:[%s2] sm:$0x1]
    %v134 = vlaneseq
    %v135 = vshrl.u32 %v134, 7
    %v136 = vsub.s32 0, %v135
    %v137 = vrot.slane %v132, %v136
    %v139 = vadd.f32 %v131, %v137
    %v140 = vtanh.pop %v139
    %v141 = vpack.c.bf16 %v140, %v140
    %142 = vst [vmem:[%s3] sm:$0xf] %v141
  $region21: #{bert_naive_forward.36} parent=0 // pred_fallthru
    _
  // Predicated region
  $region22: #{bert_naive_forward.36} parent=0 // pred_check
    _
  $region23: #{bert_naive_forward.36} parent=0 // pred_check_branch
    %144 = sbr.rel (0) target = $region25
  $region24: #{bert_naive_forward.36} parent=0 // pred_region
    _
  $region25: #{bert_naive_forward.36} parent=0 // pred_fallthru
    _
  // Predicated region
  $region26: #{bert_naive_forward.36} parent=0 // pred_check
    _
  $region27: #{bert_naive_forward.36} parent=0 // pred_check_branch
    %146 = sbr.rel (0) target = $region29
  $region28: #{bert_naive_forward.36} parent=0 // pred_region
    _
  $region29: #{bert_naive_forward.36} parent=0 // pred_fallthru
    _

// kernel: bert_naive_forward.40
$region0: #{bert_naive_forward.40}
  #allocation0 [shape = 'u32[]', space=smem, size = 0x4, offset = 0x4, fixed_abs, tag = 'smem constant byte address 0x4 - core index']
  #allocation1 [shape = 'u32[144,128]{1,0:T(1,128)}', space=vmem, size = 0x12000, scoped, tag = 'internal scratch']
  #allocation2 [shape = 'f32[8,128]{1,0:T(8,128)}', space=vmem, size = 0x1000, scoped, tag = 'scratch operand']
  %s0 = inlined_call_operand.vmem [shape: bf16[8,128], index: 0, kind: input, shape index: {}]
  %s1 = inlined_call_operand.vmem [shape: bf16[128,128], index: 1, kind: input, shape index: {}]
  %s2 = inlined_call_operand.vmem [shape: f32[1,128], index: 2, kind: input, shape index: {}]
  %s3 = inlined_call_operand.vmem [shape: bf16[8,128], index: 3, kind: output, shape index: {}]
  %s4 = sld [smem:[#allocation0]]
  $region30: #{bert_naive_forward.40} parent=0
    _
  %s6 = ssub.s32 1, %s4
  %s7 = scalar_select 0, %s6, %s4
  // Predicated region
  $region2: #{bert_naive_forward.40} parent=0 // pred_check
    _
  $region3: #{bert_naive_forward.40} parent=0 // pred_check_branch
    %9 = sbr.rel (0) target = $region5
  $region4: #{bert_naive_forward.40} parent=0 // pred_region
    _
  $region5: #{bert_naive_forward.40} parent=0 // pred_fallthru
    _
  // Predicated region
  $region6: #{bert_naive_forward.40} parent=0 // pred_check
    _
  $region7: #{bert_naive_forward.40} parent=0 // pred_check_branch
    %11 = sbr.rel (0) target = $region9
  $region8: #{bert_naive_forward.40} parent=0 // pred_region
    _
  $region9: #{bert_naive_forward.40} parent=0 // pred_fallthru
    _
  // Predicated region
  $region10: #{bert_naive_forward.40} parent=0 // pred_check
    _
  $region11: #{bert_naive_forward.40} parent=0 // pred_check_branch
    %13 = sbr.rel (0) target = $region13
  $region12: #{bert_naive_forward.40} parent=0 // pred_region
    _
  $region13: #{bert_naive_forward.40} parent=0 // pred_fallthru
    _
  %p15 = scmp.eq.s32.totalorder 0, 0
  // Predicated region
  $region14: #{bert_naive_forward.40} parent=0 // pred_check
    %p16 = pneg %p15
  $region15: #{bert_naive_forward.40} parent=0 // pred_check_branch
    %18 = sbr.rel (%p16) target = $region17
  $region16: #{bert_naive_forward.40} parent=0 // pred_region
    %19 = vst [vmem:[#allocation2] sm:$0xff] 0.0
  $region17: #{bert_naive_forward.40} parent=0 // pred_fallthru
    _
  %v20 = vld [vmem:[#allocation2] sm:$0xff]
  %v21 = vld [vmem:[%s0] sm:$0xf]
  %v22 = vld [vmem:[%s1] sm:$0xf]
  %v23 = vld [vmem:[%s1 + $0x4] sm:$0xf]
  %v24 = vld [vmem:[%s1 + $0x8] sm:$0xf]
  %v25 = vld [vmem:[%s1 + $0xc] sm:$0xf]
  %v26 = vld [vmem:[%s1 + $0x10] sm:$0xf]
  %v27 = vld [vmem:[%s1 + $0x14] sm:$0xf]
  %v28 = vld [vmem:[%s1 + $0x18] sm:$0xf]
  %v29 = vld [vmem:[%s1 + $0x1c] sm:$0xf]
  %v30 = vld [vmem:[%s1 + $0x20] sm:$0xf]
  %v31 = vld [vmem:[%s1 + $0x24] sm:$0xf]
  %v32 = vld [vmem:[%s1 + $0x28] sm:$0xf]
  %v33 = vld [vmem:[%s1 + $0x2c] sm:$0xf]
  %v34 = vld [vmem:[%s1 + $0x30] sm:$0xf]
  %v35 = vld [vmem:[%s1 + $0x34] sm:$0xf]
  %v36 = vld [vmem:[%s1 + $0x38] sm:$0xf]
  %v37 = vld [vmem:[%s1 + $0x3c] sm:$0xf]
  %v54 = vunpack.c.l.b16 %v22
  %v55 = vunpack.c.l.b16 %v23
  %v56 = vunpack.c.l.b16 %v24
  %v57 = vunpack.c.l.b16 %v25
  %v58 = vunpack.c.l.b16 %v26
  %v59 = vunpack.c.l.b16 %v27
  %v60 = vunpack.c.l.b16 %v28
  %v61 = vunpack.c.l.b16 %v29
  %v62 = vunpack.c.l.b16 %v30
  %v63 = vunpack.c.l.b16 %v31
  %v64 = vunpack.c.l.b16 %v32
  %v65 = vunpack.c.l.b16 %v33
  %v66 = vunpack.c.l.b16 %v34
  %v67 = vunpack.c.l.b16 %v35
  %v68 = vunpack.c.l.b16 %v36
  %v69 = vunpack.c.l.b16 %v37
  %v70 = vpack.c.b16 %v55, %v54
  %v71 = vpack.c.b16 %v57, %v56
  %v72 = vpack.c.b16 %v59, %v58
  %v73 = vpack.c.b16 %v61, %v60
  %v74 = vpack.c.b16 %v63, %v62
  %v75 = vpack.c.b16 %v65, %v64
  %v76 = vpack.c.b16 %v67, %v66
  %v77 = vpack.c.b16 %v69, %v68
  %86 = vmatprep.subr.bf16.mxu0 0
  %87 = vmatpush1.bf16.msra.mxu0 %v77
  %88 = vmatprep.subr.bf16.mxu0 0
  %89 = vmatpush1.bf16.msra.mxu0 %v76
  %90 = vmatprep.subr.bf16.mxu0 0
  %91 = vmatpush1.bf16.msra.mxu0 %v75
  %92 = vmatprep.subr.bf16.mxu0 0
  %93 = vmatpush1.bf16.msra.mxu0 %v74
  %94 = vmatprep.subr.bf16.mxu0 0
  %95 = vmatpush1.bf16.msra.mxu0 %v73
  %96 = vmatprep.subr.bf16.mxu0 0
  %97 = vmatpush1.bf16.msra.mxu0 %v72
  %98 = vmatprep.subr.bf16.mxu0 0
  %99 = vmatpush1.bf16.msra.mxu0 %v71
  %100 = vmatprep.subr.bf16.mxu0 0
  %101 = vmatpush1.bf16.msra.mxu0 %v70
  %102 = vmatprep.subr.bf16.mxu0 0
  %103 = vmatpush2.bf16.msra.mxu0 0
  %104 = vmatprep.subr.bf16.mxu0 0
  %105 = vmatpush2.bf16.msra.mxu0 0
  %106 = vmatprep.subr.bf16.mxu0 0
  %107 = vmatpush2.bf16.msra.mxu0 0
  %108 = vmatprep.subr.bf16.mxu0 0
  %109 = vmatpush2.bf16.msra.mxu0 0
  %110 = vmatprep.subr.bf16.mxu0 0
  %111 = vmatpush2.bf16.msra.mxu0 0
  %112 = vmatprep.subr.bf16.mxu0 0
  %113 = vmatpush2.bf16.msra.mxu0 0
  %114 = vmatprep.subr.bf16.mxu0 0
  %115 = vmatpush2.bf16.msra.mxu0 0
  %116 = vmatprep.subr.bf16.mxu0 0
  %117 = vmatpush2.bf16.msra.mxu0 0
  %118 = vmatprep.mubr.bf16.mxu0 0
  %119 = vmatmul.mubr.bf16.gmra.mxu0 %v21
  %v120 = vpop.f32.mrf.mxu0
  %v121 = vadd.f32 0.0, %v120
  %v122 = vpop.f32.mrf.mxu0
  %v123 = vpop.f32.mrf.mxu0
  %v124 = vpop.f32.mrf.mxu0
  %125 = vdwg.mxu0
  %v126 = vadd.f32 %v20, %v121
  %127 = vst [vmem:[#allocation2] sm:$0xff] %v126
  // Predicated region
  $region18: #{bert_naive_forward.40} parent=0 // pred_check
    %p128 = pneg %p15
  $region19: #{bert_naive_forward.40} parent=0 // pred_check_branch
    %130 = sbr.rel (%p128) target = $region21
  $region20: #{bert_naive_forward.40} parent=0 // pred_region
    %v131 = vld [vmem:[#allocation2] sm:$0xff]
    %v132 = vld [vmem:[%s2] sm:$0x1]
    %v134 = vlaneseq
    %v135 = vshrl.u32 %v134, 7
    %v136 = vsub.s32 0, %v135
    %v137 = vrot.slane %v132, %v136
    %v139 = vadd.f32 %v131, %v137
    %v140 = vmax.f32 %v139, 0.0
    %v141 = vpack.c.bf16 %v140, %v140
    %142 = vst [vmem:[%s3] sm:$0xf] %v141
  $region21: #{bert_naive_forward.40} parent=0 // pred_fallthru
    _
  // Predicated region
  $region22: #{bert_naive_forward.40} parent=0 // pred_check
    _
  $region23: #{bert_naive_forward.40} parent=0 // pred_check_branch
    %144 = sbr.rel (0) target = $region25
  $region24: #{bert_naive_forward.40} parent=0 // pred_region
    _
  $region25: #{bert_naive_forward.40} parent=0 // pred_fallthru
    _
  // Predicated region
  $region26: #{bert_naive_forward.40} parent=0 // pred_check
    _
  $region27: #{bert_naive_forward.40} parent=0 // pred_check_branch
    %146 = sbr.rel (0) target = $region29
  $region28: #{bert_naive_forward.40} parent=0 // pred_region
    _
  $region29: #{bert_naive_forward.40} parent=0 // pred_fallthru
    _

// kernel: bert_naive_forward.38
$region0: #{bert_naive_forward.38}
  #allocation0 [shape = 'u32[]', space=smem, size = 0x4, offset = 0x4, fixed_abs, tag = 'smem constant byte address 0x4 - core index']
  #allocation1 [shape = 'u32[144,128]{1,0:T(1,128)}', space=vmem, size = 0x12000, scoped, tag = 'internal scratch']
  %s0 = inlined_call_operand.vmem [shape: bf16[1,4,2,8], index: 0, kind: input, shape index: {}]
  %s1 = inlined_call_operand.vmem [shape: bf16[1,4,2,8], index: 1, kind: input, shape index: {}]
  %s2 = inlined_call_operand.vmem [shape: bf16[1,4,2,8], index: 2, kind: input, shape index: {}]
  %s3 = inlined_call_operand.vmem [shape: f32[1,1,2], index: 3, kind: input, shape index: {}]
  %s4 = inlined_call_operand.vmem [shape: bf16[1,4,2,8], index: 4, kind: output, shape index: {}]
  %s5 = sld [smem:[#allocation0]]
  $region26: #{bert_naive_forward.38} parent=0
    _
  %s7 = ssub.s32 1, %s5
  %s8 = scalar_select 0, %s7, %s5
  // Predicated region
  $region2: #{bert_naive_forward.38} parent=0 // pred_check
    _
  $region3: #{bert_naive_forward.38} parent=0 // pred_check_branch
    %10 = sbr.rel (0) target = $region5
  $region4: #{bert_naive_forward.38} parent=0 // pred_region
    _
  $region5: #{bert_naive_forward.38} parent=0 // pred_fallthru
    _
  // Predicated region
  $region6: #{bert_naive_forward.38} parent=0 // pred_check
    _
  $region7: #{bert_naive_forward.38} parent=0 // pred_check_branch
    %12 = sbr.rel (0) target = $region9
  $region8: #{bert_naive_forward.38} parent=0 // pred_region
    _
  $region9: #{bert_naive_forward.38} parent=0 // pred_fallthru
    _
  // Predicated region
  $region10: #{bert_naive_forward.38} parent=0 // pred_check
    _
  $region11: #{bert_naive_forward.38} parent=0 // pred_check_branch
    %14 = sbr.rel (0) target = $region13
  $region12: #{bert_naive_forward.38} parent=0 // pred_region
    _
  $region13: #{bert_naive_forward.38} parent=0 // pred_fallthru
    _
  // Predicated region
  $region14: #{bert_naive_forward.38} parent=0 // pred_check
    _
  $region15: #{bert_naive_forward.38} parent=0 // pred_check_branch
    %16 = sbr.rel (0) target = $region17
  $region16: #{bert_naive_forward.38} parent=0 // pred_region
    _
  $region17: #{bert_naive_forward.38} parent=0 // pred_fallthru
    _
  %v18 = vld [vmem:[%s0] sm:$0x1]
  %v19 = vld [vmem:[%s0 + $0x1] sm:$0x1]
  %v20 = vld [vmem:[%s0 + $0x2] sm:$0x1]
  %v21 = vld [vmem:[%s0 + $0x3] sm:$0x1]
  %v22 = vld [vmem:[%s1] sm:$0x1]
  %v23 = vld [vmem:[%s1 + $0x1] sm:$0x1]
  %v24 = vld [vmem:[%s1 + $0x2] sm:$0x1]
  %v25 = vld [vmem:[%s1 + $0x3] sm:$0x1]
  %v26 = vld [vmem:[%s2] sm:$0x1]
  %v27 = vld [vmem:[%s2 + $0x1] sm:$0x1]
  %v28 = vld [vmem:[%s2 + $0x2] sm:$0x1]
  %v29 = vld [vmem:[%s2 + $0x3] sm:$0x1]
  %vm30 = vcmask 64512
  %v32 = vsel %vm30, %v18, 0
  %v35 = vsel %vm30, %v22, 0
  %37 = vmatprep.subr.bf16.mxu0 0
  %38 = vmatpush1.bf16.xpose.msra.mxu0 0
  %39 = vmatprep.subr.bf16.mxu0 0
  %40 = vmatpush1.bf16.xpose.msra.mxu0 0
  %41 = vmatprep.subr.bf16.mxu0 0
  %42 = vmatpush1.bf16.xpose.msra.mxu0 0
  %43 = vmatprep.subr.bf16.mxu0 0
  %44 = vmatpush1.bf16.xpose.msra.mxu0 0
  %45 = vmatprep.subr.bf16.mxu0 0
  %46 = vmatpush1.bf16.xpose.msra.mxu0 0
  %47 = vmatprep.subr.bf16.mxu0 0
  %48 = vmatpush1.bf16.xpose.msra.mxu0 0
  %49 = vmatprep.subr.bf16.mxu0 0
  %50 = vmatpush1.bf16.xpose.msra.mxu0 0
  %51 = vmatprep.subr.bf16.mxu0 0
  %52 = vmatpush1.bf16.xpose.msra.mxu0 %v35
  %53 = vmatprep.subr.bf16.mxu0 0
  %54 = vmatpush2.bf16.xpose.msra.mxu0 0
  %55 = vmatprep.subr.bf16.mxu0 0
  %56 = vmatpush2.bf16.xpose.msra.mxu0 0
  %57 = vmatprep.subr.bf16.mxu0 0
  %58 = vmatpush2.bf16.xpose.msra.mxu0 0
  %59 = vmatprep.subr.bf16.mxu0 0
  %60 = vmatpush2.bf16.xpose.msra.mxu0 0
  %61 = vmatprep.subr.bf16.mxu0 0
  %62 = vmatpush2.bf16.xpose.msra.mxu0 0
  %63 = vmatprep.subr.bf16.mxu0 0
  %64 = vmatpush2.bf16.xpose.msra.mxu0 0
  %65 = vmatprep.subr.bf16.mxu0 0
  %66 = vmatpush2.bf16.xpose.msra.mxu0 0
  %67 = vmatprep.subr.bf16.mxu0 0
  %68 = vmatpush2.bf16.xpose.msra.mxu0 0
  %69 = vmatprep.mubr.bf16.mxu0 0
  %70 = vmatmul.mubr.bf16.gmra.mxu0 %v32
  %v71 = vpop.f32.mrf.mxu0
  %v72 = vadd.f32 0.0, %v71
  %v73 = vpop.f32.mrf.mxu0
  %v74 = vpop.f32.mrf.mxu0
  %v75 = vpop.f32.mrf.mxu0
  %76 = vdwg.mxu0
  %v78 = vsel %vm30, %v19, 0
  %v81 = vsel %vm30, %v23, 0
  %83 = vmatprep.subr.bf16.mxu0 0
  %84 = vmatpush1.bf16.xpose.msra.mxu0 0
  %85 = vmatprep.subr.bf16.mxu0 0
  %86 = vmatpush1.bf16.xpose.msra.mxu0 0
  %87 = vmatprep.subr.bf16.mxu0 0
  %88 = vmatpush1.bf16.xpose.msra.mxu0 0
  %89 = vmatprep.subr.bf16.mxu0 0
  %90 = vmatpush1.bf16.xpose.msra.mxu0 0
  %91 = vmatprep.subr.bf16.mxu0 0
  %92 = vmatpush1.bf16.xpose.msra.mxu0 0
  %93 = vmatprep.subr.bf16.mxu0 0
  %94 = vmatpush1.bf16.xpose.msra.mxu0 0
  %95 = vmatprep.subr.bf16.mxu0 0
  %96 = vmatpush1.bf16.xpose.msra.mxu0 0
  %97 = vmatprep.subr.bf16.mxu0 0
  %98 = vmatpush1.bf16.xpose.msra.mxu0 %v81
  %99 = vmatprep.subr.bf16.mxu0 0
  %100 = vmatpush2.bf16.xpose.msra.mxu0 0
  %101 = vmatprep.subr.bf16.mxu0 0
  %102 = vmatpush2.bf16.xpose.msra.mxu0 0
  %103 = vmatprep.subr.bf16.mxu0 0
  %104 = vmatpush2.bf16.xpose.msra.mxu0 0
  %105 = vmatprep.subr.bf16.mxu0 0
  %106 = vmatpush2.bf16.xpose.msra.mxu0 0
  %107 = vmatprep.subr.bf16.mxu0 0
  %108 = vmatpush2.bf16.xpose.msra.mxu0 0
  %109 = vmatprep.subr.bf16.mxu0 0
  %110 = vmatpush2.bf16.xpose.msra.mxu0 0
  %111 = vmatprep.subr.bf16.mxu0 0
  %112 = vmatpush2.bf16.xpose.msra.mxu0 0
  %113 = vmatprep.subr.bf16.mxu0 0
  %114 = vmatpush2.bf16.xpose.msra.mxu0 0
  %115 = vmatprep.mubr.bf16.mxu0 0
  %116 = vmatmul.mubr.bf16.gmra.mxu0 %v78
  %v117 = vpop.f32.mrf.mxu0
  %v118 = vadd.f32 0.0, %v117
  %v119 = vpop.f32.mrf.mxu0
  %v120 = vpop.f32.mrf.mxu0
  %v121 = vpop.f32.mrf.mxu0
  %122 = vdwg.mxu0
  %v124 = vsel %vm30, %v20, 0
  %v127 = vsel %vm30, %v24, 0
  %129 = vmatprep.subr.bf16.mxu0 0
  %130 = vmatpush1.bf16.xpose.msra.mxu0 0
  %131 = vmatprep.subr.bf16.mxu0 0
  %132 = vmatpush1.bf16.xpose.msra.mxu0 0
  %133 = vmatprep.subr.bf16.mxu0 0
  %134 = vmatpush1.bf16.xpose.msra.mxu0 0
  %135 = vmatprep.subr.bf16.mxu0 0
  %136 = vmatpush1.bf16.xpose.msra.mxu0 0
  %137 = vmatprep.subr.bf16.mxu0 0
  %138 = vmatpush1.bf16.xpose.msra.mxu0 0
  %139 = vmatprep.subr.bf16.mxu0 0
  %140 = vmatpush1.bf16.xpose.msra.mxu0 0
  %141 = vmatprep.subr.bf16.mxu0 0
  %142 = vmatpush1.bf16.xpose.msra.mxu0 0
  %143 = vmatprep.subr.bf16.mxu0 0
  %144 = vmatpush1.bf16.xpose.msra.mxu0 %v127
  %145 = vmatprep.subr.bf16.mxu0 0
  %146 = vmatpush2.bf16.xpose.msra.mxu0 0
  %147 = vmatprep.subr.bf16.mxu0 0
  %148 = vmatpush2.bf16.xpose.msra.mxu0 0
  %149 = vmatprep.subr.bf16.mxu0 0
  %150 = vmatpush2.bf16.xpose.msra.mxu0 0
  %151 = vmatprep.subr.bf16.mxu0 0
  %152 = vmatpush2.bf16.xpose.msra.mxu0 0
  %153 = vmatprep.subr.bf16.mxu0 0
  %154 = vmatpush2.bf16.xpose.msra.mxu0 0
  %155 = vmatprep.subr.bf16.mxu0 0
  %156 = vmatpush2.bf16.xpose.msra.mxu0 0
  %157 = vmatprep.subr.bf16.mxu0 0
  %158 = vmatpush2.bf16.xpose.msra.mxu0 0
  %159 = vmatprep.subr.bf16.mxu0 0
  %160 = vmatpush2.bf16.xpose.msra.mxu0 0
  %161 = vmatprep.mubr.bf16.mxu0 0
  %162 = vmatmul.mubr.bf16.gmra.mxu0 %v124
  %v163 = vpop.f32.mrf.mxu0
  %v164 = vadd.f32 0.0, %v163
  %v165 = vpop.f32.mrf.mxu0
  %v166 = vpop.f32.mrf.mxu0
  %v167 = vpop.f32.mrf.mxu0
  %168 = vdwg.mxu0
  %v170 = vsel %vm30, %v21, 0
  %v173 = vsel %vm30, %v25, 0
  %175 = vmatprep.subr.bf16.mxu0 0
  %176 = vmatpush1.bf16.xpose.msra.mxu0 0
  %177 = vmatprep.subr.bf16.mxu0 0
  %178 = vmatpush1.bf16.xpose.msra.mxu0 0
  %179 = vmatprep.subr.bf16.mxu0 0
  %180 = vmatpush1.bf16.xpose.msra.mxu0 0
  %181 = vmatprep.subr.bf16.mxu0 0
  %182 = vmatpush1.bf16.xpose.msra.mxu0 0
  %183 = vmatprep.subr.bf16.mxu0 0
  %184 = vmatpush1.bf16.xpose.msra.mxu0 0
  %185 = vmatprep.subr.bf16.mxu0 0
  %186 = vmatpush1.bf16.xpose.msra.mxu0 0
  %187 = vmatprep.subr.bf16.mxu0 0
  %188 = vmatpush1.bf16.xpose.msra.mxu0 0
  %189 = vmatprep.subr.bf16.mxu0 0
  %190 = vmatpush1.bf16.xpose.msra.mxu0 %v173
  %191 = vmatprep.subr.bf16.mxu0 0
  %192 = vmatpush2.bf16.xpose.msra.mxu0 0
  %193 = vmatprep.subr.bf16.mxu0 0
  %194 = vmatpush2.bf16.xpose.msra.mxu0 0
  %195 = vmatprep.subr.bf16.mxu0 0
  %196 = vmatpush2.bf16.xpose.msra.mxu0 0
  %197 = vmatprep.subr.bf16.mxu0 0
  %198 = vmatpush2.bf16.xpose.msra.mxu0 0
  %199 = vmatprep.subr.bf16.mxu0 0
  %200 = vmatpush2.bf16.xpose.msra.mxu0 0
  %201 = vmatprep.subr.bf16.mxu0 0
  %202 = vmatpush2.bf16.xpose.msra.mxu0 0
  %203 = vmatprep.subr.bf16.mxu0 0
  %204 = vmatpush2.bf16.xpose.msra.mxu0 0
  %205 = vmatprep.subr.bf16.mxu0 0
  %206 = vmatpush2.bf16.xpose.msra.mxu0 0
  %207 = vmatprep.mubr.bf16.mxu0 0
  %208 = vmatmul.mubr.bf16.gmra.mxu0 %v170
  %v209 = vpop.f32.mrf.mxu0
  %v210 = vadd.f32 0.0, %v209
  %v211 = vpop.f32.mrf.mxu0
  %v212 = vpop.f32.mrf.mxu0
  %v213 = vpop.f32.mrf.mxu0
  %214 = vdwg.mxu0
  %v215 = vmul.f32 %v72, 0.35355338
  %v216 = vmul.f32 %v118, 0.35355338
  %v217 = vmul.f32 %v164, 0.35355338
  %v218 = vmul.f32 %v210, 0.35355338
  %v219 = vld [vmem:[%s3] sm:$0x1]
  %v221 = vlaneseq
  %v222 = vshrl.u32 %v221, 7
  %v223 = vsub.s32 0, %v222
  %v224 = vrot.slane %v219, %v223
  %v226 = vadd.f32 %v215, %v224
  %v227 = vadd.f32 %v216, %v224
  %v228 = vadd.f32 %v217, %v224
  %v229 = vadd.f32 %v218, %v224
  %vm230 = vcmask 9216
  %v231 = vsel %vm230, %v226, -inf
  %232 = vmax.xlane.f32.xlu0 %v231
  %v233 = vpop.xlane.xlu0 %232
  %v234 = vsel %vm230, %v227, -inf
  %235 = vmax.xlane.f32.xlu0 %v234
  %v236 = vpop.xlane.xlu0 %235
  %v237 = vsel %vm230, %v228, -inf
  %238 = vmax.xlane.f32.xlu0 %v237
  %v239 = vpop.xlane.xlu0 %238
  %v240 = vsel %vm230, %v229, -inf
  %241 = vmax.xlane.f32.xlu0 %v240
  %v242 = vpop.xlane.xlu0 %241
  %v243 = vsub.f32 %v226, %v233
  %v244 = vsub.f32 %v227, %v236
  %v245 = vsub.f32 %v228, %v239
  %v246 = vsub.f32 %v229, %v242
  %v247 = vmul.f32 %v243, 1.442695
  %v248 = vpow.pop %v247
  %v249 = vmul.f32 %v244, 1.442695
  %v250 = vpow.pop %v249
  %v251 = vmul.f32 %v245, 1.442695
  %v252 = vpow.pop %v251
  %v253 = vmul.f32 %v246, 1.442695
  %v254 = vpow.pop %v253
  %v255 = vsel %vm230, %v248, 0.0
  %256 = vadd.xlane.f32.xlu0 %v255
  %v257 = vpop.xlane.xlu0 %256
  %v258 = vsel %vm230, %v250, 0.0
  %259 = vadd.xlane.f32.xlu0 %v258
  %v260 = vpop.xlane.xlu0 %259
  %v261 = vsel %vm230, %v252, 0.0
  %262 = vadd.xlane.f32.xlu0 %v261
  %v263 = vpop.xlane.xlu0 %262
  %v264 = vsel %vm230, %v254, 0.0
  %265 = vadd.xlane.f32.xlu0 %v264
  %v266 = vpop.xlane.xlu0 %265
  %v267 = vrcp.pop %v257
  %v268 = vmul.f32 %v248, %v267
  %v269 = vrcp.pop %v260
  %v270 = vmul.f32 %v250, %v269
  %v271 = vrcp.pop %v263
  %v272 = vmul.f32 %v252, %v271
  %v273 = vrcp.pop %v266
  %v274 = vmul.f32 %v254, %v273
  %v275 = vpack.c.bf16 %v268, %v268
  %v276 = vpack.c.bf16 %v270, %v270
  %v277 = vpack.c.bf16 %v272, %v272
  %v278 = vpack.c.bf16 %v274, %v274
  %vm279 = vcmask 15360
  %v281 = vsel %vm279, %v275, 0
  %vm283 = vcmask 1040384
  %v285 = vsel %vm283, %v26, 0
  %287 = vmatprep.subr.bf16.mxu0 0
  %288 = vmatpush1.bf16.msra.mxu0 0
  %289 = vmatprep.subr.bf16.mxu0 0
  %290 = vmatpush1.bf16.msra.mxu0 0
  %291 = vmatprep.subr.bf16.mxu0 0
  %292 = vmatpush1.bf16.msra.mxu0 0
  %293 = vmatprep.subr.bf16.mxu0 0
  %294 = vmatpush1.bf16.msra.mxu0 0
  %295 = vmatprep.subr.bf16.mxu0 0
  %296 = vmatpush1.bf16.msra.mxu0 0
  %297 = vmatprep.subr.bf16.mxu0 0
  %298 = vmatpush1.bf16.msra.mxu0 0
  %299 = vmatprep.subr.bf16.mxu0 0
  %300 = vmatpush1.bf16.msra.mxu0 0
  %301 = vmatprep.subr.bf16.mxu0 0
  %302 = vmatpush1.bf16.msra.mxu0 %v285
  %303 = vmatprep.subr.bf16.mxu0 0
  %304 = vmatpush2.bf16.msra.mxu0 0
  %305 = vmatprep.subr.bf16.mxu0 0
  %306 = vmatpush2.bf16.msra.mxu0 0
  %307 = vmatprep.subr.bf16.mxu0 0
  %308 = vmatpush2.bf16.msra.mxu0 0
  %309 = vmatprep.subr.bf16.mxu0 0
  %310 = vmatpush2.bf16.msra.mxu0 0
  %311 = vmatprep.subr.bf16.mxu0 0
  %312 = vmatpush2.bf16.msra.mxu0 0
  %313 = vmatprep.subr.bf16.mxu0 0
  %314 = vmatpush2.bf16.msra.mxu0 0
  %315 = vmatprep.subr.bf16.mxu0 0
  %316 = vmatpush2.bf16.msra.mxu0 0
  %317 = vmatprep.subr.bf16.mxu0 0
  %318 = vmatpush2.bf16.msra.mxu0 0
  %319 = vmatprep.mubr.bf16.mxu0 0
  %320 = vmatmul.mubr.bf16.gmra.mxu0 %v281
  %v321 = vpop.f32.mrf.mxu0
  %v322 = vadd.f32 0.0, %v321
  %v323 = vpop.f32.mrf.mxu0
  %v324 = vpop.f32.mrf.mxu0
  %v325 = vpop.f32.mrf.mxu0
  %326 = vdwg.mxu0
  %v328 = vsel %vm279, %v276, 0
  %v331 = vsel %vm283, %v27, 0
  %333 = vmatprep.subr.bf16.mxu0 0
  %334 = vmatpush1.bf16.msra.mxu0 0
  %335 = vmatprep.subr.bf16.mxu0 0
  %336 = vmatpush1.bf16.msra.mxu0 0
  %337 = vmatprep.subr.bf16.mxu0 0
  %338 = vmatpush1.bf16.msra.mxu0 0
  %339 = vmatprep.subr.bf16.mxu0 0
  %340 = vmatpush1.bf16.msra.mxu0 0
  %341 = vmatprep.subr.bf16.mxu0 0
  %342 = vmatpush1.bf16.msra.mxu0 0
  %343 = vmatprep.subr.bf16.mxu0 0
  %344 = vmatpush1.bf16.msra.mxu0 0
  %345 = vmatprep.subr.bf16.mxu0 0
  %346 = vmatpush1.bf16.msra.mxu0 0
  %347 = vmatprep.subr.bf16.mxu0 0
  %348 = vmatpush1.bf16.msra.mxu0 %v331
  %349 = vmatprep.subr.bf16.mxu0 0
  %350 = vmatpush2.bf16.msra.mxu0 0
  %351 = vmatprep.subr.bf16.mxu0 0
  %352 = vmatpush2.bf16.msra.mxu0 0
  %353 = vmatprep.subr.bf16.mxu0 0
  %354 = vmatpush2.bf16.msra.mxu0 0
  %355 = vmatprep.subr.bf16.mxu0 0
  %356 = vmatpush2.bf16.msra.mxu0 0
  %357 = vmatprep.subr.bf16.mxu0 0
  %358 = vmatpush2.bf16.msra.mxu0 0
  %359 = vmatprep.subr.bf16.mxu0 0
  %360 = vmatpush2.bf16.msra.mxu0 0
  %361 = vmatprep.subr.bf16.mxu0 0
  %362 = vmatpush2.bf16.msra.mxu0 0
  %363 = vmatprep.subr.bf16.mxu0 0
  %364 = vmatpush2.bf16.msra.mxu0 0
  %365 = vmatprep.mubr.bf16.mxu0 0
  %366 = vmatmul.mubr.bf16.gmra.mxu0 %v328
  %v367 = vpop.f32.mrf.mxu0
  %v368 = vadd.f32 0.0, %v367
  %v369 = vpop.f32.mrf.mxu0
  %v370 = vpop.f32.mrf.mxu0
  %v371 = vpop.f32.mrf.mxu0
  %372 = vdwg.mxu0
  %v374 = vsel %vm279, %v277, 0
  %v377 = vsel %vm283, %v28, 0
  %379 = vmatprep.subr.bf16.mxu0 0
  %380 = vmatpush1.bf16.msra.mxu0 0
  %381 = vmatprep.subr.bf16.mxu0 0
  %382 = vmatpush1.bf16.msra.mxu0 0
  %383 = vmatprep.subr.bf16.mxu0 0
  %384 = vmatpush1.bf16.msra.mxu0 0
  %385 = vmatprep.subr.bf16.mxu0 0
  %386 = vmatpush1.bf16.msra.mxu0 0
  %387 = vmatprep.subr.bf16.mxu0 0
  %388 = vmatpush1.bf16.msra.mxu0 0
  %389 = vmatprep.subr.bf16.mxu0 0
  %390 = vmatpush1.bf16.msra.mxu0 0
  %391 = vmatprep.subr.bf16.mxu0 0
  %392 = vmatpush1.bf16.msra.mxu0 0
  %393 = vmatprep.subr.bf16.mxu0 0
  %394 = vmatpush1.bf16.msra.mxu0 %v377
  %395 = vmatprep.subr.bf16.mxu0 0
  %396 = vmatpush2.bf16.msra.mxu0 0
  %397 = vmatprep.subr.bf16.mxu0 0
  %398 = vmatpush2.bf16.msra.mxu0 0
  %399 = vmatprep.subr.bf16.mxu0 0
  %400 = vmatpush2.bf16.msra.mxu0 0
  %401 = vmatprep.subr.bf16.mxu0 0
  %402 = vmatpush2.bf16.msra.mxu0 0
  %403 = vmatprep.subr.bf16.mxu0 0
  %404 = vmatpush2.bf16.msra.mxu0 0
  %405 = vmatprep.subr.bf16.mxu0 0
  %406 = vmatpush2.bf16.msra.mxu0 0
  %407 = vmatprep.subr.bf16.mxu0 0
  %408 = vmatpush2.bf16.msra.mxu0 0
  %409 = vmatprep.subr.bf16.mxu0 0
  %410 = vmatpush2.bf16.msra.mxu0 0
  %411 = vmatprep.mubr.bf16.mxu0 0
  %412 = vmatmul.mubr.bf16.gmra.mxu0 %v374
  %v413 = vpop.f32.mrf.mxu0
  %v414 = vadd.f32 0.0, %v413
  %v415 = vpop.f32.mrf.mxu0
  %v416 = vpop.f32.mrf.mxu0
  %v417 = vpop.f32.mrf.mxu0
  %418 = vdwg.mxu0
  %v420 = vsel %vm279, %v278, 0
  %v423 = vsel %vm283, %v29, 0
  %425 = vmatprep.subr.bf16.mxu0 0
  %426 = vmatpush1.bf16.msra.mxu0 0
  %427 = vmatprep.subr.bf16.mxu0 0
  %428 = vmatpush1.bf16.msra.mxu0 0
  %429 = vmatprep.subr.bf16.mxu0 0
  %430 = vmatpush1.bf16.msra.mxu0 0
  %431 = vmatprep.subr.bf16.mxu0 0
  %432 = vmatpush1.bf16.msra.mxu0 0
  %433 = vmatprep.subr.bf16.mxu0 0
  %434 = vmatpush1.bf16.msra.mxu0 0
  %435 = vmatprep.subr.bf16.mxu0 0
  %436 = vmatpush1.bf16.msra.mxu0 0
  %437 = vmatprep.subr.bf16.mxu0 0
  %438 = vmatpush1.bf16.msra.mxu0 0
  %439 = vmatprep.subr.bf16.mxu0 0
  %440 = vmatpush1.bf16.msra.mxu0 %v423
  %441 = vmatprep.subr.bf16.mxu0 0
  %442 = vmatpush2.bf16.msra.mxu0 0
  %443 = vmatprep.subr.bf16.mxu0 0
  %444 = vmatpush2.bf16.msra.mxu0 0
  %445 = vmatprep.subr.bf16.mxu0 0
  %446 = vmatpush2.bf16.msra.mxu0 0
  %447 = vmatprep.subr.bf16.mxu0 0
  %448 = vmatpush2.bf16.msra.mxu0 0
  %449 = vmatprep.subr.bf16.mxu0 0
  %450 = vmatpush2.bf16.msra.mxu0 0
  %451 = vmatprep.subr.bf16.mxu0 0
  %452 = vmatpush2.bf16.msra.mxu0 0
  %453 = vmatprep.subr.bf16.mxu0 0
  %454 = vmatpush2.bf16.msra.mxu0 0
  %455 = vmatprep.subr.bf16.mxu0 0
  %456 = vmatpush2.bf16.msra.mxu0 0
  %457 = vmatprep.mubr.bf16.mxu0 0
  %458 = vmatmul.mubr.bf16.gmra.mxu0 %v420
  %v459 = vpop.f32.mrf.mxu0
  %v460 = vadd.f32 0.0, %v459
  %v461 = vpop.f32.mrf.mxu0
  %v462 = vpop.f32.mrf.mxu0
  %v463 = vpop.f32.mrf.mxu0
  %464 = vdwg.mxu0
  %v465 = vpack.c.bf16 %v322, %v322
  %v466 = vpack.c.bf16 %v368, %v368
  %v467 = vpack.c.bf16 %v414, %v414
  %v468 = vpack.c.bf16 %v460, %v460
  %vm469 = vcmask 57344
  %470 = vst.msk [vmem:[%s4] sm:$0x1] %vm469, %v465
  %471 = vst.msk [vmem:[%s4 + $0x1] sm:$0x1] %vm469, %v466
  %472 = vst.msk [vmem:[%s4 + $0x2] sm:$0x1] %vm469, %v467
  %473 = vst.msk [vmem:[%s4 + $0x3] sm:$0x1] %vm469, %v468
  // Predicated region
  $region18: #{bert_naive_forward.38} parent=0 // pred_check
    _
  $region19: #{bert_naive_forward.38} parent=0 // pred_check_branch
    %475 = sbr.rel (0) target = $region21
  $region20: #{bert_naive_forward.38} parent=0 // pred_region
    _
  $region21: #{bert_naive_forward.38} parent=0 // pred_fallthru
    _
  // Predicated region
  $region22: #{bert_naive_forward.38} parent=0 // pred_check
    _
  $region23: #{bert_naive_forward.38} parent=0 // pred_check_branch
    %477 = sbr.rel (0) target = $region25
  $region24: #{bert_naive_forward.38} parent=0 // pred_region
    _
  $region25: #{bert_naive_forward.38} parent=0 // pred_fallthru
    _

// kernel: bert_naive_forward.41
$region0: #{bert_naive_forward.41}
  #allocation0 [shape = 'u32[]', space=smem, size = 0x4, offset = 0x4, fixed_abs, tag = 'smem constant byte address 0x4 - core index']
  #allocation1 [shape = 'u32[144,128]{1,0:T(1,128)}', space=vmem, size = 0x12000, scoped, tag = 'internal scratch']
  #allocation2 [shape = 'f32[8,128]{1,0:T(8,128)}', space=vmem, size = 0x1000, scoped, tag = 'scratch operand']
  %s0 = inlined_call_operand.vmem [shape: bf16[8,128], index: 0, kind: input, shape index: {}]
  %s1 = inlined_call_operand.vmem [shape: bf16[128,128], index: 1, kind: input, shape index: {}]
  %s2 = inlined_call_operand.vmem [shape: f32[1,128], index: 2, kind: input, shape index: {}]
  %s3 = inlined_call_operand.vmem [shape: f32[8,128], index: 3, kind: output, shape index: {}]
  %s4 = sld [smem:[#allocation0]]
  $region30: #{bert_naive_forward.41} parent=0
    _
  %s6 = ssub.s32 1, %s4
  %s7 = scalar_select 0, %s6, %s4
  // Predicated region
  $region2: #{bert_naive_forward.41} parent=0 // pred_check
    _
  $region3: #{bert_naive_forward.41} parent=0 // pred_check_branch
    %9 = sbr.rel (0) target = $region5
  $region4: #{bert_naive_forward.41} parent=0 // pred_region
    _
  $region5: #{bert_naive_forward.41} parent=0 // pred_fallthru
    _
  // Predicated region
  $region6: #{bert_naive_forward.41} parent=0 // pred_check
    _
  $region7: #{bert_naive_forward.41} parent=0 // pred_check_branch
    %11 = sbr.rel (0) target = $region9
  $region8: #{bert_naive_forward.41} parent=0 // pred_region
    _
  $region9: #{bert_naive_forward.41} parent=0 // pred_fallthru
    _
  // Predicated region
  $region10: #{bert_naive_forward.41} parent=0 // pred_check
    _
  $region11: #{bert_naive_forward.41} parent=0 // pred_check_branch
    %13 = sbr.rel (0) target = $region13
  $region12: #{bert_naive_forward.41} parent=0 // pred_region
    _
  $region13: #{bert_naive_forward.41} parent=0 // pred_fallthru
    _
  %p15 = scmp.eq.s32.totalorder 0, 0
  // Predicated region
  $region14: #{bert_naive_forward.41} parent=0 // pred_check
    %p16 = pneg %p15
  $region15: #{bert_naive_forward.41} parent=0 // pred_check_branch
    %18 = sbr.rel (%p16) target = $region17
  $region16: #{bert_naive_forward.41} parent=0 // pred_region
    %19 = vst [vmem:[#allocation2] sm:$0xff] 0.0
  $region17: #{bert_naive_forward.41} parent=0 // pred_fallthru
    _
  %v20 = vld [vmem:[#allocation2] sm:$0xff]
  %v21 = vld [vmem:[%s0] sm:$0xf]
  %v22 = vld [vmem:[%s1] sm:$0xf]
  %v23 = vld [vmem:[%s1 + $0x4] sm:$0xf]
  %v24 = vld [vmem:[%s1 + $0x8] sm:$0xf]
  %v25 = vld [vmem:[%s1 + $0xc] sm:$0xf]
  %v26 = vld [vmem:[%s1 + $0x10] sm:$0xf]
  %v27 = vld [vmem:[%s1 + $0x14] sm:$0xf]
  %v28 = vld [vmem:[%s1 + $0x18] sm:$0xf]
  %v29 = vld [vmem:[%s1 + $0x1c] sm:$0xf]
  %v30 = vld [vmem:[%s1 + $0x20] sm:$0xf]
  %v31 = vld [vmem:[%s1 + $0x24] sm:$0xf]
  %v32 = vld [vmem:[%s1 + $0x28] sm:$0xf]
  %v33 = vld [vmem:[%s1 + $0x2c] sm:$0xf]
  %v34 = vld [vmem:[%s1 + $0x30] sm:$0xf]
  %v35 = vld [vmem:[%s1 + $0x34] sm:$0xf]
  %v36 = vld [vmem:[%s1 + $0x38] sm:$0xf]
  %v37 = vld [vmem:[%s1 + $0x3c] sm:$0xf]
  %v54 = vunpack.c.l.b16 %v22
  %v55 = vunpack.c.l.b16 %v23
  %v56 = vunpack.c.l.b16 %v24
  %v57 = vunpack.c.l.b16 %v25
  %v58 = vunpack.c.l.b16 %v26
  %v59 = vunpack.c.l.b16 %v27
  %v60 = vunpack.c.l.b16 %v28
  %v61 = vunpack.c.l.b16 %v29
  %v62 = vunpack.c.l.b16 %v30
  %v63 = vunpack.c.l.b16 %v31
  %v64 = vunpack.c.l.b16 %v32
  %v65 = vunpack.c.l.b16 %v33
  %v66 = vunpack.c.l.b16 %v34
  %v67 = vunpack.c.l.b16 %v35
  %v68 = vunpack.c.l.b16 %v36
  %v69 = vunpack.c.l.b16 %v37
  %v70 = vpack.c.b16 %v55, %v54
  %v71 = vpack.c.b16 %v57, %v56
  %v72 = vpack.c.b16 %v59, %v58
  %v73 = vpack.c.b16 %v61, %v60
  %v74 = vpack.c.b16 %v63, %v62
  %v75 = vpack.c.b16 %v65, %v64
  %v76 = vpack.c.b16 %v67, %v66
  %v77 = vpack.c.b16 %v69, %v68
  %86 = vmatprep.subr.bf16.mxu0 0
  %87 = vmatpush1.bf16.msra.mxu0 %v77
  %88 = vmatprep.subr.bf16.mxu0 0
  %89 = vmatpush1.bf16.msra.mxu0 %v76
  %90 = vmatprep.subr.bf16.mxu0 0
  %91 = vmatpush1.bf16.msra.mxu0 %v75
  %92 = vmatprep.subr.bf16.mxu0 0
  %93 = vmatpush1.bf16.msra.mxu0 %v74
  %94 = vmatprep.subr.bf16.mxu0 0
  %95 = vmatpush1.bf16.msra.mxu0 %v73
  %96 = vmatprep.subr.bf16.mxu0 0
  %97 = vmatpush1.bf16.msra.mxu0 %v72
  %98 = vmatprep.subr.bf16.mxu0 0
  %99 = vmatpush1.bf16.msra.mxu0 %v71
  %100 = vmatprep.subr.bf16.mxu0 0
  %101 = vmatpush1.bf16.msra.mxu0 %v70
  %102 = vmatprep.subr.bf16.mxu0 0
  %103 = vmatpush2.bf16.msra.mxu0 0
  %104 = vmatprep.subr.bf16.mxu0 0
  %105 = vmatpush2.bf16.msra.mxu0 0
  %106 = vmatprep.subr.bf16.mxu0 0
  %107 = vmatpush2.bf16.msra.mxu0 0
  %108 = vmatprep.subr.bf16.mxu0 0
  %109 = vmatpush2.bf16.msra.mxu0 0
  %110 = vmatprep.subr.bf16.mxu0 0
  %111 = vmatpush2.bf16.msra.mxu0 0
  %112 = vmatprep.subr.bf16.mxu0 0
  %113 = vmatpush2.bf16.msra.mxu0 0
  %114 = vmatprep.subr.bf16.mxu0 0
  %115 = vmatpush2.bf16.msra.mxu0 0
  %116 = vmatprep.subr.bf16.mxu0 0
  %117 = vmatpush2.bf16.msra.mxu0 0
  %118 = vmatprep.mubr.bf16.mxu0 0
  %119 = vmatmul.mubr.bf16.gmra.mxu0 %v21
  %v120 = vpop.f32.mrf.mxu0
  %v121 = vadd.f32 0.0, %v120
  %v122 = vpop.f32.mrf.mxu0
  %v123 = vpop.f32.mrf.mxu0
  %v124 = vpop.f32.mrf.mxu0
  %125 = vdwg.mxu0
  %v126 = vadd.f32 %v20, %v121
  %127 = vst [vmem:[#allocation2] sm:$0xff] %v126
  // Predicated region
  $region18: #{bert_naive_forward.41} parent=0 // pred_check
    %p128 = pneg %p15
  $region19: #{bert_naive_forward.41} parent=0 // pred_check_branch
    %130 = sbr.rel (%p128) target = $region21
  $region20: #{bert_naive_forward.41} parent=0 // pred_region
    %v131 = vld [vmem:[#allocation2] sm:$0xff]
    %v132 = vld [vmem:[%s2] sm:$0x1]
    %v134 = vlaneseq
    %v135 = vshrl.u32 %v134, 7
    %v136 = vsub.s32 0, %v135
    %v137 = vrot.slane %v132, %v136
    %v139 = vadd.f32 %v131, %v137
    %140 = vst [vmem:[%s3] sm:$0xff] %v139
  $region21: #{bert_naive_forward.41} parent=0 // pred_fallthru
    _
  // Predicated region
  $region22: #{bert_naive_forward.41} parent=0 // pred_check
    _
  $region23: #{bert_naive_forward.41} parent=0 // pred_check_branch
    %142 = sbr.rel (0) target = $region25
  $region24: #{bert_naive_forward.41} parent=0 // pred_region
    _
  $region25: #{bert_naive_forward.41} parent=0 // pred_fallthru
    _
  // Predicated region
  $region26: #{bert_naive_forward.41} parent=0 // pred_check
    _
  $region27: #{bert_naive_forward.41} parent=0 // pred_check_branch
    %144 = sbr.rel (0) target = $region29
  $region28: #{bert_naive_forward.41} parent=0 // pred_region
    _
  $region29: #{bert_naive_forward.41} parent=0 // pred_fallthru
    _

</llo_original>
